<compile_context>
chip_gen: v7x
topology: tpu7x:2x2x1
jax: 0.10.0
libtpu: 0.0.40
codegen_flags: <defaults>
</compile_context>

<pallas_src>
import functools

import jax
import jax.numpy as jnp
from jax.experimental import pallas as pl
from jax.experimental.pallas import tpu as pltpu


def _tree_sum(terms):
    """Pairwise tree reduction (exposes ILP vs. a serial add chain)."""
    terms = list(terms)
    while len(terms) > 1:
        nxt = []
        for i in range(0, len(terms) - 1, 2):
            nxt.append(terms[i] + terms[i + 1])
        if len(terms) % 2:
            nxt.append(terms[-1])
        terms = nxt
    return terms[0]


def _head_kernel(*refs, pool_sizes, c_total):
    """Gridless kernel: pools every pathway and scatters the pooled values
    (channel-concat + NCHW->NHWC fused) into one lane-dense output.

    refs = (x_0, ..., x_{P-1}, o)
      x_p: (N, C_p, T_p, F_p)
      o  : (N, T_out, F_out * C_total)   # o[n, t, f*C_total + c] = NHWC value
    """
    num_pathways = len(pool_sizes)
    in_refs = refs[:num_pathways]
    o_ref = refs[num_pathways]

    c_off = 0
    for x_ref, (kt, kf) in zip(in_refs, pool_sizes):
        _, c_p, t_in, f_in = x_ref.shape
        t_out = t_in - kt + 1
        f_out = f_in - kf + 1

        # --- temporal (sublane) pass: shifted windows read straight from the
        #     ref (offset vlds), f32 accumulation ---
        t_terms = [
            x_ref[:, :, dt:dt + t_out, :].astype(jnp.float32)
            for dt in range(kt)
        ]
        s = _tree_sum(t_terms)                      # (N, C_p, T_out, F_in)

        # --- frequency (lane) pass on the partial sums ---
        f_terms = [s[:, :, :, df:df + f_out] for df in range(kf)]
        acc = _tree_sum(f_terms)                    # (N, C_p, T_out, F_out)

        res = (acc * (1.0 / float(kt * kf))).astype(o_ref.dtype)

        # --- fused channel-concat + NCHW->NHWC scatter into the lane-dense
        #     (N, T_out, F_out*C_total) output block: all static slices ---
        for c in range(c_p):
            for f in range(f_out):
                lane = f * c_total + c_off + c
                o_ref[:, :, lane:lane + 1] = res[:, c, :, f:f + 1]
        c_off += c_p


def modified_audio_slowfast_head(inputs, pool_sizes):
    """inputs: list of P NCHW arrays; pool_sizes: list of P (kT, kF) tuples."""
    num_pathways = len(inputs)
    assert len(pool_sizes) == num_pathways, "pathway dimensions are not consistent."
    n = inputs[0].shape[0]
    dtype = inputs[0].dtype

    out_dims, c_list = [], []
    for x, (kt, kf) in zip(inputs, pool_sizes):
        assert x.ndim == 4 and x.shape[0] == n
        assert x.dtype == dtype, "pathway dtypes must match for channel concat"
        c_list.append(x.shape[1])
        out_dims.append((x.shape[2] - kt + 1, x.shape[3] - kf + 1))
    assert len(set(out_dims)) == 1, "pooled spatial dims must match for channel concat"
    t_out, f_out = out_dims[0]
    c_total = sum(c_list)

    # --- VMEM working-set guard (per-generation budget) ---------------------
    # Count the actual in-kernel footprint: stored inputs/outputs plus the f32
    # working set (upcast window reads + partial sums + accumulator ~ 3x the
    # f32 input footprint).  Budget = min(vmem_capacity/4, 16 MiB) so we also
    # stay under the smallest default scoped-VMEM limit (v5e) without having
    # to raise vmem_limit_bytes.  If production shapes outgrow this, add a
    # leading grid axis over N with dimension_semantics=("parallel",) (also
    # uses both TensorCores on v7x) instead of relying on one giant block.
    itemsize = jnp.dtype(dtype).itemsize
    in_storage = sum(int(x.size) * itemsize for x in inputs)
    in_f32 = sum(int(x.size) * 4 for x in inputs)
    out_elems = n * t_out * f_out * c_total
    working_set = in_storage + out_elems * itemsize + 3 * in_f32
    try:
        vmem_cap = int(pltpu.get_tpu_info().vmem_capacity_bytes)
    except Exception:
        vmem_cap = 64 * 1024 * 1024  # v7x physical VMEM (smallest generation)
    budget = min(vmem_cap // 4, 16 * 1024 * 1024)
    assert working_set < budget, (
        "inputs too large for the single-block head kernel; tile over batch "
        "(leading parallel grid axis) and/or raise vmem_limit_bytes"
    )

    # --- advisory cost estimate so XLA can overlap this tiny custom call ----
    flops = 0
    for x, (kt, kf) in zip(inputs, pool_sizes):
        c_p, _, f_in = x.shape[1], x.shape[2], x.shape[3]
        flops += n * c_p * ((kt - 1) * t_out * f_in + kf * t_out * f_out)
    cost = pl.CostEstimate(
        flops=int(flops),
        transcendentals=0,
        bytes_accessed=int(in_storage + out_elems * itemsize),
    )

    kernel = functools.partial(
        _head_kernel,
        pool_sizes=tuple(tuple(p) for p in pool_sizes),
        c_total=c_total,
    )
    out_flat = pl.pallas_call(
        kernel,
        out_shape=jax.ShapeDtypeStruct((n, t_out, f_out * c_total), dtype),
        cost_estimate=cost,
    )(*inputs)

    # Free reshape: (N, T_out, F_out*C_total) -> (N, T_out, F_out, C_total).
    # TODO(synk): nn.Dropout (dropout_rate > 0.0) not implemented; the module
    # config here uses dropout_rate = 0.0, so forward is dropout-free.
    return out_flat.reshape(n, t_out, f_out, c_total)


def _reference(inputs, pool_sizes):
    """Pure-JAX reference (AvgPool2d stride=1 VALID, channel concat, NCHW->NHWC)."""
    pooled = []
    for x, (kt, kf) in zip(inputs, pool_sizes):
        y = jax.lax.reduce_window(
            x.astype(jnp.float32),
            0.0,
            jax.lax.add,
            window_dimensions=(1, 1, kt, kf),
            window_strides=(1, 1, 1, 1),
            padding="VALID",
        ) / float(kt * kf)
        pooled.append(y)
    out = jnp.concatenate(pooled, axis=1)
    return jnp.transpose(out, (0, 2, 3, 1)).astype(inputs[0].dtype)


if __name__ == "__main__":
    key = jax.random.PRNGKey(0)
    k0, k1 = jax.random.split(key)

    # Two pathways (slow / fast), small shapes. Pool sizes chosen so pooled
    # spatial dims match (13 x 13), as required by the channel concat.
    # dim_in = [8, 4], pool_size = [(4, 4), (8, 4)], dropout_rate = 0.0
    x_slow = jax.random.normal(k0, (2, 8, 16, 16), dtype=jnp.float32)
    x_fast = jax.random.normal(k1, (2, 4, 20, 16), dtype=jnp.float32)
    pool_sizes = [(4, 4), (8, 4)]

    out = modified_audio_slowfast_head([x_slow, x_fast], pool_sizes)
    out = jax.block_until_ready(out)

    ref = _reference([x_slow, x_fast], pool_sizes)
    assert out.shape == (2, 13, 13, 12), out.shape
    assert jnp.allclose(out, ref, atol=1e-5, rtol=1e-5)

    print("KERNEL_OK")
</pallas_src>

<mosaic_0001>
module attributes {stable_mosaic.version = 11 : i64} {
  func.func @_head_kernel(%arg0: memref<2x8x16x16xf32, #tpu.memory_space<vmem>>, %arg1: memref<2x4x20x16xf32, #tpu.memory_space<vmem>>, %arg2: memref<2x13x156xf32, #tpu.memory_space<vmem>>) attributes {dimension_semantics = [], scalar_prefetch = 0 : i64, scratch_operands = 0 : i64, tpu.core_type = #tpu.core_type<tc>} {
    %c0 = arith.constant 0 : index
    %c0_0 = arith.constant 0 : index
    %c0_1 = arith.constant 0 : index
    %c0_2 = arith.constant 0 : index
    %0 = vector.load %arg0[%c0, %c0_0, %c0_1, %c0_2] : memref<2x8x16x16xf32, #tpu.memory_space<vmem>>, vector<2x8x13x16xf32>
    %c0_3 = arith.constant 0 : index
    %c0_4 = arith.constant 0 : index
    %c1 = arith.constant 1 : index
    %c0_5 = arith.constant 0 : index
    %1 = vector.load %arg0[%c0_3, %c0_4, %c1, %c0_5] : memref<2x8x16x16xf32, #tpu.memory_space<vmem>>, vector<2x8x13x16xf32>
    %c0_6 = arith.constant 0 : index
    %c0_7 = arith.constant 0 : index
    %c2 = arith.constant 2 : index
    %c0_8 = arith.constant 0 : index
    %2 = vector.load %arg0[%c0_6, %c0_7, %c2, %c0_8] : memref<2x8x16x16xf32, #tpu.memory_space<vmem>>, vector<2x8x13x16xf32>
    %c0_9 = arith.constant 0 : index
    %c0_10 = arith.constant 0 : index
    %c3 = arith.constant 3 : index
    %c0_11 = arith.constant 0 : index
    %3 = vector.load %arg0[%c0_9, %c0_10, %c3, %c0_11] : memref<2x8x16x16xf32, #tpu.memory_space<vmem>>, vector<2x8x13x16xf32>
    %4 = arith.addf %0, %1 : vector<2x8x13x16xf32>
    %5 = arith.addf %2, %3 : vector<2x8x13x16xf32>
    %6 = arith.addf %4, %5 : vector<2x8x13x16xf32>
    %7 = vector.extract_strided_slice %6 {offsets = [0, 0, 0, 0], sizes = [2, 8, 13, 13], strides = [1, 1, 1, 1]} : vector<2x8x13x16xf32> to vector<2x8x13x13xf32>
    %8 = vector.extract_strided_slice %6 {offsets = [0, 0, 0, 1], sizes = [2, 8, 13, 13], strides = [1, 1, 1, 1]} : vector<2x8x13x16xf32> to vector<2x8x13x13xf32>
    %9 = vector.extract_strided_slice %6 {offsets = [0, 0, 0, 2], sizes = [2, 8, 13, 13], strides = [1, 1, 1, 1]} : vector<2x8x13x16xf32> to vector<2x8x13x13xf32>
    %10 = vector.extract_strided_slice %6 {offsets = [0, 0, 0, 3], sizes = [2, 8, 13, 13], strides = [1, 1, 1, 1]} : vector<2x8x13x16xf32> to vector<2x8x13x13xf32>
    %11 = arith.addf %7, %8 : vector<2x8x13x13xf32>
    %12 = arith.addf %9, %10 : vector<2x8x13x13xf32>
    %13 = arith.addf %11, %12 : vector<2x8x13x13xf32>
    %cst = arith.constant 6.250000e-02 : f32
    %14 = vector.broadcast %cst : f32 to vector<2x8x13x13xf32>
    %15 = arith.mulf %13, %14 : vector<2x8x13x13xf32>
    %16 = vector.extract_strided_slice %15 {offsets = [0, 0, 0, 0], sizes = [2, 1, 13, 1], strides = [1, 1, 1, 1]} : vector<2x8x13x13xf32> to vector<2x1x13x1xf32>
    %17 = vector.shape_cast %16 : vector<2x1x13x1xf32> to vector<2x13x1xf32>
    %c0_12 = arith.constant 0 : index
    %c0_13 = arith.constant 0 : index
    %c0_14 = arith.constant 0 : index
    %18 = vector.load %arg2[%c0_12, %c0_13, %c0_14] : memref<2x13x156xf32, #tpu.memory_space<vmem>>, vector<2x13x1xf32>
    tpu.vector_store %arg2[%c0_12, %c0_13, %c0_14], %17 {strides = array<i32>} : memref<2x13x156xf32, #tpu.memory_space<vmem>>, vector<2x13x1xf32>,
    %19 = vector.extract_strided_slice %15 {offsets = [0, 0, 0, 1], sizes = [2, 1, 13, 1], strides = [1, 1, 1, 1]} : vector<2x8x13x13xf32> to vector<2x1x13x1xf32>
    %20 = vector.shape_cast %19 : vector<2x1x13x1xf32> to vector<2x13x1xf32>
    %c0_15 = arith.constant 0 : index
    %c0_16 = arith.constant 0 : index
    %c12 = arith.constant 12 : index
    %21 = vector.load %arg2[%c0_15, %c0_16, %c12] : memref<2x13x156xf32, #tpu.memory_space<vmem>>, vector<2x13x1xf32>
    tpu.vector_store %arg2[%c0_15, %c0_16, %c12], %20 {strides = array<i32>} : memref<2x13x156xf32, #tpu.memory_space<vmem>>, vector<2x13x1xf32>,
    %22 = vector.extract_strided_slice %15 {offsets = [0, 0, 0, 2], sizes = [2, 1, 13, 1], strides = [1, 1, 1, 1]} : vector<2x8x13x13xf32> to vector<2x1x13x1xf32>
    %23 = vector.shape_cast %22 : vector<2x1x13x1xf32> to vector<2x13x1xf32>
    %c0_17 = arith.constant 0 : index
    %c0_18 = arith.constant 0 : index
    %c24 = arith.constant 24 : index
    %24 = vector.load %arg2[%c0_17, %c0_18, %c24] : memref<2x13x156xf32, #tpu.memory_space<vmem>>, vector<2x13x1xf32>
    tpu.vector_store %arg2[%c0_17, %c0_18, %c24], %23 {strides = array<i32>} : memref<2x13x156xf32, #tpu.memory_space<vmem>>, vector<2x13x1xf32>,
    %25 = vector.extract_strided_slice %15 {offsets = [0, 0, 0, 3], sizes = [2, 1, 13, 1], strides = [1, 1, 1, 1]} : vector<2x8x13x13xf32> to vector<2x1x13x1xf32>
    %26 = vector.shape_cast %25 : vector<2x1x13x1xf32> to vector<2x13x1xf32>
    %c0_19 = arith.constant 0 : index
    %c0_20 = arith.constant 0 : index
    %c36 = arith.constant 36 : index
    %27 = vector.load %arg2[%c0_19, %c0_20, %c36] : memref<2x13x156xf32, #tpu.memory_space<vmem>>, vector<2x13x1xf32>
    tpu.vector_store %arg2[%c0_19, %c0_20, %c36], %26 {strides = array<i32>} : memref<2x13x156xf32, #tpu.memory_space<vmem>>, vector<2x13x1xf32>,
    %28 = vector.extract_strided_slice %15 {offsets = [0, 0, 0, 4], sizes = [2, 1, 13, 1], strides = [1, 1, 1, 1]} : vector<2x8x13x13xf32> to vector<2x1x13x1xf32>
    %29 = vector.shape_cast %28 : vector<2x1x13x1xf32> to vector<2x13x1xf32>
    %c0_21 = arith.constant 0 : index
    %c0_22 = arith.constant 0 : index
    %c48 = arith.constant 48 : index
    %30 = vector.load %arg2[%c0_21, %c0_22, %c48] : memref<2x13x156xf32, #tpu.memory_space<vmem>>, vector<2x13x1xf32>
    tpu.vector_store %arg2[%c0_21, %c0_22, %c48], %29 {strides = array<i32>} : memref<2x13x156xf32, #tpu.memory_space<vmem>>, vector<2x13x1xf32>,
    %31 = vector.extract_strided_slice %15 {offsets = [0, 0, 0, 5], sizes = [2, 1, 13, 1], strides = [1, 1, 1, 1]} : vector<2x8x13x13xf32> to vector<2x1x13x1xf32>
    %32 = vector.shape_cast %31 : vector<2x1x13x1xf32> to vector<2x13x1xf32>
    %c0_23 = arith.constant 0 : index
    %c0_24 = arith.constant 0 : index
    %c60 = arith.constant 60 : index
    %33 = vector.load %arg2[%c0_23, %c0_24, %c60] : memref<2x13x156xf32, #tpu.memory_space<vmem>>, vector<2x13x1xf32>
    tpu.vector_store %arg2[%c0_23, %c0_24, %c60], %32 {strides = array<i32>} : memref<2x13x156xf32, #tpu.memory_space<vmem>>, vector<2x13x1xf32>,
    %34 = vector.extract_strided_slice %15 {offsets = [0, 0, 0, 6], sizes = [2, 1, 13, 1], strides = [1, 1, 1, 1]} : vector<2x8x13x13xf32> to vector<2x1x13x1xf32>
    %35 = vector.shape_cast %34 : vector<2x1x13x1xf32> to vector<2x13x1xf32>
    %c0_25 = arith.constant 0 : index
    %c0_26 = arith.constant 0 : index
    %c72 = arith.constant 72 : index
    %36 = vector.load %arg2[%c0_25, %c0_26, %c72] : memref<2x13x156xf32, #tpu.memory_space<vmem>>, vector<2x13x1xf32>
    tpu.vector_store %arg2[%c0_25, %c0_26, %c72], %35 {strides = array<i32>} : memref<2x13x156xf32, #tpu.memory_space<vmem>>, vector<2x13x1xf32>,
    %37 = vector.extract_strided_slice %15 {offsets = [0, 0, 0, 7], sizes = [2, 1, 13, 1], strides = [1, 1, 1, 1]} : vector<2x8x13x13xf32> to vector<2x1x13x1xf32>
    %38 = vector.shape_cast %37 : vector<2x1x13x1xf32> to vector<2x13x1xf32>
    %c0_27 = arith.constant 0 : index
    %c0_28 = arith.constant 0 : index
    %c84 = arith.constant 84 : index
    %39 = vector.load %arg2[%c0_27, %c0_28, %c84] : memref<2x13x156xf32, #tpu.memory_space<vmem>>, vector<2x13x1xf32>
    tpu.vector_store %arg2[%c0_27, %c0_28, %c84], %38 {strides = array<i32>} : memref<2x13x156xf32, #tpu.memory_space<vmem>>, vector<2x13x1xf32>,
    %40 = vector.extract_strided_slice %15 {offsets = [0, 0, 0, 8], sizes = [2, 1, 13, 1], strides = [1, 1, 1, 1]} : vector<2x8x13x13xf32> to vector<2x1x13x1xf32>
    %41 = vector.shape_cast %40 : vector<2x1x13x1xf32> to vector<2x13x1xf32>
    %c0_29 = arith.constant 0 : index
    %c0_30 = arith.constant 0 : index
    %c96 = arith.constant 96 : index
    %42 = vector.load %arg2[%c0_29, %c0_30, %c96] : memref<2x13x156xf32, #tpu.memory_space<vmem>>, vector<2x13x1xf32>
    tpu.vector_store %arg2[%c0_29, %c0_30, %c96], %41 {strides = array<i32>} : memref<2x13x156xf32, #tpu.memory_space<vmem>>, vector<2x13x1xf32>,
    %43 = vector.extract_strided_slice %15 {offsets = [0, 0, 0, 9], sizes = [2, 1, 13, 1], strides = [1, 1, 1, 1]} : vector<2x8x13x13xf32> to vector<2x1x13x1xf32>
    %44 = vector.shape_cast %43 : vector<2x1x13x1xf32> to vector<2x13x1xf32>
    %c0_31 = arith.constant 0 : index
    %c0_32 = arith.constant 0 : index
    %c108 = arith.constant 108 : index
    %45 = vector.load %arg2[%c0_31, %c0_32, %c108] : memref<2x13x156xf32, #tpu.memory_space<vmem>>, vector<2x13x1xf32>
    tpu.vector_store %arg2[%c0_31, %c0_32, %c108], %44 {strides = array<i32>} : memref<2x13x156xf32, #tpu.memory_space<vmem>>, vector<2x13x1xf32>,
    %46 = vector.extract_strided_slice %15 {offsets = [0, 0, 0, 10], sizes = [2, 1, 13, 1], strides = [1, 1, 1, 1]} : vector<2x8x13x13xf32> to vector<2x1x13x1xf32>
    %47 = vector.shape_cast %46 : vector<2x1x13x1xf32> to vector<2x13x1xf32>
    %c0_33 = arith.constant 0 : index
    %c0_34 = arith.constant 0 : index
    %c120 = arith.constant 120 : index
    %48 = vector.load %arg2[%c0_33, %c0_34, %c120] : memref<2x13x156xf32, #tpu.memory_space<vmem>>, vector<2x13x1xf32>
    tpu.vector_store %arg2[%c0_33, %c0_34, %c120], %47 {strides = array<i32>} : memref<2x13x156xf32, #tpu.memory_space<vmem>>, vector<2x13x1xf32>,
    %49 = vector.extract_strided_slice %15 {offsets = [0, 0, 0, 11], sizes = [2, 1, 13, 1], strides = [1, 1, 1, 1]} : vector<2x8x13x13xf32> to vector<2x1x13x1xf32>
    %50 = vector.shape_cast %49 : vector<2x1x13x1xf32> to vector<2x13x1xf32>
    %c0_35 = arith.constant 0 : index
    %c0_36 = arith.constant 0 : index
    %c132 = arith.constant 132 : index
    %51 = vector.load %arg2[%c0_35, %c0_36, %c132] : memref<2x13x156xf32, #tpu.memory_space<vmem>>, vector<2x13x1xf32>
    tpu.vector_store %arg2[%c0_35, %c0_36, %c132], %50 {strides = array<i32>} : memref<2x13x156xf32, #tpu.memory_space<vmem>>, vector<2x13x1xf32>,
    %52 = vector.extract_strided_slice %15 {offsets = [0, 0, 0, 12], sizes = [2, 1, 13, 1], strides = [1, 1, 1, 1]} : vector<2x8x13x13xf32> to vector<2x1x13x1xf32>
    %53 = vector.shape_cast %52 : vector<2x1x13x1xf32> to vector<2x13x1xf32>
    %c0_37 = arith.constant 0 : index
    %c0_38 = arith.constant 0 : index
    %c144 = arith.constant 144 : index
    %54 = vector.load %arg2[%c0_37, %c0_38, %c144] : memref<2x13x156xf32, #tpu.memory_space<vmem>>, vector<2x13x1xf32>
    tpu.vector_store %arg2[%c0_37, %c0_38, %c144], %53 {strides = array<i32>} : memref<2x13x156xf32, #tpu.memory_space<vmem>>, vector<2x13x1xf32>,
    %55 = vector.extract_strided_slice %15 {offsets = [0, 1, 0, 0], sizes = [2, 1, 13, 1], strides = [1, 1, 1, 1]} : vector<2x8x13x13xf32> to vector<2x1x13x1xf32>
    %56 = vector.shape_cast %55 : vector<2x1x13x1xf32> to vector<2x13x1xf32>
    %c0_39 = arith.constant 0 : index
    %c0_40 = arith.constant 0 : index
    %c1_41 = arith.constant 1 : index
    %57 = vector.load %arg2[%c0_39, %c0_40, %c1_41] : memref<2x13x156xf32, #tpu.memory_space<vmem>>, vector<2x13x1xf32>
    tpu.vector_store %arg2[%c0_39, %c0_40, %c1_41], %56 {strides = array<i32>} : memref<2x13x156xf32, #tpu.memory_space<vmem>>, vector<2x13x1xf32>,
    %58 = vector.extract_strided_slice %15 {offsets = [0, 1, 0, 1], sizes = [2, 1, 13, 1], strides = [1, 1, 1, 1]} : vector<2x8x13x13xf32> to vector<2x1x13x1xf32>
    %59 = vector.shape_cast %58 : vector<2x1x13x1xf32> to vector<2x13x1xf32>
    %c0_42 = arith.constant 0 : index
    %c0_43 = arith.constant 0 : index
    %c13 = arith.constant 13 : index
    %60 = vector.load %arg2[%c0_42, %c0_43, %c13] : memref<2x13x156xf32, #tpu.memory_space<vmem>>, vector<2x13x1xf32>
    tpu.vector_store %arg2[%c0_42, %c0_43, %c13], %59 {strides = array<i32>} : memref<2x13x156xf32, #tpu.memory_space<vmem>>, vector<2x13x1xf32>,
    %61 = vector.extract_strided_slice %15 {offsets = [0, 1, 0, 2], sizes = [2, 1, 13, 1], strides = [1, 1, 1, 1]} : vector<2x8x13x13xf32> to vector<2x1x13x1xf32>
    %62 = vector.shape_cast %61 : vector<2x1x13x1xf32> to vector<2x13x1xf32>
    %c0_44 = arith.constant 0 : index
    %c0_45 = arith.constant 0 : index
    %c25 = arith.constant 25 : index
    %63 = vector.load %arg2[%c0_44, %c0_45, %c25] : memref<2x13x156xf32, #tpu.memory_space<vmem>>, vector<2x13x1xf32>
    tpu.vector_store %arg2[%c0_44, %c0_45, %c25], %62 {strides = array<i32>} : memref<2x13x156xf32, #tpu.memory_space<vmem>>, vector<2x13x1xf32>,
    %64 = vector.extract_strided_slice %15 {offsets = [0, 1, 0, 3], sizes = [2, 1, 13, 1], strides = [1, 1, 1, 1]} : vector<2x8x13x13xf32> to vector<2x1x13x1xf32>
    %65 = vector.shape_cast %64 : vector<2x1x13x1xf32> to vector<2x13x1xf32>
    %c0_46 = arith.constant 0 : index
    %c0_47 = arith.constant 0 : index
    %c37 = arith.constant 37 : index
    %66 = vector.load %arg2[%c0_46, %c0_47, %c37] : memref<2x13x156xf32, #tpu.memory_space<vmem>>, vector<2x13x1xf32>
    tpu.vector_store %arg2[%c0_46, %c0_47, %c37], %65 {strides = array<i32>} : memref<2x13x156xf32, #tpu.memory_space<vmem>>, vector<2x13x1xf32>,
    %67 = vector.extract_strided_slice %15 {offsets = [0, 1, 0, 4], sizes = [2, 1, 13, 1], strides = [1, 1, 1, 1]} : vector<2x8x13x13xf32> to vector<2x1x13x1xf32>
    %68 = vector.shape_cast %67 : vector<2x1x13x1xf32> to vector<2x13x1xf32>
    %c0_48 = arith.constant 0 : index
    %c0_49 = arith.constant 0 : index
    %c49 = arith.constant 49 : index
    %69 = vector.load %arg2[%c0_48, %c0_49, %c49] : memref<2x13x156xf32, #tpu.memory_space<vmem>>, vector<2x13x1xf32>
    tpu.vector_store %arg2[%c0_48, %c0_49, %c49], %68 {strides = array<i32>} : memref<2x13x156xf32, #tpu.memory_space<vmem>>, vector<2x13x1xf32>,
    %70 = vector.extract_strided_slice %15 {offsets = [0, 1, 0, 5], sizes = [2, 1, 13, 1], strides = [1, 1, 1, 1]} : vector<2x8x13x13xf32> to vector<2x1x13x1xf32>
    %71 = vector.shape_cast %70 : vector<2x1x13x1xf32> to vector<2x13x1xf32>
    %c0_50 = arith.constant 0 : index
    %c0_51 = arith.constant 0 : index
    %c61 = arith.constant 61 : index
    %72 = vector.load %arg2[%c0_50, %c0_51, %c61] : memref<2x13x156xf32, #tpu.memory_space<vmem>>, vector<2x13x1xf32>
    tpu.vector_store %arg2[%c0_50, %c0_51, %c61], %71 {strides = array<i32>} : memref<2x13x156xf32, #tpu.memory_space<vmem>>, vector<2x13x1xf32>,
    %73 = vector.extract_strided_slice %15 {offsets = [0, 1, 0, 6], sizes = [2, 1, 13, 1], strides = [1, 1, 1, 1]} : vector<2x8x13x13xf32> to vector<2x1x13x1xf32>
    %74 = vector.shape_cast %73 : vector<2x1x13x1xf32> to vector<2x13x1xf32>
    %c0_52 = arith.constant 0 : index
    %c0_53 = arith.constant 0 : index
    %c73 = arith.constant 73 : index
    %75 = vector.load %arg2[%c0_52, %c0_53, %c73] : memref<2x13x156xf32, #tpu.memory_space<vmem>>, vector<2x13x1xf32>
    tpu.vector_store %arg2[%c0_52, %c0_53, %c73], %74 {strides = array<i32>} : memref<2x13x156xf32, #tpu.memory_space<vmem>>, vector<2x13x1xf32>,
    %76 = vector.extract_strided_slice %15 {offsets = [0, 1, 0, 7], sizes = [2, 1, 13, 1], strides = [1, 1, 1, 1]} : vector<2x8x13x13xf32> to vector<2x1x13x1xf32>
    %77 = vector.shape_cast %76 : vector<2x1x13x1xf32> to vector<2x13x1xf32>
    %c0_54 = arith.constant 0 : index
    %c0_55 = arith.constant 0 : index
    %c85 = arith.constant 85 : index
    %78 = vector.load %arg2[%c0_54, %c0_55, %c85] : memref<2x13x156xf32, #tpu.memory_space<vmem>>, vector<2x13x1xf32>
    tpu.vector_store %arg2[%c0_54, %c0_55, %c85], %77 {strides = array<i32>} : memref<2x13x156xf32, #tpu.memory_space<vmem>>, vector<2x13x1xf32>,
    %79 = vector.extract_strided_slice %15 {offsets = [0, 1, 0, 8], sizes = [2, 1, 13, 1], strides = [1, 1, 1, 1]} : vector<2x8x13x13xf32> to vector<2x1x13x1xf32>
    %80 = vector.shape_cast %79 : vector<2x1x13x1xf32> to vector<2x13x1xf32>
    %c0_56 = arith.constant 0 : index
    %c0_57 = arith.constant 0 : index
    %c97 = arith.constant 97 : index
    %81 = vector.load %arg2[%c0_56, %c0_57, %c97] : memref<2x13x156xf32, #tpu.memory_space<vmem>>, vector<2x13x1xf32>
    tpu.vector_store %arg2[%c0_56, %c0_57, %c97], %80 {strides = array<i32>} : memref<2x13x156xf32, #tpu.memory_space<vmem>>, vector<2x13x1xf32>,
    %82 = vector.extract_strided_slice %15 {offsets = [0, 1, 0, 9], sizes = [2, 1, 13, 1], strides = [1, 1, 1, 1]} : vector<2x8x13x13xf32> to vector<2x1x13x1xf32>
    %83 = vector.shape_cast %82 : vector<2x1x13x1xf32> to vector<2x13x1xf32>
    %c0_58 = arith.constant 0 : index
    %c0_59 = arith.constant 0 : index
    %c109 = arith.constant 109 : index
    %84 = vector.load %arg2[%c0_58, %c0_59, %c109] : memref<2x13x156xf32, #tpu.memory_space<vmem>>, vector<2x13x1xf32>
    tpu.vector_store %arg2[%c0_58, %c0_59, %c109], %83 {strides = array<i32>} : memref<2x13x156xf32, #tpu.memory_space<vmem>>, vector<2x13x1xf32>,
    %85 = vector.extract_strided_slice %15 {offsets = [0, 1, 0, 10], sizes = [2, 1, 13, 1], strides = [1, 1, 1, 1]} : vector<2x8x13x13xf32> to vector<2x1x13x1xf32>
    %86 = vector.shape_cast %85 : vector<2x1x13x1xf32> to vector<2x13x1xf32>
    %c0_60 = arith.constant 0 : index
    %c0_61 = arith.constant 0 : index
    %c121 = arith.constant 121 : index
    %87 = vector.load %arg2[%c0_60, %c0_61, %c121] : memref<2x13x156xf32, #tpu.memory_space<vmem>>, vector<2x13x1xf32>
    tpu.vector_store %arg2[%c0_60, %c0_61, %c121], %86 {strides = array<i32>} : memref<2x13x156xf32, #tpu.memory_space<vmem>>, vector<2x13x1xf32>,
    %88 = vector.extract_strided_slice %15 {offsets = [0, 1, 0, 11], sizes = [2, 1, 13, 1], strides = [1, 1, 1, 1]} : vector<2x8x13x13xf32> to vector<2x1x13x1xf32>
    %89 = vector.shape_cast %88 : vector<2x1x13x1xf32> to vector<2x13x1xf32>
    %c0_62 = arith.constant 0 : index
    %c0_63 = arith.constant 0 : index
    %c133 = arith.constant 133 : index
    %90 = vector.load %arg2[%c0_62, %c0_63, %c133] : memref<2x13x156xf32, #tpu.memory_space<vmem>>, vector<2x13x1xf32>
    tpu.vector_store %arg2[%c0_62, %c0_63, %c133], %89 {strides = array<i32>} : memref<2x13x156xf32, #tpu.memory_space<vmem>>, vector<2x13x1xf32>,
    %91 = vector.extract_strided_slice %15 {offsets = [0, 1, 0, 12], sizes = [2, 1, 13, 1], strides = [1, 1, 1, 1]} : vector<2x8x13x13xf32> to vector<2x1x13x1xf32>
    %92 = vector.shape_cast %91 : vector<2x1x13x1xf32> to vector<2x13x1xf32>
    %c0_64 = arith.constant 0 : index
    %c0_65 = arith.constant 0 : index
    %c145 = arith.constant 145 : index
    %93 = vector.load %arg2[%c0_64, %c0_65, %c145] : memref<2x13x156xf32, #tpu.memory_space<vmem>>, vector<2x13x1xf32>
    tpu.vector_store %arg2[%c0_64, %c0_65, %c145], %92 {strides = array<i32>} : memref<2x13x156xf32, #tpu.memory_space<vmem>>, vector<2x13x1xf32>,
    %94 = vector.extract_strided_slice %15 {offsets = [0, 2, 0, 0], sizes = [2, 1, 13, 1], strides = [1, 1, 1, 1]} : vector<2x8x13x13xf32> to vector<2x1x13x1xf32>
    %95 = vector.shape_cast %94 : vector<2x1x13x1xf32> to vector<2x13x1xf32>
    %c0_66 = arith.constant 0 : index
    %c0_67 = arith.constant 0 : index
    %c2_68 = arith.constant 2 : index
    %96 = vector.load %arg2[%c0_66, %c0_67, %c2_68] : memref<2x13x156xf32, #tpu.memory_space<vmem>>, vector<2x13x1xf32>
    tpu.vector_store %arg2[%c0_66, %c0_67, %c2_68], %95 {strides = array<i32>} : memref<2x13x156xf32, #tpu.memory_space<vmem>>, vector<2x13x1xf32>,
    %97 = vector.extract_strided_slice %15 {offsets = [0, 2, 0, 1], sizes = [2, 1, 13, 1], strides = [1, 1, 1, 1]} : vector<2x8x13x13xf32> to vector<2x1x13x1xf32>
    %98 = vector.shape_cast %97 : vector<2x1x13x1xf32> to vector<2x13x1xf32>
    %c0_69 = arith.constant 0 : index
    %c0_70 = arith.constant 0 : index
    %c14 = arith.constant 14 : index
    %99 = vector.load %arg2[%c0_69, %c0_70, %c14] : memref<2x13x156xf32, #tpu.memory_space<vmem>>, vector<2x13x1xf32>
    tpu.vector_store %arg2[%c0_69, %c0_70, %c14], %98 {strides = array<i32>} : memref<2x13x156xf32, #tpu.memory_space<vmem>>, vector<2x13x1xf32>,
    %100 = vector.extract_strided_slice %15 {offsets = [0, 2, 0, 2], sizes = [2, 1, 13, 1], strides = [1, 1, 1, 1]} : vector<2x8x13x13xf32> to vector<2x1x13x1xf32>
    %101 = vector.shape_cast %100 : vector<2x1x13x1xf32> to vector<2x13x1xf32>
    %c0_71 = arith.constant 0 : index
    %c0_72 = arith.constant 0 : index
    %c26 = arith.constant 26 : index
    %102 = vector.load %arg2[%c0_71, %c0_72, %c26] : memref<2x13x156xf32, #tpu.memory_space<vmem>>, vector<2x13x1xf32>
    tpu.vector_store %arg2[%c0_71, %c0_72, %c26], %101 {strides = array<i32>} : memref<2x13x156xf32, #tpu.memory_space<vmem>>, vector<2x13x1xf32>,
    %103 = vector.extract_strided_slice %15 {offsets = [0, 2, 0, 3], sizes = [2, 1, 13, 1], strides = [1, 1, 1, 1]} : vector<2x8x13x13xf32> to vector<2x1x13x1xf32>
    %104 = vector.shape_cast %103 : vector<2x1x13x1xf32> to vector<2x13x1xf32>
    %c0_73 = arith.constant 0 : index
    %c0_74 = arith.constant 0 : index
    %c38 = arith.constant 38 : index
    %105 = vector.load %arg2[%c0_73, %c0_74, %c38] : memref<2x13x156xf32, #tpu.memory_space<vmem>>, vector<2x13x1xf32>
    tpu.vector_store %arg2[%c0_73, %c0_74, %c38], %104 {strides = array<i32>} : memref<2x13x156xf32, #tpu.memory_space<vmem>>, vector<2x13x1xf32>,
    %106 = vector.extract_strided_slice %15 {offsets = [0, 2, 0, 4], sizes = [2, 1, 13, 1], strides = [1, 1, 1, 1]} : vector<2x8x13x13xf32> to vector<2x1x13x1xf32>
    %107 = vector.shape_cast %106 : vector<2x1x13x1xf32> to vector<2x13x1xf32>
    %c0_75 = arith.constant 0 : index
    %c0_76 = arith.constant 0 : index
    %c50 = arith.constant 50 : index
    %108 = vector.load %arg2[%c0_75, %c0_76, %c50] : memref<2x13x156xf32, #tpu.memory_space<vmem>>, vector<2x13x1xf32>
    tpu.vector_store %arg2[%c0_75, %c0_76, %c50], %107 {strides = array<i32>} : memref<2x13x156xf32, #tpu.memory_space<vmem>>, vector<2x13x1xf32>,
    %109 = vector.extract_strided_slice %15 {offsets = [0, 2, 0, 5], sizes = [2, 1, 13, 1], strides = [1, 1, 1, 1]} : vector<2x8x13x13xf32> to vector<2x1x13x1xf32>
    %110 = vector.shape_cast %109 : vector<2x1x13x1xf32> to vector<2x13x1xf32>
    %c0_77 = arith.constant 0 : index
    %c0_78 = arith.constant 0 : index
    %c62 = arith.constant 62 : index
    %111 = vector.load %arg2[%c0_77, %c0_78, %c62] : memref<2x13x156xf32, #tpu.memory_space<vmem>>, vector<2x13x1xf32>
    tpu.vector_store %arg2[%c0_77, %c0_78, %c62], %110 {strides = array<i32>} : memref<2x13x156xf32, #tpu.memory_space<vmem>>, vector<2x13x1xf32>,
    %112 = vector.extract_strided_slice %15 {offsets = [0, 2, 0, 6], sizes = [2, 1, 13, 1], strides = [1, 1, 1, 1]} : vector<2x8x13x13xf32> to vector<2x1x13x1xf32>
    %113 = vector.shape_cast %112 : vector<2x1x13x1xf32> to vector<2x13x1xf32>
    %c0_79 = arith.constant 0 : index
    %c0_80 = arith.constant 0 : index
    %c74 = arith.constant 74 : index
    %114 = vector.load %arg2[%c0_79, %c0_80, %c74] : memref<2x13x156xf32, #tpu.memory_space<vmem>>, vector<2x13x1xf32>
    tpu.vector_store %arg2[%c0_79, %c0_80, %c74], %113 {strides = array<i32>} : memref<2x13x156xf32, #tpu.memory_space<vmem>>, vector<2x13x1xf32>,
    %115 = vector.extract_strided_slice %15 {offsets = [0, 2, 0, 7], sizes = [2, 1, 13, 1], strides = [1, 1, 1, 1]} : vector<2x8x13x13xf32> to vector<2x1x13x1xf32>
    %116 = vector.shape_cast %115 : vector<2x1x13x1xf32> to vector<2x13x1xf32>
    %c0_81 = arith.constant 0 : index
    %c0_82 = arith.constant 0 : index
    %c86 = arith.constant 86 : index
    %117 = vector.load %arg2[%c0_81, %c0_82, %c86] : memref<2x13x156xf32, #tpu.memory_space<vmem>>, vector<2x13x1xf32>
    tpu.vector_store %arg2[%c0_81, %c0_82, %c86], %116 {strides = array<i32>} : memref<2x13x156xf32, #tpu.memory_space<vmem>>, vector<2x13x1xf32>,
    %118 = vector.extract_strided_slice %15 {offsets = [0, 2, 0, 8], sizes = [2, 1, 13, 1], strides = [1, 1, 1, 1]} : vector<2x8x13x13xf32> to vector<2x1x13x1xf32>
    %119 = vector.shape_cast %118 : vector<2x1x13x1xf32> to vector<2x13x1xf32>
    %c0_83 = arith.constant 0 : index
    %c0_84 = arith.constant 0 : index
    %c98 = arith.constant 98 : index
    %120 = vector.load %arg2[%c0_83, %c0_84, %c98] : memref<2x13x156xf32, #tpu.memory_space<vmem>>, vector<2x13x1xf32>
    tpu.vector_store %arg2[%c0_83, %c0_84, %c98], %119 {strides = array<i32>} : memref<2x13x156xf32, #tpu.memory_space<vmem>>, vector<2x13x1xf32>,
    %121 = vector.extract_strided_slice %15 {offsets = [0, 2, 0, 9], sizes = [2, 1, 13, 1], strides = [1, 1, 1, 1]} : vector<2x8x13x13xf32> to vector<2x1x13x1xf32>
    %122 = vector.shape_cast %121 : vector<2x1x13x1xf32> to vector<2x13x1xf32>
    %c0_85 = arith.constant 0 : index
    %c0_86 = arith.constant 0 : index
    %c110 = arith.constant 110 : index
    %123 = vector.load %arg2[%c0_85, %c0_86, %c110] : memref<2x13x156xf32, #tpu.memory_space<vmem>>, vector<2x13x1xf32>
    tpu.vector_store %arg2[%c0_85, %c0_86, %c110], %122 {strides = array<i32>} : memref<2x13x156xf32, #tpu.memory_space<vmem>>, vector<2x13x1xf32>,
    %124 = vector.extract_strided_slice %15 {offsets = [0, 2, 0, 10], sizes = [2, 1, 13, 1], strides = [1, 1, 1, 1]} : vector<2x8x13x13xf32> to vector<2x1x13x1xf32>
    %125 = vector.shape_cast %124 : vector<2x1x13x1xf32> to vector<2x13x1xf32>
    %c0_87 = arith.constant 0 : index
    %c0_88 = arith.constant 0 : index
    %c122 = arith.constant 122 : index
    %126 = vector.load %arg2[%c0_87, %c0_88, %c122] : memref<2x13x156xf32, #tpu.memory_space<vmem>>, vector<2x13x1xf32>
    tpu.vector_store %arg2[%c0_87, %c0_88, %c122], %125 {strides = array<i32>} : memref<2x13x156xf32, #tpu.memory_space<vmem>>, vector<2x13x1xf32>,
    %127 = vector.extract_strided_slice %15 {offsets = [0, 2, 0, 11], sizes = [2, 1, 13, 1], strides = [1, 1, 1, 1]} : vector<2x8x13x13xf32> to vector<2x1x13x1xf32>
    %128 = vector.shape_cast %127 : vector<2x1x13x1xf32> to vector<2x13x1xf32>
    %c0_89 = arith.constant 0 : index
    %c0_90 = arith.constant 0 : index
    %c134 = arith.constant 134 : index
    %129 = vector.load %arg2[%c0_89, %c0_90, %c134] : memref<2x13x156xf32, #tpu.memory_space<vmem>>, vector<2x13x1xf32>
    tpu.vector_store %arg2[%c0_89, %c0_90, %c134], %128 {strides = array<i32>} : memref<2x13x156xf32, #tpu.memory_space<vmem>>, vector<2x13x1xf32>,
    %130 = vector.extract_strided_slice %15 {offsets = [0, 2, 0, 12], sizes = [2, 1, 13, 1], strides = [1, 1, 1, 1]} : vector<2x8x13x13xf32> to vector<2x1x13x1xf32>
    %131 = vector.shape_cast %130 : vector<2x1x13x1xf32> to vector<2x13x1xf32>
    %c0_91 = arith.constant 0 : index
    %c0_92 = arith.constant 0 : index
    %c146 = arith.constant 146 : index
    %132 = vector.load %arg2[%c0_91, %c0_92, %c146] : memref<2x13x156xf32, #tpu.memory_space<vmem>>, vector<2x13x1xf32>
    tpu.vector_store %arg2[%c0_91, %c0_92, %c146], %131 {strides = array<i32>} : memref<2x13x156xf32, #tpu.memory_space<vmem>>, vector<2x13x1xf32>,
    %133 = vector.extract_strided_slice %15 {offsets = [0, 3, 0, 0], sizes = [2, 1, 13, 1], strides = [1, 1, 1, 1]} : vector<2x8x13x13xf32> to vector<2x1x13x1xf32>
    %134 = vector.shape_cast %133 : vector<2x1x13x1xf32> to vector<2x13x1xf32>
    %c0_93 = arith.constant 0 : index
    %c0_94 = arith.constant 0 : index
    %c3_95 = arith.constant 3 : index
    %135 = vector.load %arg2[%c0_93, %c0_94, %c3_95] : memref<2x13x156xf32, #tpu.memory_space<vmem>>, vector<2x13x1xf32>
    tpu.vector_store %arg2[%c0_93, %c0_94, %c3_95], %134 {strides = array<i32>} : memref<2x13x156xf32, #tpu.memory_space<vmem>>, vector<2x13x1xf32>,
    %136 = vector.extract_strided_slice %15 {offsets = [0, 3, 0, 1], sizes = [2, 1, 13, 1], strides = [1, 1, 1, 1]} : vector<2x8x13x13xf32> to vector<2x1x13x1xf32>
    %137 = vector.shape_cast %136 : vector<2x1x13x1xf32> to vector<2x13x1xf32>
    %c0_96 = arith.constant 0 : index
    %c0_97 = arith.constant 0 : index
    %c15 = arith.constant 15 : index
    %138 = vector.load %arg2[%c0_96, %c0_97, %c15] : memref<2x13x156xf32, #tpu.memory_space<vmem>>, vector<2x13x1xf32>
    tpu.vector_store %arg2[%c0_96, %c0_97, %c15], %137 {strides = array<i32>} : memref<2x13x156xf32, #tpu.memory_space<vmem>>, vector<2x13x1xf32>,
    %139 = vector.extract_strided_slice %15 {offsets = [0, 3, 0, 2], sizes = [2, 1, 13, 1], strides = [1, 1, 1, 1]} : vector<2x8x13x13xf32> to vector<2x1x13x1xf32>
    %140 = vector.shape_cast %139 : vector<2x1x13x1xf32> to vector<2x13x1xf32>
    %c0_98 = arith.constant 0 : index
    %c0_99 = arith.constant 0 : index
    %c27 = arith.constant 27 : index
    %141 = vector.load %arg2[%c0_98, %c0_99, %c27] : memref<2x13x156xf32, #tpu.memory_space<vmem>>, vector<2x13x1xf32>
    tpu.vector_store %arg2[%c0_98, %c0_99, %c27], %140 {strides = array<i32>} : memref<2x13x156xf32, #tpu.memory_space<vmem>>, vector<2x13x1xf32>,
    %142 = vector.extract_strided_slice %15 {offsets = [0, 3, 0, 3], sizes = [2, 1, 13, 1], strides = [1, 1, 1, 1]} : vector<2x8x13x13xf32> to vector<2x1x13x1xf32>
    %143 = vector.shape_cast %142 : vector<2x1x13x1xf32> to vector<2x13x1xf32>
    %c0_100 = arith.constant 0 : index
    %c0_101 = arith.constant 0 : index
    %c39 = arith.constant 39 : index
    %144 = vector.load %arg2[%c0_100, %c0_101, %c39] : memref<2x13x156xf32, #tpu.memory_space<vmem>>, vector<2x13x1xf32>
    tpu.vector_store %arg2[%c0_100, %c0_101, %c39], %143 {strides = array<i32>} : memref<2x13x156xf32, #tpu.memory_space<vmem>>, vector<2x13x1xf32>,
    %145 = vector.extract_strided_slice %15 {offsets = [0, 3, 0, 4], sizes = [2, 1, 13, 1], strides = [1, 1, 1, 1]} : vector<2x8x13x13xf32> to vector<2x1x13x1xf32>
    %146 = vector.shape_cast %145 : vector<2x1x13x1xf32> to vector<2x13x1xf32>
    %c0_102 = arith.constant 0 : index
    %c0_103 = arith.constant 0 : index
    %c51 = arith.constant 51 : index
    %147 = vector.load %arg2[%c0_102, %c0_103, %c51] : memref<2x13x156xf32, #tpu.memory_space<vmem>>, vector<2x13x1xf32>
    tpu.vector_store %arg2[%c0_102, %c0_103, %c51], %146 {strides = array<i32>} : memref<2x13x156xf32, #tpu.memory_space<vmem>>, vector<2x13x1xf32>,
    %148 = vector.extract_strided_slice %15 {offsets = [0, 3, 0, 5], sizes = [2, 1, 13, 1], strides = [1, 1, 1, 1]} : vector<2x8x13x13xf32> to vector<2x1x13x1xf32>
    %149 = vector.shape_cast %148 : vector<2x1x13x1xf32> to vector<2x13x1xf32>
    %c0_104 = arith.constant 0 : index
    %c0_105 = arith.constant 0 : index
    %c63 = arith.constant 63 : index
    %150 = vector.load %arg2[%c0_104, %c0_105, %c63] : memref<2x13x156xf32, #tpu.memory_space<vmem>>, vector<2x13x1xf32>
    tpu.vector_store %arg2[%c0_104, %c0_105, %c63], %149 {strides = array<i32>} : memref<2x13x156xf32, #tpu.memory_space<vmem>>, vector<2x13x1xf32>,
    %151 = vector.extract_strided_slice %15 {offsets = [0, 3, 0, 6], sizes = [2, 1, 13, 1], strides = [1, 1, 1, 1]} : vector<2x8x13x13xf32> to vector<2x1x13x1xf32>
    %152 = vector.shape_cast %151 : vector<2x1x13x1xf32> to vector<2x13x1xf32>
    %c0_106 = arith.constant 0 : index
    %c0_107 = arith.constant 0 : index
    %c75 = arith.constant 75 : index
    %153 = vector.load %arg2[%c0_106, %c0_107, %c75] : memref<2x13x156xf32, #tpu.memory_space<vmem>>, vector<2x13x1xf32>
    tpu.vector_store %arg2[%c0_106, %c0_107, %c75], %152 {strides = array<i32>} : memref<2x13x156xf32, #tpu.memory_space<vmem>>, vector<2x13x1xf32>,
    %154 = vector.extract_strided_slice %15 {offsets = [0, 3, 0, 7], sizes = [2, 1, 13, 1], strides = [1, 1, 1, 1]} : vector<2x8x13x13xf32> to vector<2x1x13x1xf32>
    %155 = vector.shape_cast %154 : vector<2x1x13x1xf32> to vector<2x13x1xf32>
    %c0_108 = arith.constant 0 : index
    %c0_109 = arith.constant 0 : index
    %c87 = arith.constant 87 : index
    %156 = vector.load %arg2[%c0_108, %c0_109, %c87] : memref<2x13x156xf32, #tpu.memory_space<vmem>>, vector<2x13x1xf32>
    tpu.vector_store %arg2[%c0_108, %c0_109, %c87], %155 {strides = array<i32>} : memref<2x13x156xf32, #tpu.memory_space<vmem>>, vector<2x13x1xf32>,
    %157 = vector.extract_strided_slice %15 {offsets = [0, 3, 0, 8], sizes = [2, 1, 13, 1], strides = [1, 1, 1, 1]} : vector<2x8x13x13xf32> to vector<2x1x13x1xf32>
    %158 = vector.shape_cast %157 : vector<2x1x13x1xf32> to vector<2x13x1xf32>
    %c0_110 = arith.constant 0 : index
    %c0_111 = arith.constant 0 : index
    %c99 = arith.constant 99 : index
    %159 = vector.load %arg2[%c0_110, %c0_111, %c99] : memref<2x13x156xf32, #tpu.memory_space<vmem>>, vector<2x13x1xf32>
    tpu.vector_store %arg2[%c0_110, %c0_111, %c99], %158 {strides = array<i32>} : memref<2x13x156xf32, #tpu.memory_space<vmem>>, vector<2x13x1xf32>,
    %160 = vector.extract_strided_slice %15 {offsets = [0, 3, 0, 9], sizes = [2, 1, 13, 1], strides = [1, 1, 1, 1]} : vector<2x8x13x13xf32> to vector<2x1x13x1xf32>
    %161 = vector.shape_cast %160 : vector<2x1x13x1xf32> to vector<2x13x1xf32>
    %c0_112 = arith.constant 0 : index
    %c0_113 = arith.constant 0 : index
    %c111 = arith.constant 111 : index
    %162 = vector.load %arg2[%c0_112, %c0_113, %c111] : memref<2x13x156xf32, #tpu.memory_space<vmem>>, vector<2x13x1xf32>
    tpu.vector_store %arg2[%c0_112, %c0_113, %c111], %161 {strides = array<i32>} : memref<2x13x156xf32, #tpu.memory_space<vmem>>, vector<2x13x1xf32>,
    %163 = vector.extract_strided_slice %15 {offsets = [0, 3, 0, 10], sizes = [2, 1, 13, 1], strides = [1, 1, 1, 1]} : vector<2x8x13x13xf32> to vector<2x1x13x1xf32>
    %164 = vector.shape_cast %163 : vector<2x1x13x1xf32> to vector<2x13x1xf32>
    %c0_114 = arith.constant 0 : index
    %c0_115 = arith.constant 0 : index
    %c123 = arith.constant 123 : index
    %165 = vector.load %arg2[%c0_114, %c0_115, %c123] : memref<2x13x156xf32, #tpu.memory_space<vmem>>, vector<2x13x1xf32>
    tpu.vector_store %arg2[%c0_114, %c0_115, %c123], %164 {strides = array<i32>} : memref<2x13x156xf32, #tpu.memory_space<vmem>>, vector<2x13x1xf32>,
    %166 = vector.extract_strided_slice %15 {offsets = [0, 3, 0, 11], sizes = [2, 1, 13, 1], strides = [1, 1, 1, 1]} : vector<2x8x13x13xf32> to vector<2x1x13x1xf32>
    %167 = vector.shape_cast %166 : vector<2x1x13x1xf32> to vector<2x13x1xf32>
    %c0_116 = arith.constant 0 : index
    %c0_117 = arith.constant 0 : index
    %c135 = arith.constant 135 : index
    %168 = vector.load %arg2[%c0_116, %c0_117, %c135] : memref<2x13x156xf32, #tpu.memory_space<vmem>>, vector<2x13x1xf32>
    tpu.vector_store %arg2[%c0_116, %c0_117, %c135], %167 {strides = array<i32>} : memref<2x13x156xf32, #tpu.memory_space<vmem>>, vector<2x13x1xf32>,
    %169 = vector.extract_strided_slice %15 {offsets = [0, 3, 0, 12], sizes = [2, 1, 13, 1], strides = [1, 1, 1, 1]} : vector<2x8x13x13xf32> to vector<2x1x13x1xf32>
    %170 = vector.shape_cast %169 : vector<2x1x13x1xf32> to vector<2x13x1xf32>
    %c0_118 = arith.constant 0 : index
    %c0_119 = arith.constant 0 : index
    %c147 = arith.constant 147 : index
    %171 = vector.load %arg2[%c0_118, %c0_119, %c147] : memref<2x13x156xf32, #tpu.memory_space<vmem>>, vector<2x13x1xf32>
    tpu.vector_store %arg2[%c0_118, %c0_119, %c147], %170 {strides = array<i32>} : memref<2x13x156xf32, #tpu.memory_space<vmem>>, vector<2x13x1xf32>,
    %172 = vector.extract_strided_slice %15 {offsets = [0, 4, 0, 0], sizes = [2, 1, 13, 1], strides = [1, 1, 1, 1]} : vector<2x8x13x13xf32> to vector<2x1x13x1xf32>
    %173 = vector.shape_cast %172 : vector<2x1x13x1xf32> to vector<2x13x1xf32>
    %c0_120 = arith.constant 0 : index
    %c0_121 = arith.constant 0 : index
    %c4 = arith.constant 4 : index
    %174 = vector.load %arg2[%c0_120, %c0_121, %c4] : memref<2x13x156xf32, #tpu.memory_space<vmem>>, vector<2x13x1xf32>
    tpu.vector_store %arg2[%c0_120, %c0_121, %c4], %173 {strides = array<i32>} : memref<2x13x156xf32, #tpu.memory_space<vmem>>, vector<2x13x1xf32>,
    %175 = vector.extract_strided_slice %15 {offsets = [0, 4, 0, 1], sizes = [2, 1, 13, 1], strides = [1, 1, 1, 1]} : vector<2x8x13x13xf32> to vector<2x1x13x1xf32>
    %176 = vector.shape_cast %175 : vector<2x1x13x1xf32> to vector<2x13x1xf32>
    %c0_122 = arith.constant 0 : index
    %c0_123 = arith.constant 0 : index
    %c16 = arith.constant 16 : index
    %177 = vector.load %arg2[%c0_122, %c0_123, %c16] : memref<2x13x156xf32, #tpu.memory_space<vmem>>, vector<2x13x1xf32>
    tpu.vector_store %arg2[%c0_122, %c0_123, %c16], %176 {strides = array<i32>} : memref<2x13x156xf32, #tpu.memory_space<vmem>>, vector<2x13x1xf32>,
    %178 = vector.extract_strided_slice %15 {offsets = [0, 4, 0, 2], sizes = [2, 1, 13, 1], strides = [1, 1, 1, 1]} : vector<2x8x13x13xf32> to vector<2x1x13x1xf32>
    %179 = vector.shape_cast %178 : vector<2x1x13x1xf32> to vector<2x13x1xf32>
    %c0_124 = arith.constant 0 : index
    %c0_125 = arith.constant 0 : index
    %c28 = arith.constant 28 : index
    %180 = vector.load %arg2[%c0_124, %c0_125, %c28] : memref<2x13x156xf32, #tpu.memory_space<vmem>>, vector<2x13x1xf32>
    tpu.vector_store %arg2[%c0_124, %c0_125, %c28], %179 {strides = array<i32>} : memref<2x13x156xf32, #tpu.memory_space<vmem>>, vector<2x13x1xf32>,
    %181 = vector.extract_strided_slice %15 {offsets = [0, 4, 0, 3], sizes = [2, 1, 13, 1], strides = [1, 1, 1, 1]} : vector<2x8x13x13xf32> to vector<2x1x13x1xf32>
    %182 = vector.shape_cast %181 : vector<2x1x13x1xf32> to vector<2x13x1xf32>
    %c0_126 = arith.constant 0 : index
    %c0_127 = arith.constant 0 : index
    %c40 = arith.constant 40 : index
    %183 = vector.load %arg2[%c0_126, %c0_127, %c40] : memref<2x13x156xf32, #tpu.memory_space<vmem>>, vector<2x13x1xf32>
    tpu.vector_store %arg2[%c0_126, %c0_127, %c40], %182 {strides = array<i32>} : memref<2x13x156xf32, #tpu.memory_space<vmem>>, vector<2x13x1xf32>,
    %184 = vector.extract_strided_slice %15 {offsets = [0, 4, 0, 4], sizes = [2, 1, 13, 1], strides = [1, 1, 1, 1]} : vector<2x8x13x13xf32> to vector<2x1x13x1xf32>
    %185 = vector.shape_cast %184 : vector<2x1x13x1xf32> to vector<2x13x1xf32>
    %c0_128 = arith.constant 0 : index
    %c0_129 = arith.constant 0 : index
    %c52 = arith.constant 52 : index
    %186 = vector.load %arg2[%c0_128, %c0_129, %c52] : memref<2x13x156xf32, #tpu.memory_space<vmem>>, vector<2x13x1xf32>
    tpu.vector_store %arg2[%c0_128, %c0_129, %c52], %185 {strides = array<i32>} : memref<2x13x156xf32, #tpu.memory_space<vmem>>, vector<2x13x1xf32>,
    %187 = vector.extract_strided_slice %15 {offsets = [0, 4, 0, 5], sizes = [2, 1, 13, 1], strides = [1, 1, 1, 1]} : vector<2x8x13x13xf32> to vector<2x1x13x1xf32>
    %188 = vector.shape_cast %187 : vector<2x1x13x1xf32> to vector<2x13x1xf32>
    %c0_130 = arith.constant 0 : index
    %c0_131 = arith.constant 0 : index
    %c64 = arith.constant 64 : index
    %189 = vector.load %arg2[%c0_130, %c0_131, %c64] : memref<2x13x156xf32, #tpu.memory_space<vmem>>, vector<2x13x1xf32>
    tpu.vector_store %arg2[%c0_130, %c0_131, %c64], %188 {strides = array<i32>} : memref<2x13x156xf32, #tpu.memory_space<vmem>>, vector<2x13x1xf32>,
    %190 = vector.extract_strided_slice %15 {offsets = [0, 4, 0, 6], sizes = [2, 1, 13, 1], strides = [1, 1, 1, 1]} : vector<2x8x13x13xf32> to vector<2x1x13x1xf32>
    %191 = vector.shape_cast %190 : vector<2x1x13x1xf32> to vector<2x13x1xf32>
    %c0_132 = arith.constant 0 : index
    %c0_133 = arith.constant 0 : index
    %c76 = arith.constant 76 : index
    %192 = vector.load %arg2[%c0_132, %c0_133, %c76] : memref<2x13x156xf32, #tpu.memory_space<vmem>>, vector<2x13x1xf32>
    tpu.vector_store %arg2[%c0_132, %c0_133, %c76], %191 {strides = array<i32>} : memref<2x13x156xf32, #tpu.memory_space<vmem>>, vector<2x13x1xf32>,
    %193 = vector.extract_strided_slice %15 {offsets = [0, 4, 0, 7], sizes = [2, 1, 13, 1], strides = [1, 1, 1, 1]} : vector<2x8x13x13xf32> to vector<2x1x13x1xf32>
    %194 = vector.shape_cast %193 : vector<2x1x13x1xf32> to vector<2x13x1xf32>
    %c0_134 = arith.constant 0 : index
    %c0_135 = arith.constant 0 : index
    %c88 = arith.constant 88 : index
    %195 = vector.load %arg2[%c0_134, %c0_135, %c88] : memref<2x13x156xf32, #tpu.memory_space<vmem>>, vector<2x13x1xf32>
    tpu.vector_store %arg2[%c0_134, %c0_135, %c88], %194 {strides = array<i32>} : memref<2x13x156xf32, #tpu.memory_space<vmem>>, vector<2x13x1xf32>,
    %196 = vector.extract_strided_slice %15 {offsets = [0, 4, 0, 8], sizes = [2, 1, 13, 1], strides = [1, 1, 1, 1]} : vector<2x8x13x13xf32> to vector<2x1x13x1xf32>
    %197 = vector.shape_cast %196 : vector<2x1x13x1xf32> to vector<2x13x1xf32>
    %c0_136 = arith.constant 0 : index
    %c0_137 = arith.constant 0 : index
    %c100 = arith.constant 100 : index
    %198 = vector.load %arg2[%c0_136, %c0_137, %c100] : memref<2x13x156xf32, #tpu.memory_space<vmem>>, vector<2x13x1xf32>
    tpu.vector_store %arg2[%c0_136, %c0_137, %c100], %197 {strides = array<i32>} : memref<2x13x156xf32, #tpu.memory_space<vmem>>, vector<2x13x1xf32>,
    %199 = vector.extract_strided_slice %15 {offsets = [0, 4, 0, 9], sizes = [2, 1, 13, 1], strides = [1, 1, 1, 1]} : vector<2x8x13x13xf32> to vector<2x1x13x1xf32>
    %200 = vector.shape_cast %199 : vector<2x1x13x1xf32> to vector<2x13x1xf32>
    %c0_138 = arith.constant 0 : index
    %c0_139 = arith.constant 0 : index
    %c112 = arith.constant 112 : index
    %201 = vector.load %arg2[%c0_138, %c0_139, %c112] : memref<2x13x156xf32, #tpu.memory_space<vmem>>, vector<2x13x1xf32>
    tpu.vector_store %arg2[%c0_138, %c0_139, %c112], %200 {strides = array<i32>} : memref<2x13x156xf32, #tpu.memory_space<vmem>>, vector<2x13x1xf32>,
    %202 = vector.extract_strided_slice %15 {offsets = [0, 4, 0, 10], sizes = [2, 1, 13, 1], strides = [1, 1, 1, 1]} : vector<2x8x13x13xf32> to vector<2x1x13x1xf32>
    %203 = vector.shape_cast %202 : vector<2x1x13x1xf32> to vector<2x13x1xf32>
    %c0_140 = arith.constant 0 : index
    %c0_141 = arith.constant 0 : index
    %c124 = arith.constant 124 : index
    %204 = vector.load %arg2[%c0_140, %c0_141, %c124] : memref<2x13x156xf32, #tpu.memory_space<vmem>>, vector<2x13x1xf32>
    tpu.vector_store %arg2[%c0_140, %c0_141, %c124], %203 {strides = array<i32>} : memref<2x13x156xf32, #tpu.memory_space<vmem>>, vector<2x13x1xf32>,
    %205 = vector.extract_strided_slice %15 {offsets = [0, 4, 0, 11], sizes = [2, 1, 13, 1], strides = [1, 1, 1, 1]} : vector<2x8x13x13xf32> to vector<2x1x13x1xf32>
    %206 = vector.shape_cast %205 : vector<2x1x13x1xf32> to vector<2x13x1xf32>
    %c0_142 = arith.constant 0 : index
    %c0_143 = arith.constant 0 : index
    %c136 = arith.constant 136 : index
    %207 = vector.load %arg2[%c0_142, %c0_143, %c136] : memref<2x13x156xf32, #tpu.memory_space<vmem>>, vector<2x13x1xf32>
    tpu.vector_store %arg2[%c0_142, %c0_143, %c136], %206 {strides = array<i32>} : memref<2x13x156xf32, #tpu.memory_space<vmem>>, vector<2x13x1xf32>,
    %208 = vector.extract_strided_slice %15 {offsets = [0, 4, 0, 12], sizes = [2, 1, 13, 1], strides = [1, 1, 1, 1]} : vector<2x8x13x13xf32> to vector<2x1x13x1xf32>
    %209 = vector.shape_cast %208 : vector<2x1x13x1xf32> to vector<2x13x1xf32>
    %c0_144 = arith.constant 0 : index
    %c0_145 = arith.constant 0 : index
    %c148 = arith.constant 148 : index
    %210 = vector.load %arg2[%c0_144, %c0_145, %c148] : memref<2x13x156xf32, #tpu.memory_space<vmem>>, vector<2x13x1xf32>
    tpu.vector_store %arg2[%c0_144, %c0_145, %c148], %209 {strides = array<i32>} : memref<2x13x156xf32, #tpu.memory_space<vmem>>, vector<2x13x1xf32>,
    %211 = vector.extract_strided_slice %15 {offsets = [0, 5, 0, 0], sizes = [2, 1, 13, 1], strides = [1, 1, 1, 1]} : vector<2x8x13x13xf32> to vector<2x1x13x1xf32>
    %212 = vector.shape_cast %211 : vector<2x1x13x1xf32> to vector<2x13x1xf32>
    %c0_146 = arith.constant 0 : index
    %c0_147 = arith.constant 0 : index
    %c5 = arith.constant 5 : index
    %213 = vector.load %arg2[%c0_146, %c0_147, %c5] : memref<2x13x156xf32, #tpu.memory_space<vmem>>, vector<2x13x1xf32>
    tpu.vector_store %arg2[%c0_146, %c0_147, %c5], %212 {strides = array<i32>} : memref<2x13x156xf32, #tpu.memory_space<vmem>>, vector<2x13x1xf32>,
    %214 = vector.extract_strided_slice %15 {offsets = [0, 5, 0, 1], sizes = [2, 1, 13, 1], strides = [1, 1, 1, 1]} : vector<2x8x13x13xf32> to vector<2x1x13x1xf32>
    %215 = vector.shape_cast %214 : vector<2x1x13x1xf32> to vector<2x13x1xf32>
    %c0_148 = arith.constant 0 : index
    %c0_149 = arith.constant 0 : index
    %c17 = arith.constant 17 : index
    %216 = vector.load %arg2[%c0_148, %c0_149, %c17] : memref<2x13x156xf32, #tpu.memory_space<vmem>>, vector<2x13x1xf32>
    tpu.vector_store %arg2[%c0_148, %c0_149, %c17], %215 {strides = array<i32>} : memref<2x13x156xf32, #tpu.memory_space<vmem>>, vector<2x13x1xf32>,
    %217 = vector.extract_strided_slice %15 {offsets = [0, 5, 0, 2], sizes = [2, 1, 13, 1], strides = [1, 1, 1, 1]} : vector<2x8x13x13xf32> to vector<2x1x13x1xf32>
    %218 = vector.shape_cast %217 : vector<2x1x13x1xf32> to vector<2x13x1xf32>
    %c0_150 = arith.constant 0 : index
    %c0_151 = arith.constant 0 : index
    %c29 = arith.constant 29 : index
    %219 = vector.load %arg2[%c0_150, %c0_151, %c29] : memref<2x13x156xf32, #tpu.memory_space<vmem>>, vector<2x13x1xf32>
    tpu.vector_store %arg2[%c0_150, %c0_151, %c29], %218 {strides = array<i32>} : memref<2x13x156xf32, #tpu.memory_space<vmem>>, vector<2x13x1xf32>,
    %220 = vector.extract_strided_slice %15 {offsets = [0, 5, 0, 3], sizes = [2, 1, 13, 1], strides = [1, 1, 1, 1]} : vector<2x8x13x13xf32> to vector<2x1x13x1xf32>
    %221 = vector.shape_cast %220 : vector<2x1x13x1xf32> to vector<2x13x1xf32>
    %c0_152 = arith.constant 0 : index
    %c0_153 = arith.constant 0 : index
    %c41 = arith.constant 41 : index
    %222 = vector.load %arg2[%c0_152, %c0_153, %c41] : memref<2x13x156xf32, #tpu.memory_space<vmem>>, vector<2x13x1xf32>
    tpu.vector_store %arg2[%c0_152, %c0_153, %c41], %221 {strides = array<i32>} : memref<2x13x156xf32, #tpu.memory_space<vmem>>, vector<2x13x1xf32>,
    %223 = vector.extract_strided_slice %15 {offsets = [0, 5, 0, 4], sizes = [2, 1, 13, 1], strides = [1, 1, 1, 1]} : vector<2x8x13x13xf32> to vector<2x1x13x1xf32>
    %224 = vector.shape_cast %223 : vector<2x1x13x1xf32> to vector<2x13x1xf32>
    %c0_154 = arith.constant 0 : index
    %c0_155 = arith.constant 0 : index
    %c53 = arith.constant 53 : index
    %225 = vector.load %arg2[%c0_154, %c0_155, %c53] : memref<2x13x156xf32, #tpu.memory_space<vmem>>, vector<2x13x1xf32>
    tpu.vector_store %arg2[%c0_154, %c0_155, %c53], %224 {strides = array<i32>} : memref<2x13x156xf32, #tpu.memory_space<vmem>>, vector<2x13x1xf32>,
    %226 = vector.extract_strided_slice %15 {offsets = [0, 5, 0, 5], sizes = [2, 1, 13, 1], strides = [1, 1, 1, 1]} : vector<2x8x13x13xf32> to vector<2x1x13x1xf32>
    %227 = vector.shape_cast %226 : vector<2x1x13x1xf32> to vector<2x13x1xf32>
    %c0_156 = arith.constant 0 : index
    %c0_157 = arith.constant 0 : index
    %c65 = arith.constant 65 : index
    %228 = vector.load %arg2[%c0_156, %c0_157, %c65] : memref<2x13x156xf32, #tpu.memory_space<vmem>>, vector<2x13x1xf32>
    tpu.vector_store %arg2[%c0_156, %c0_157, %c65], %227 {strides = array<i32>} : memref<2x13x156xf32, #tpu.memory_space<vmem>>, vector<2x13x1xf32>,
    %229 = vector.extract_strided_slice %15 {offsets = [0, 5, 0, 6], sizes = [2, 1, 13, 1], strides = [1, 1, 1, 1]} : vector<2x8x13x13xf32> to vector<2x1x13x1xf32>
    %230 = vector.shape_cast %229 : vector<2x1x13x1xf32> to vector<2x13x1xf32>
    %c0_158 = arith.constant 0 : index
    %c0_159 = arith.constant 0 : index
    %c77 = arith.constant 77 : index
    %231 = vector.load %arg2[%c0_158, %c0_159, %c77] : memref<2x13x156xf32, #tpu.memory_space<vmem>>, vector<2x13x1xf32>
    tpu.vector_store %arg2[%c0_158, %c0_159, %c77], %230 {strides = array<i32>} : memref<2x13x156xf32, #tpu.memory_space<vmem>>, vector<2x13x1xf32>,
    %232 = vector.extract_strided_slice %15 {offsets = [0, 5, 0, 7], sizes = [2, 1, 13, 1], strides = [1, 1, 1, 1]} : vector<2x8x13x13xf32> to vector<2x1x13x1xf32>
    %233 = vector.shape_cast %232 : vector<2x1x13x1xf32> to vector<2x13x1xf32>
    %c0_160 = arith.constant 0 : index
    %c0_161 = arith.constant 0 : index
    %c89 = arith.constant 89 : index
    %234 = vector.load %arg2[%c0_160, %c0_161, %c89] : memref<2x13x156xf32, #tpu.memory_space<vmem>>, vector<2x13x1xf32>
    tpu.vector_store %arg2[%c0_160, %c0_161, %c89], %233 {strides = array<i32>} : memref<2x13x156xf32, #tpu.memory_space<vmem>>, vector<2x13x1xf32>,
    %235 = vector.extract_strided_slice %15 {offsets = [0, 5, 0, 8], sizes = [2, 1, 13, 1], strides = [1, 1, 1, 1]} : vector<2x8x13x13xf32> to vector<2x1x13x1xf32>
    %236 = vector.shape_cast %235 : vector<2x1x13x1xf32> to vector<2x13x1xf32>
    %c0_162 = arith.constant 0 : index
    %c0_163 = arith.constant 0 : index
    %c101 = arith.constant 101 : index
    %237 = vector.load %arg2[%c0_162, %c0_163, %c101] : memref<2x13x156xf32, #tpu.memory_space<vmem>>, vector<2x13x1xf32>
    tpu.vector_store %arg2[%c0_162, %c0_163, %c101], %236 {strides = array<i32>} : memref<2x13x156xf32, #tpu.memory_space<vmem>>, vector<2x13x1xf32>,
    %238 = vector.extract_strided_slice %15 {offsets = [0, 5, 0, 9], sizes = [2, 1, 13, 1], strides = [1, 1, 1, 1]} : vector<2x8x13x13xf32> to vector<2x1x13x1xf32>
    %239 = vector.shape_cast %238 : vector<2x1x13x1xf32> to vector<2x13x1xf32>
    %c0_164 = arith.constant 0 : index
    %c0_165 = arith.constant 0 : index
    %c113 = arith.constant 113 : index
    %240 = vector.load %arg2[%c0_164, %c0_165, %c113] : memref<2x13x156xf32, #tpu.memory_space<vmem>>, vector<2x13x1xf32>
    tpu.vector_store %arg2[%c0_164, %c0_165, %c113], %239 {strides = array<i32>} : memref<2x13x156xf32, #tpu.memory_space<vmem>>, vector<2x13x1xf32>,
    %241 = vector.extract_strided_slice %15 {offsets = [0, 5, 0, 10], sizes = [2, 1, 13, 1], strides = [1, 1, 1, 1]} : vector<2x8x13x13xf32> to vector<2x1x13x1xf32>
    %242 = vector.shape_cast %241 : vector<2x1x13x1xf32> to vector<2x13x1xf32>
    %c0_166 = arith.constant 0 : index
    %c0_167 = arith.constant 0 : index
    %c125 = arith.constant 125 : index
    %243 = vector.load %arg2[%c0_166, %c0_167, %c125] : memref<2x13x156xf32, #tpu.memory_space<vmem>>, vector<2x13x1xf32>
    tpu.vector_store %arg2[%c0_166, %c0_167, %c125], %242 {strides = array<i32>} : memref<2x13x156xf32, #tpu.memory_space<vmem>>, vector<2x13x1xf32>,
    %244 = vector.extract_strided_slice %15 {offsets = [0, 5, 0, 11], sizes = [2, 1, 13, 1], strides = [1, 1, 1, 1]} : vector<2x8x13x13xf32> to vector<2x1x13x1xf32>
    %245 = vector.shape_cast %244 : vector<2x1x13x1xf32> to vector<2x13x1xf32>
    %c0_168 = arith.constant 0 : index
    %c0_169 = arith.constant 0 : index
    %c137 = arith.constant 137 : index
    %246 = vector.load %arg2[%c0_168, %c0_169, %c137] : memref<2x13x156xf32, #tpu.memory_space<vmem>>, vector<2x13x1xf32>
    tpu.vector_store %arg2[%c0_168, %c0_169, %c137], %245 {strides = array<i32>} : memref<2x13x156xf32, #tpu.memory_space<vmem>>, vector<2x13x1xf32>,
    %247 = vector.extract_strided_slice %15 {offsets = [0, 5, 0, 12], sizes = [2, 1, 13, 1], strides = [1, 1, 1, 1]} : vector<2x8x13x13xf32> to vector<2x1x13x1xf32>
    %248 = vector.shape_cast %247 : vector<2x1x13x1xf32> to vector<2x13x1xf32>
    %c0_170 = arith.constant 0 : index
    %c0_171 = arith.constant 0 : index
    %c149 = arith.constant 149 : index
    %249 = vector.load %arg2[%c0_170, %c0_171, %c149] : memref<2x13x156xf32, #tpu.memory_space<vmem>>, vector<2x13x1xf32>
    tpu.vector_store %arg2[%c0_170, %c0_171, %c149], %248 {strides = array<i32>} : memref<2x13x156xf32, #tpu.memory_space<vmem>>, vector<2x13x1xf32>,
    %250 = vector.extract_strided_slice %15 {offsets = [0, 6, 0, 0], sizes = [2, 1, 13, 1], strides = [1, 1, 1, 1]} : vector<2x8x13x13xf32> to vector<2x1x13x1xf32>
    %251 = vector.shape_cast %250 : vector<2x1x13x1xf32> to vector<2x13x1xf32>
    %c0_172 = arith.constant 0 : index
    %c0_173 = arith.constant 0 : index
    %c6 = arith.constant 6 : index
    %252 = vector.load %arg2[%c0_172, %c0_173, %c6] : memref<2x13x156xf32, #tpu.memory_space<vmem>>, vector<2x13x1xf32>
    tpu.vector_store %arg2[%c0_172, %c0_173, %c6], %251 {strides = array<i32>} : memref<2x13x156xf32, #tpu.memory_space<vmem>>, vector<2x13x1xf32>,
    %253 = vector.extract_strided_slice %15 {offsets = [0, 6, 0, 1], sizes = [2, 1, 13, 1], strides = [1, 1, 1, 1]} : vector<2x8x13x13xf32> to vector<2x1x13x1xf32>
    %254 = vector.shape_cast %253 : vector<2x1x13x1xf32> to vector<2x13x1xf32>
    %c0_174 = arith.constant 0 : index
    %c0_175 = arith.constant 0 : index
    %c18 = arith.constant 18 : index
    %255 = vector.load %arg2[%c0_174, %c0_175, %c18] : memref<2x13x156xf32, #tpu.memory_space<vmem>>, vector<2x13x1xf32>
    tpu.vector_store %arg2[%c0_174, %c0_175, %c18], %254 {strides = array<i32>} : memref<2x13x156xf32, #tpu.memory_space<vmem>>, vector<2x13x1xf32>,
    %256 = vector.extract_strided_slice %15 {offsets = [0, 6, 0, 2], sizes = [2, 1, 13, 1], strides = [1, 1, 1, 1]} : vector<2x8x13x13xf32> to vector<2x1x13x1xf32>
    %257 = vector.shape_cast %256 : vector<2x1x13x1xf32> to vector<2x13x1xf32>
    %c0_176 = arith.constant 0 : index
    %c0_177 = arith.constant 0 : index
    %c30 = arith.constant 30 : index
    %258 = vector.load %arg2[%c0_176, %c0_177, %c30] : memref<2x13x156xf32, #tpu.memory_space<vmem>>, vector<2x13x1xf32>
    tpu.vector_store %arg2[%c0_176, %c0_177, %c30], %257 {strides = array<i32>} : memref<2x13x156xf32, #tpu.memory_space<vmem>>, vector<2x13x1xf32>,
    %259 = vector.extract_strided_slice %15 {offsets = [0, 6, 0, 3], sizes = [2, 1, 13, 1], strides = [1, 1, 1, 1]} : vector<2x8x13x13xf32> to vector<2x1x13x1xf32>
    %260 = vector.shape_cast %259 : vector<2x1x13x1xf32> to vector<2x13x1xf32>
    %c0_178 = arith.constant 0 : index
    %c0_179 = arith.constant 0 : index
    %c42 = arith.constant 42 : index
    %261 = vector.load %arg2[%c0_178, %c0_179, %c42] : memref<2x13x156xf32, #tpu.memory_space<vmem>>, vector<2x13x1xf32>
    tpu.vector_store %arg2[%c0_178, %c0_179, %c42], %260 {strides = array<i32>} : memref<2x13x156xf32, #tpu.memory_space<vmem>>, vector<2x13x1xf32>,
    %262 = vector.extract_strided_slice %15 {offsets = [0, 6, 0, 4], sizes = [2, 1, 13, 1], strides = [1, 1, 1, 1]} : vector<2x8x13x13xf32> to vector<2x1x13x1xf32>
    %263 = vector.shape_cast %262 : vector<2x1x13x1xf32> to vector<2x13x1xf32>
    %c0_180 = arith.constant 0 : index
    %c0_181 = arith.constant 0 : index
    %c54 = arith.constant 54 : index
    %264 = vector.load %arg2[%c0_180, %c0_181, %c54] : memref<2x13x156xf32, #tpu.memory_space<vmem>>, vector<2x13x1xf32>
    tpu.vector_store %arg2[%c0_180, %c0_181, %c54], %263 {strides = array<i32>} : memref<2x13x156xf32, #tpu.memory_space<vmem>>, vector<2x13x1xf32>,
    %265 = vector.extract_strided_slice %15 {offsets = [0, 6, 0, 5], sizes = [2, 1, 13, 1], strides = [1, 1, 1, 1]} : vector<2x8x13x13xf32> to vector<2x1x13x1xf32>
    %266 = vector.shape_cast %265 : vector<2x1x13x1xf32> to vector<2x13x1xf32>
    %c0_182 = arith.constant 0 : index
    %c0_183 = arith.constant 0 : index
    %c66 = arith.constant 66 : index
    %267 = vector.load %arg2[%c0_182, %c0_183, %c66] : memref<2x13x156xf32, #tpu.memory_space<vmem>>, vector<2x13x1xf32>
    tpu.vector_store %arg2[%c0_182, %c0_183, %c66], %266 {strides = array<i32>} : memref<2x13x156xf32, #tpu.memory_space<vmem>>, vector<2x13x1xf32>,
    %268 = vector.extract_strided_slice %15 {offsets = [0, 6, 0, 6], sizes = [2, 1, 13, 1], strides = [1, 1, 1, 1]} : vector<2x8x13x13xf32> to vector<2x1x13x1xf32>
    %269 = vector.shape_cast %268 : vector<2x1x13x1xf32> to vector<2x13x1xf32>
    %c0_184 = arith.constant 0 : index
    %c0_185 = arith.constant 0 : index
    %c78 = arith.constant 78 : index
    %270 = vector.load %arg2[%c0_184, %c0_185, %c78] : memref<2x13x156xf32, #tpu.memory_space<vmem>>, vector<2x13x1xf32>
    tpu.vector_store %arg2[%c0_184, %c0_185, %c78], %269 {strides = array<i32>} : memref<2x13x156xf32, #tpu.memory_space<vmem>>, vector<2x13x1xf32>,
    %271 = vector.extract_strided_slice %15 {offsets = [0, 6, 0, 7], sizes = [2, 1, 13, 1], strides = [1, 1, 1, 1]} : vector<2x8x13x13xf32> to vector<2x1x13x1xf32>
    %272 = vector.shape_cast %271 : vector<2x1x13x1xf32> to vector<2x13x1xf32>
    %c0_186 = arith.constant 0 : index
    %c0_187 = arith.constant 0 : index
    %c90 = arith.constant 90 : index
    %273 = vector.load %arg2[%c0_186, %c0_187, %c90] : memref<2x13x156xf32, #tpu.memory_space<vmem>>, vector<2x13x1xf32>
    tpu.vector_store %arg2[%c0_186, %c0_187, %c90], %272 {strides = array<i32>} : memref<2x13x156xf32, #tpu.memory_space<vmem>>, vector<2x13x1xf32>,
    %274 = vector.extract_strided_slice %15 {offsets = [0, 6, 0, 8], sizes = [2, 1, 13, 1], strides = [1, 1, 1, 1]} : vector<2x8x13x13xf32> to vector<2x1x13x1xf32>
    %275 = vector.shape_cast %274 : vector<2x1x13x1xf32> to vector<2x13x1xf32>
    %c0_188 = arith.constant 0 : index
    %c0_189 = arith.constant 0 : index
    %c102 = arith.constant 102 : index
    %276 = vector.load %arg2[%c0_188, %c0_189, %c102] : memref<2x13x156xf32, #tpu.memory_space<vmem>>, vector<2x13x1xf32>
    tpu.vector_store %arg2[%c0_188, %c0_189, %c102], %275 {strides = array<i32>} : memref<2x13x156xf32, #tpu.memory_space<vmem>>, vector<2x13x1xf32>,
    %277 = vector.extract_strided_slice %15 {offsets = [0, 6, 0, 9], sizes = [2, 1, 13, 1], strides = [1, 1, 1, 1]} : vector<2x8x13x13xf32> to vector<2x1x13x1xf32>
    %278 = vector.shape_cast %277 : vector<2x1x13x1xf32> to vector<2x13x1xf32>
    %c0_190 = arith.constant 0 : index
    %c0_191 = arith.constant 0 : index
    %c114 = arith.constant 114 : index
    %279 = vector.load %arg2[%c0_190, %c0_191, %c114] : memref<2x13x156xf32, #tpu.memory_space<vmem>>, vector<2x13x1xf32>
    tpu.vector_store %arg2[%c0_190, %c0_191, %c114], %278 {strides = array<i32>} : memref<2x13x156xf32, #tpu.memory_space<vmem>>, vector<2x13x1xf32>,
    %280 = vector.extract_strided_slice %15 {offsets = [0, 6, 0, 10], sizes = [2, 1, 13, 1], strides = [1, 1, 1, 1]} : vector<2x8x13x13xf32> to vector<2x1x13x1xf32>
    %281 = vector.shape_cast %280 : vector<2x1x13x1xf32> to vector<2x13x1xf32>
    %c0_192 = arith.constant 0 : index
    %c0_193 = arith.constant 0 : index
    %c126 = arith.constant 126 : index
    %282 = vector.load %arg2[%c0_192, %c0_193, %c126] : memref<2x13x156xf32, #tpu.memory_space<vmem>>, vector<2x13x1xf32>
    tpu.vector_store %arg2[%c0_192, %c0_193, %c126], %281 {strides = array<i32>} : memref<2x13x156xf32, #tpu.memory_space<vmem>>, vector<2x13x1xf32>,
    %283 = vector.extract_strided_slice %15 {offsets = [0, 6, 0, 11], sizes = [2, 1, 13, 1], strides = [1, 1, 1, 1]} : vector<2x8x13x13xf32> to vector<2x1x13x1xf32>
    %284 = vector.shape_cast %283 : vector<2x1x13x1xf32> to vector<2x13x1xf32>
    %c0_194 = arith.constant 0 : index
    %c0_195 = arith.constant 0 : index
    %c138 = arith.constant 138 : index
    %285 = vector.load %arg2[%c0_194, %c0_195, %c138] : memref<2x13x156xf32, #tpu.memory_space<vmem>>, vector<2x13x1xf32>
    tpu.vector_store %arg2[%c0_194, %c0_195, %c138], %284 {strides = array<i32>} : memref<2x13x156xf32, #tpu.memory_space<vmem>>, vector<2x13x1xf32>,
    %286 = vector.extract_strided_slice %15 {offsets = [0, 6, 0, 12], sizes = [2, 1, 13, 1], strides = [1, 1, 1, 1]} : vector<2x8x13x13xf32> to vector<2x1x13x1xf32>
    %287 = vector.shape_cast %286 : vector<2x1x13x1xf32> to vector<2x13x1xf32>
    %c0_196 = arith.constant 0 : index
    %c0_197 = arith.constant 0 : index
    %c150 = arith.constant 150 : index
    %288 = vector.load %arg2[%c0_196, %c0_197, %c150] : memref<2x13x156xf32, #tpu.memory_space<vmem>>, vector<2x13x1xf32>
    tpu.vector_store %arg2[%c0_196, %c0_197, %c150], %287 {strides = array<i32>} : memref<2x13x156xf32, #tpu.memory_space<vmem>>, vector<2x13x1xf32>,
    %289 = vector.extract_strided_slice %15 {offsets = [0, 7, 0, 0], sizes = [2, 1, 13, 1], strides = [1, 1, 1, 1]} : vector<2x8x13x13xf32> to vector<2x1x13x1xf32>
    %290 = vector.shape_cast %289 : vector<2x1x13x1xf32> to vector<2x13x1xf32>
    %c0_198 = arith.constant 0 : index
    %c0_199 = arith.constant 0 : index
    %c7 = arith.constant 7 : index
    %291 = vector.load %arg2[%c0_198, %c0_199, %c7] : memref<2x13x156xf32, #tpu.memory_space<vmem>>, vector<2x13x1xf32>
    tpu.vector_store %arg2[%c0_198, %c0_199, %c7], %290 {strides = array<i32>} : memref<2x13x156xf32, #tpu.memory_space<vmem>>, vector<2x13x1xf32>,
    %292 = vector.extract_strided_slice %15 {offsets = [0, 7, 0, 1], sizes = [2, 1, 13, 1], strides = [1, 1, 1, 1]} : vector<2x8x13x13xf32> to vector<2x1x13x1xf32>
    %293 = vector.shape_cast %292 : vector<2x1x13x1xf32> to vector<2x13x1xf32>
    %c0_200 = arith.constant 0 : index
    %c0_201 = arith.constant 0 : index
    %c19 = arith.constant 19 : index
    %294 = vector.load %arg2[%c0_200, %c0_201, %c19] : memref<2x13x156xf32, #tpu.memory_space<vmem>>, vector<2x13x1xf32>
    tpu.vector_store %arg2[%c0_200, %c0_201, %c19], %293 {strides = array<i32>} : memref<2x13x156xf32, #tpu.memory_space<vmem>>, vector<2x13x1xf32>,
    %295 = vector.extract_strided_slice %15 {offsets = [0, 7, 0, 2], sizes = [2, 1, 13, 1], strides = [1, 1, 1, 1]} : vector<2x8x13x13xf32> to vector<2x1x13x1xf32>
    %296 = vector.shape_cast %295 : vector<2x1x13x1xf32> to vector<2x13x1xf32>
    %c0_202 = arith.constant 0 : index
    %c0_203 = arith.constant 0 : index
    %c31 = arith.constant 31 : index
    %297 = vector.load %arg2[%c0_202, %c0_203, %c31] : memref<2x13x156xf32, #tpu.memory_space<vmem>>, vector<2x13x1xf32>
    tpu.vector_store %arg2[%c0_202, %c0_203, %c31], %296 {strides = array<i32>} : memref<2x13x156xf32, #tpu.memory_space<vmem>>, vector<2x13x1xf32>,
    %298 = vector.extract_strided_slice %15 {offsets = [0, 7, 0, 3], sizes = [2, 1, 13, 1], strides = [1, 1, 1, 1]} : vector<2x8x13x13xf32> to vector<2x1x13x1xf32>
    %299 = vector.shape_cast %298 : vector<2x1x13x1xf32> to vector<2x13x1xf32>
    %c0_204 = arith.constant 0 : index
    %c0_205 = arith.constant 0 : index
    %c43 = arith.constant 43 : index
    %300 = vector.load %arg2[%c0_204, %c0_205, %c43] : memref<2x13x156xf32, #tpu.memory_space<vmem>>, vector<2x13x1xf32>
    tpu.vector_store %arg2[%c0_204, %c0_205, %c43], %299 {strides = array<i32>} : memref<2x13x156xf32, #tpu.memory_space<vmem>>, vector<2x13x1xf32>,
    %301 = vector.extract_strided_slice %15 {offsets = [0, 7, 0, 4], sizes = [2, 1, 13, 1], strides = [1, 1, 1, 1]} : vector<2x8x13x13xf32> to vector<2x1x13x1xf32>
    %302 = vector.shape_cast %301 : vector<2x1x13x1xf32> to vector<2x13x1xf32>
    %c0_206 = arith.constant 0 : index
    %c0_207 = arith.constant 0 : index
    %c55 = arith.constant 55 : index
    %303 = vector.load %arg2[%c0_206, %c0_207, %c55] : memref<2x13x156xf32, #tpu.memory_space<vmem>>, vector<2x13x1xf32>
    tpu.vector_store %arg2[%c0_206, %c0_207, %c55], %302 {strides = array<i32>} : memref<2x13x156xf32, #tpu.memory_space<vmem>>, vector<2x13x1xf32>,
    %304 = vector.extract_strided_slice %15 {offsets = [0, 7, 0, 5], sizes = [2, 1, 13, 1], strides = [1, 1, 1, 1]} : vector<2x8x13x13xf32> to vector<2x1x13x1xf32>
    %305 = vector.shape_cast %304 : vector<2x1x13x1xf32> to vector<2x13x1xf32>
    %c0_208 = arith.constant 0 : index
    %c0_209 = arith.constant 0 : index
    %c67 = arith.constant 67 : index
    %306 = vector.load %arg2[%c0_208, %c0_209, %c67] : memref<2x13x156xf32, #tpu.memory_space<vmem>>, vector<2x13x1xf32>
    tpu.vector_store %arg2[%c0_208, %c0_209, %c67], %305 {strides = array<i32>} : memref<2x13x156xf32, #tpu.memory_space<vmem>>, vector<2x13x1xf32>,
    %307 = vector.extract_strided_slice %15 {offsets = [0, 7, 0, 6], sizes = [2, 1, 13, 1], strides = [1, 1, 1, 1]} : vector<2x8x13x13xf32> to vector<2x1x13x1xf32>
    %308 = vector.shape_cast %307 : vector<2x1x13x1xf32> to vector<2x13x1xf32>
    %c0_210 = arith.constant 0 : index
    %c0_211 = arith.constant 0 : index
    %c79 = arith.constant 79 : index
    %309 = vector.load %arg2[%c0_210, %c0_211, %c79] : memref<2x13x156xf32, #tpu.memory_space<vmem>>, vector<2x13x1xf32>
    tpu.vector_store %arg2[%c0_210, %c0_211, %c79], %308 {strides = array<i32>} : memref<2x13x156xf32, #tpu.memory_space<vmem>>, vector<2x13x1xf32>,
    %310 = vector.extract_strided_slice %15 {offsets = [0, 7, 0, 7], sizes = [2, 1, 13, 1], strides = [1, 1, 1, 1]} : vector<2x8x13x13xf32> to vector<2x1x13x1xf32>
    %311 = vector.shape_cast %310 : vector<2x1x13x1xf32> to vector<2x13x1xf32>
    %c0_212 = arith.constant 0 : index
    %c0_213 = arith.constant 0 : index
    %c91 = arith.constant 91 : index
    %312 = vector.load %arg2[%c0_212, %c0_213, %c91] : memref<2x13x156xf32, #tpu.memory_space<vmem>>, vector<2x13x1xf32>
    tpu.vector_store %arg2[%c0_212, %c0_213, %c91], %311 {strides = array<i32>} : memref<2x13x156xf32, #tpu.memory_space<vmem>>, vector<2x13x1xf32>,
    %313 = vector.extract_strided_slice %15 {offsets = [0, 7, 0, 8], sizes = [2, 1, 13, 1], strides = [1, 1, 1, 1]} : vector<2x8x13x13xf32> to vector<2x1x13x1xf32>
    %314 = vector.shape_cast %313 : vector<2x1x13x1xf32> to vector<2x13x1xf32>
    %c0_214 = arith.constant 0 : index
    %c0_215 = arith.constant 0 : index
    %c103 = arith.constant 103 : index
    %315 = vector.load %arg2[%c0_214, %c0_215, %c103] : memref<2x13x156xf32, #tpu.memory_space<vmem>>, vector<2x13x1xf32>
    tpu.vector_store %arg2[%c0_214, %c0_215, %c103], %314 {strides = array<i32>} : memref<2x13x156xf32, #tpu.memory_space<vmem>>, vector<2x13x1xf32>,
    %316 = vector.extract_strided_slice %15 {offsets = [0, 7, 0, 9], sizes = [2, 1, 13, 1], strides = [1, 1, 1, 1]} : vector<2x8x13x13xf32> to vector<2x1x13x1xf32>
    %317 = vector.shape_cast %316 : vector<2x1x13x1xf32> to vector<2x13x1xf32>
    %c0_216 = arith.constant 0 : index
    %c0_217 = arith.constant 0 : index
    %c115 = arith.constant 115 : index
    %318 = vector.load %arg2[%c0_216, %c0_217, %c115] : memref<2x13x156xf32, #tpu.memory_space<vmem>>, vector<2x13x1xf32>
    tpu.vector_store %arg2[%c0_216, %c0_217, %c115], %317 {strides = array<i32>} : memref<2x13x156xf32, #tpu.memory_space<vmem>>, vector<2x13x1xf32>,
    %319 = vector.extract_strided_slice %15 {offsets = [0, 7, 0, 10], sizes = [2, 1, 13, 1], strides = [1, 1, 1, 1]} : vector<2x8x13x13xf32> to vector<2x1x13x1xf32>
    %320 = vector.shape_cast %319 : vector<2x1x13x1xf32> to vector<2x13x1xf32>
    %c0_218 = arith.constant 0 : index
    %c0_219 = arith.constant 0 : index
    %c127 = arith.constant 127 : index
    %321 = vector.load %arg2[%c0_218, %c0_219, %c127] : memref<2x13x156xf32, #tpu.memory_space<vmem>>, vector<2x13x1xf32>
    tpu.vector_store %arg2[%c0_218, %c0_219, %c127], %320 {strides = array<i32>} : memref<2x13x156xf32, #tpu.memory_space<vmem>>, vector<2x13x1xf32>,
    %322 = vector.extract_strided_slice %15 {offsets = [0, 7, 0, 11], sizes = [2, 1, 13, 1], strides = [1, 1, 1, 1]} : vector<2x8x13x13xf32> to vector<2x1x13x1xf32>
    %323 = vector.shape_cast %322 : vector<2x1x13x1xf32> to vector<2x13x1xf32>
    %c0_220 = arith.constant 0 : index
    %c0_221 = arith.constant 0 : index
    %c139 = arith.constant 139 : index
    %324 = vector.load %arg2[%c0_220, %c0_221, %c139] : memref<2x13x156xf32, #tpu.memory_space<vmem>>, vector<2x13x1xf32>
    tpu.vector_store %arg2[%c0_220, %c0_221, %c139], %323 {strides = array<i32>} : memref<2x13x156xf32, #tpu.memory_space<vmem>>, vector<2x13x1xf32>,
    %325 = vector.extract_strided_slice %15 {offsets = [0, 7, 0, 12], sizes = [2, 1, 13, 1], strides = [1, 1, 1, 1]} : vector<2x8x13x13xf32> to vector<2x1x13x1xf32>
    %326 = vector.shape_cast %325 : vector<2x1x13x1xf32> to vector<2x13x1xf32>
    %c0_222 = arith.constant 0 : index
    %c0_223 = arith.constant 0 : index
    %c151 = arith.constant 151 : index
    %327 = vector.load %arg2[%c0_222, %c0_223, %c151] : memref<2x13x156xf32, #tpu.memory_space<vmem>>, vector<2x13x1xf32>
    tpu.vector_store %arg2[%c0_222, %c0_223, %c151], %326 {strides = array<i32>} : memref<2x13x156xf32, #tpu.memory_space<vmem>>, vector<2x13x1xf32>,
    %c0_224 = arith.constant 0 : index
    %c0_225 = arith.constant 0 : index
    %c0_226 = arith.constant 0 : index
    %c0_227 = arith.constant 0 : index
    %328 = vector.load %arg1[%c0_224, %c0_225, %c0_226, %c0_227] : memref<2x4x20x16xf32, #tpu.memory_space<vmem>>, vector<2x4x13x16xf32>
    %c0_228 = arith.constant 0 : index
    %c0_229 = arith.constant 0 : index
    %c1_230 = arith.constant 1 : index
    %c0_231 = arith.constant 0 : index
    %329 = vector.load %arg1[%c0_228, %c0_229, %c1_230, %c0_231] : memref<2x4x20x16xf32, #tpu.memory_space<vmem>>, vector<2x4x13x16xf32>
    %c0_232 = arith.constant 0 : index
    %c0_233 = arith.constant 0 : index
    %c2_234 = arith.constant 2 : index
    %c0_235 = arith.constant 0 : index
    %330 = vector.load %arg1[%c0_232, %c0_233, %c2_234, %c0_235] : memref<2x4x20x16xf32, #tpu.memory_space<vmem>>, vector<2x4x13x16xf32>
    %c0_236 = arith.constant 0 : index
    %c0_237 = arith.constant 0 : index
    %c3_238 = arith.constant 3 : index
    %c0_239 = arith.constant 0 : index
    %331 = vector.load %arg1[%c0_236, %c0_237, %c3_238, %c0_239] : memref<2x4x20x16xf32, #tpu.memory_space<vmem>>, vector<2x4x13x16xf32>
    %c0_240 = arith.constant 0 : index
    %c0_241 = arith.constant 0 : index
    %c4_242 = arith.constant 4 : index
    %c0_243 = arith.constant 0 : index
    %332 = vector.load %arg1[%c0_240, %c0_241, %c4_242, %c0_243] : memref<2x4x20x16xf32, #tpu.memory_space<vmem>>, vector<2x4x13x16xf32>
    %c0_244 = arith.constant 0 : index
    %c0_245 = arith.constant 0 : index
    %c5_246 = arith.constant 5 : index
    %c0_247 = arith.constant 0 : index
    %333 = vector.load %arg1[%c0_244, %c0_245, %c5_246, %c0_247] : memref<2x4x20x16xf32, #tpu.memory_space<vmem>>, vector<2x4x13x16xf32>
    %c0_248 = arith.constant 0 : index
    %c0_249 = arith.constant 0 : index
    %c6_250 = arith.constant 6 : index
    %c0_251 = arith.constant 0 : index
    %334 = vector.load %arg1[%c0_248, %c0_249, %c6_250, %c0_251] : memref<2x4x20x16xf32, #tpu.memory_space<vmem>>, vector<2x4x13x16xf32>
    %c0_252 = arith.constant 0 : index
    %c0_253 = arith.constant 0 : index
    %c7_254 = arith.constant 7 : index
    %c0_255 = arith.constant 0 : index
    %335 = vector.load %arg1[%c0_252, %c0_253, %c7_254, %c0_255] : memref<2x4x20x16xf32, #tpu.memory_space<vmem>>, vector<2x4x13x16xf32>
    %336 = arith.addf %328, %329 : vector<2x4x13x16xf32>
    %337 = arith.addf %330, %331 : vector<2x4x13x16xf32>
    %338 = arith.addf %332, %333 : vector<2x4x13x16xf32>
    %339 = arith.addf %334, %335 : vector<2x4x13x16xf32>
    %340 = arith.addf %336, %337 : vector<2x4x13x16xf32>
    %341 = arith.addf %338, %339 : vector<2x4x13x16xf32>
    %342 = arith.addf %340, %341 : vector<2x4x13x16xf32>
    %343 = vector.extract_strided_slice %342 {offsets = [0, 0, 0, 0], sizes = [2, 4, 13, 13], strides = [1, 1, 1, 1]} : vector<2x4x13x16xf32> to vector<2x4x13x13xf32>
    %344 = vector.extract_strided_slice %342 {offsets = [0, 0, 0, 1], sizes = [2, 4, 13, 13], strides = [1, 1, 1, 1]} : vector<2x4x13x16xf32> to vector<2x4x13x13xf32>
    %345 = vector.extract_strided_slice %342 {offsets = [0, 0, 0, 2], sizes = [2, 4, 13, 13], strides = [1, 1, 1, 1]} : vector<2x4x13x16xf32> to vector<2x4x13x13xf32>
    %346 = vector.extract_strided_slice %342 {offsets = [0, 0, 0, 3], sizes = [2, 4, 13, 13], strides = [1, 1, 1, 1]} : vector<2x4x13x16xf32> to vector<2x4x13x13xf32>
    %347 = arith.addf %343, %344 : vector<2x4x13x13xf32>
    %348 = arith.addf %345, %346 : vector<2x4x13x13xf32>
    %349 = arith.addf %347, %348 : vector<2x4x13x13xf32>
    %cst_256 = arith.constant 3.125000e-02 : f32
    %350 = vector.broadcast %cst_256 : f32 to vector<2x4x13x13xf32>
    %351 = arith.mulf %349, %350 : vector<2x4x13x13xf32>
    %352 = vector.extract_strided_slice %351 {offsets = [0, 0, 0, 0], sizes = [2, 1, 13, 1], strides = [1, 1, 1, 1]} : vector<2x4x13x13xf32> to vector<2x1x13x1xf32>
    %353 = vector.shape_cast %352 : vector<2x1x13x1xf32> to vector<2x13x1xf32>
    %c0_257 = arith.constant 0 : index
    %c0_258 = arith.constant 0 : index
    %c8 = arith.constant 8 : index
    %354 = vector.load %arg2[%c0_257, %c0_258, %c8] : memref<2x13x156xf32, #tpu.memory_space<vmem>>, vector<2x13x1xf32>
    tpu.vector_store %arg2[%c0_257, %c0_258, %c8], %353 {strides = array<i32>} : memref<2x13x156xf32, #tpu.memory_space<vmem>>, vector<2x13x1xf32>,
    %355 = vector.extract_strided_slice %351 {offsets = [0, 0, 0, 1], sizes = [2, 1, 13, 1], strides = [1, 1, 1, 1]} : vector<2x4x13x13xf32> to vector<2x1x13x1xf32>
    %356 = vector.shape_cast %355 : vector<2x1x13x1xf32> to vector<2x13x1xf32>
    %c0_259 = arith.constant 0 : index
    %c0_260 = arith.constant 0 : index
    %c20 = arith.constant 20 : index
    %357 = vector.load %arg2[%c0_259, %c0_260, %c20] : memref<2x13x156xf32, #tpu.memory_space<vmem>>, vector<2x13x1xf32>
    tpu.vector_store %arg2[%c0_259, %c0_260, %c20], %356 {strides = array<i32>} : memref<2x13x156xf32, #tpu.memory_space<vmem>>, vector<2x13x1xf32>,
    %358 = vector.extract_strided_slice %351 {offsets = [0, 0, 0, 2], sizes = [2, 1, 13, 1], strides = [1, 1, 1, 1]} : vector<2x4x13x13xf32> to vector<2x1x13x1xf32>
    %359 = vector.shape_cast %358 : vector<2x1x13x1xf32> to vector<2x13x1xf32>
    %c0_261 = arith.constant 0 : index
    %c0_262 = arith.constant 0 : index
    %c32 = arith.constant 32 : index
    %360 = vector.load %arg2[%c0_261, %c0_262, %c32] : memref<2x13x156xf32, #tpu.memory_space<vmem>>, vector<2x13x1xf32>
    tpu.vector_store %arg2[%c0_261, %c0_262, %c32], %359 {strides = array<i32>} : memref<2x13x156xf32, #tpu.memory_space<vmem>>, vector<2x13x1xf32>,
    %361 = vector.extract_strided_slice %351 {offsets = [0, 0, 0, 3], sizes = [2, 1, 13, 1], strides = [1, 1, 1, 1]} : vector<2x4x13x13xf32> to vector<2x1x13x1xf32>
    %362 = vector.shape_cast %361 : vector<2x1x13x1xf32> to vector<2x13x1xf32>
    %c0_263 = arith.constant 0 : index
    %c0_264 = arith.constant 0 : index
    %c44 = arith.constant 44 : index
    %363 = vector.load %arg2[%c0_263, %c0_264, %c44] : memref<2x13x156xf32, #tpu.memory_space<vmem>>, vector<2x13x1xf32>
    tpu.vector_store %arg2[%c0_263, %c0_264, %c44], %362 {strides = array<i32>} : memref<2x13x156xf32, #tpu.memory_space<vmem>>, vector<2x13x1xf32>,
    %364 = vector.extract_strided_slice %351 {offsets = [0, 0, 0, 4], sizes = [2, 1, 13, 1], strides = [1, 1, 1, 1]} : vector<2x4x13x13xf32> to vector<2x1x13x1xf32>
    %365 = vector.shape_cast %364 : vector<2x1x13x1xf32> to vector<2x13x1xf32>
    %c0_265 = arith.constant 0 : index
    %c0_266 = arith.constant 0 : index
    %c56 = arith.constant 56 : index
    %366 = vector.load %arg2[%c0_265, %c0_266, %c56] : memref<2x13x156xf32, #tpu.memory_space<vmem>>, vector<2x13x1xf32>
    tpu.vector_store %arg2[%c0_265, %c0_266, %c56], %365 {strides = array<i32>} : memref<2x13x156xf32, #tpu.memory_space<vmem>>, vector<2x13x1xf32>,
    %367 = vector.extract_strided_slice %351 {offsets = [0, 0, 0, 5], sizes = [2, 1, 13, 1], strides = [1, 1, 1, 1]} : vector<2x4x13x13xf32> to vector<2x1x13x1xf32>
    %368 = vector.shape_cast %367 : vector<2x1x13x1xf32> to vector<2x13x1xf32>
    %c0_267 = arith.constant 0 : index
    %c0_268 = arith.constant 0 : index
    %c68 = arith.constant 68 : index
    %369 = vector.load %arg2[%c0_267, %c0_268, %c68] : memref<2x13x156xf32, #tpu.memory_space<vmem>>, vector<2x13x1xf32>
    tpu.vector_store %arg2[%c0_267, %c0_268, %c68], %368 {strides = array<i32>} : memref<2x13x156xf32, #tpu.memory_space<vmem>>, vector<2x13x1xf32>,
    %370 = vector.extract_strided_slice %351 {offsets = [0, 0, 0, 6], sizes = [2, 1, 13, 1], strides = [1, 1, 1, 1]} : vector<2x4x13x13xf32> to vector<2x1x13x1xf32>
    %371 = vector.shape_cast %370 : vector<2x1x13x1xf32> to vector<2x13x1xf32>
    %c0_269 = arith.constant 0 : index
    %c0_270 = arith.constant 0 : index
    %c80 = arith.constant 80 : index
    %372 = vector.load %arg2[%c0_269, %c0_270, %c80] : memref<2x13x156xf32, #tpu.memory_space<vmem>>, vector<2x13x1xf32>
    tpu.vector_store %arg2[%c0_269, %c0_270, %c80], %371 {strides = array<i32>} : memref<2x13x156xf32, #tpu.memory_space<vmem>>, vector<2x13x1xf32>,
    %373 = vector.extract_strided_slice %351 {offsets = [0, 0, 0, 7], sizes = [2, 1, 13, 1], strides = [1, 1, 1, 1]} : vector<2x4x13x13xf32> to vector<2x1x13x1xf32>
    %374 = vector.shape_cast %373 : vector<2x1x13x1xf32> to vector<2x13x1xf32>
    %c0_271 = arith.constant 0 : index
    %c0_272 = arith.constant 0 : index
    %c92 = arith.constant 92 : index
    %375 = vector.load %arg2[%c0_271, %c0_272, %c92] : memref<2x13x156xf32, #tpu.memory_space<vmem>>, vector<2x13x1xf32>
    tpu.vector_store %arg2[%c0_271, %c0_272, %c92], %374 {strides = array<i32>} : memref<2x13x156xf32, #tpu.memory_space<vmem>>, vector<2x13x1xf32>,
    %376 = vector.extract_strided_slice %351 {offsets = [0, 0, 0, 8], sizes = [2, 1, 13, 1], strides = [1, 1, 1, 1]} : vector<2x4x13x13xf32> to vector<2x1x13x1xf32>
    %377 = vector.shape_cast %376 : vector<2x1x13x1xf32> to vector<2x13x1xf32>
    %c0_273 = arith.constant 0 : index
    %c0_274 = arith.constant 0 : index
    %c104 = arith.constant 104 : index
    %378 = vector.load %arg2[%c0_273, %c0_274, %c104] : memref<2x13x156xf32, #tpu.memory_space<vmem>>, vector<2x13x1xf32>
    tpu.vector_store %arg2[%c0_273, %c0_274, %c104], %377 {strides = array<i32>} : memref<2x13x156xf32, #tpu.memory_space<vmem>>, vector<2x13x1xf32>,
    %379 = vector.extract_strided_slice %351 {offsets = [0, 0, 0, 9], sizes = [2, 1, 13, 1], strides = [1, 1, 1, 1]} : vector<2x4x13x13xf32> to vector<2x1x13x1xf32>
    %380 = vector.shape_cast %379 : vector<2x1x13x1xf32> to vector<2x13x1xf32>
    %c0_275 = arith.constant 0 : index
    %c0_276 = arith.constant 0 : index
    %c116 = arith.constant 116 : index
    %381 = vector.load %arg2[%c0_275, %c0_276, %c116] : memref<2x13x156xf32, #tpu.memory_space<vmem>>, vector<2x13x1xf32>
    tpu.vector_store %arg2[%c0_275, %c0_276, %c116], %380 {strides = array<i32>} : memref<2x13x156xf32, #tpu.memory_space<vmem>>, vector<2x13x1xf32>,
    %382 = vector.extract_strided_slice %351 {offsets = [0, 0, 0, 10], sizes = [2, 1, 13, 1], strides = [1, 1, 1, 1]} : vector<2x4x13x13xf32> to vector<2x1x13x1xf32>
    %383 = vector.shape_cast %382 : vector<2x1x13x1xf32> to vector<2x13x1xf32>
    %c0_277 = arith.constant 0 : index
    %c0_278 = arith.constant 0 : index
    %c128 = arith.constant 128 : index
    %384 = vector.load %arg2[%c0_277, %c0_278, %c128] : memref<2x13x156xf32, #tpu.memory_space<vmem>>, vector<2x13x1xf32>
    tpu.vector_store %arg2[%c0_277, %c0_278, %c128], %383 {strides = array<i32>} : memref<2x13x156xf32, #tpu.memory_space<vmem>>, vector<2x13x1xf32>,
    %385 = vector.extract_strided_slice %351 {offsets = [0, 0, 0, 11], sizes = [2, 1, 13, 1], strides = [1, 1, 1, 1]} : vector<2x4x13x13xf32> to vector<2x1x13x1xf32>
    %386 = vector.shape_cast %385 : vector<2x1x13x1xf32> to vector<2x13x1xf32>
    %c0_279 = arith.constant 0 : index
    %c0_280 = arith.constant 0 : index
    %c140 = arith.constant 140 : index
    %387 = vector.load %arg2[%c0_279, %c0_280, %c140] : memref<2x13x156xf32, #tpu.memory_space<vmem>>, vector<2x13x1xf32>
    tpu.vector_store %arg2[%c0_279, %c0_280, %c140], %386 {strides = array<i32>} : memref<2x13x156xf32, #tpu.memory_space<vmem>>, vector<2x13x1xf32>,
    %388 = vector.extract_strided_slice %351 {offsets = [0, 0, 0, 12], sizes = [2, 1, 13, 1], strides = [1, 1, 1, 1]} : vector<2x4x13x13xf32> to vector<2x1x13x1xf32>
    %389 = vector.shape_cast %388 : vector<2x1x13x1xf32> to vector<2x13x1xf32>
    %c0_281 = arith.constant 0 : index
    %c0_282 = arith.constant 0 : index
    %c152 = arith.constant 152 : index
    %390 = vector.load %arg2[%c0_281, %c0_282, %c152] : memref<2x13x156xf32, #tpu.memory_space<vmem>>, vector<2x13x1xf32>
    tpu.vector_store %arg2[%c0_281, %c0_282, %c152], %389 {strides = array<i32>} : memref<2x13x156xf32, #tpu.memory_space<vmem>>, vector<2x13x1xf32>,
    %391 = vector.extract_strided_slice %351 {offsets = [0, 1, 0, 0], sizes = [2, 1, 13, 1], strides = [1, 1, 1, 1]} : vector<2x4x13x13xf32> to vector<2x1x13x1xf32>
    %392 = vector.shape_cast %391 : vector<2x1x13x1xf32> to vector<2x13x1xf32>
    %c0_283 = arith.constant 0 : index
    %c0_284 = arith.constant 0 : index
    %c9 = arith.constant 9 : index
    %393 = vector.load %arg2[%c0_283, %c0_284, %c9] : memref<2x13x156xf32, #tpu.memory_space<vmem>>, vector<2x13x1xf32>
    tpu.vector_store %arg2[%c0_283, %c0_284, %c9], %392 {strides = array<i32>} : memref<2x13x156xf32, #tpu.memory_space<vmem>>, vector<2x13x1xf32>,
    %394 = vector.extract_strided_slice %351 {offsets = [0, 1, 0, 1], sizes = [2, 1, 13, 1], strides = [1, 1, 1, 1]} : vector<2x4x13x13xf32> to vector<2x1x13x1xf32>
    %395 = vector.shape_cast %394 : vector<2x1x13x1xf32> to vector<2x13x1xf32>
    %c0_285 = arith.constant 0 : index
    %c0_286 = arith.constant 0 : index
    %c21 = arith.constant 21 : index
    %396 = vector.load %arg2[%c0_285, %c0_286, %c21] : memref<2x13x156xf32, #tpu.memory_space<vmem>>, vector<2x13x1xf32>
    tpu.vector_store %arg2[%c0_285, %c0_286, %c21], %395 {strides = array<i32>} : memref<2x13x156xf32, #tpu.memory_space<vmem>>, vector<2x13x1xf32>,
    %397 = vector.extract_strided_slice %351 {offsets = [0, 1, 0, 2], sizes = [2, 1, 13, 1], strides = [1, 1, 1, 1]} : vector<2x4x13x13xf32> to vector<2x1x13x1xf32>
    %398 = vector.shape_cast %397 : vector<2x1x13x1xf32> to vector<2x13x1xf32>
    %c0_287 = arith.constant 0 : index
    %c0_288 = arith.constant 0 : index
    %c33 = arith.constant 33 : index
    %399 = vector.load %arg2[%c0_287, %c0_288, %c33] : memref<2x13x156xf32, #tpu.memory_space<vmem>>, vector<2x13x1xf32>
    tpu.vector_store %arg2[%c0_287, %c0_288, %c33], %398 {strides = array<i32>} : memref<2x13x156xf32, #tpu.memory_space<vmem>>, vector<2x13x1xf32>,
    %400 = vector.extract_strided_slice %351 {offsets = [0, 1, 0, 3], sizes = [2, 1, 13, 1], strides = [1, 1, 1, 1]} : vector<2x4x13x13xf32> to vector<2x1x13x1xf32>
    %401 = vector.shape_cast %400 : vector<2x1x13x1xf32> to vector<2x13x1xf32>
    %c0_289 = arith.constant 0 : index
    %c0_290 = arith.constant 0 : index
    %c45 = arith.constant 45 : index
    %402 = vector.load %arg2[%c0_289, %c0_290, %c45] : memref<2x13x156xf32, #tpu.memory_space<vmem>>, vector<2x13x1xf32>
    tpu.vector_store %arg2[%c0_289, %c0_290, %c45], %401 {strides = array<i32>} : memref<2x13x156xf32, #tpu.memory_space<vmem>>, vector<2x13x1xf32>,
    %403 = vector.extract_strided_slice %351 {offsets = [0, 1, 0, 4], sizes = [2, 1, 13, 1], strides = [1, 1, 1, 1]} : vector<2x4x13x13xf32> to vector<2x1x13x1xf32>
    %404 = vector.shape_cast %403 : vector<2x1x13x1xf32> to vector<2x13x1xf32>
    %c0_291 = arith.constant 0 : index
    %c0_292 = arith.constant 0 : index
    %c57 = arith.constant 57 : index
    %405 = vector.load %arg2[%c0_291, %c0_292, %c57] : memref<2x13x156xf32, #tpu.memory_space<vmem>>, vector<2x13x1xf32>
    tpu.vector_store %arg2[%c0_291, %c0_292, %c57], %404 {strides = array<i32>} : memref<2x13x156xf32, #tpu.memory_space<vmem>>, vector<2x13x1xf32>,
    %406 = vector.extract_strided_slice %351 {offsets = [0, 1, 0, 5], sizes = [2, 1, 13, 1], strides = [1, 1, 1, 1]} : vector<2x4x13x13xf32> to vector<2x1x13x1xf32>
    %407 = vector.shape_cast %406 : vector<2x1x13x1xf32> to vector<2x13x1xf32>
    %c0_293 = arith.constant 0 : index
    %c0_294 = arith.constant 0 : index
    %c69 = arith.constant 69 : index
    %408 = vector.load %arg2[%c0_293, %c0_294, %c69] : memref<2x13x156xf32, #tpu.memory_space<vmem>>, vector<2x13x1xf32>
    tpu.vector_store %arg2[%c0_293, %c0_294, %c69], %407 {strides = array<i32>} : memref<2x13x156xf32, #tpu.memory_space<vmem>>, vector<2x13x1xf32>,
    %409 = vector.extract_strided_slice %351 {offsets = [0, 1, 0, 6], sizes = [2, 1, 13, 1], strides = [1, 1, 1, 1]} : vector<2x4x13x13xf32> to vector<2x1x13x1xf32>
    %410 = vector.shape_cast %409 : vector<2x1x13x1xf32> to vector<2x13x1xf32>
    %c0_295 = arith.constant 0 : index
    %c0_296 = arith.constant 0 : index
    %c81 = arith.constant 81 : index
    %411 = vector.load %arg2[%c0_295, %c0_296, %c81] : memref<2x13x156xf32, #tpu.memory_space<vmem>>, vector<2x13x1xf32>
    tpu.vector_store %arg2[%c0_295, %c0_296, %c81], %410 {strides = array<i32>} : memref<2x13x156xf32, #tpu.memory_space<vmem>>, vector<2x13x1xf32>,
    %412 = vector.extract_strided_slice %351 {offsets = [0, 1, 0, 7], sizes = [2, 1, 13, 1], strides = [1, 1, 1, 1]} : vector<2x4x13x13xf32> to vector<2x1x13x1xf32>
    %413 = vector.shape_cast %412 : vector<2x1x13x1xf32> to vector<2x13x1xf32>
    %c0_297 = arith.constant 0 : index
    %c0_298 = arith.constant 0 : index
    %c93 = arith.constant 93 : index
    %414 = vector.load %arg2[%c0_297, %c0_298, %c93] : memref<2x13x156xf32, #tpu.memory_space<vmem>>, vector<2x13x1xf32>
    tpu.vector_store %arg2[%c0_297, %c0_298, %c93], %413 {strides = array<i32>} : memref<2x13x156xf32, #tpu.memory_space<vmem>>, vector<2x13x1xf32>,
    %415 = vector.extract_strided_slice %351 {offsets = [0, 1, 0, 8], sizes = [2, 1, 13, 1], strides = [1, 1, 1, 1]} : vector<2x4x13x13xf32> to vector<2x1x13x1xf32>
    %416 = vector.shape_cast %415 : vector<2x1x13x1xf32> to vector<2x13x1xf32>
    %c0_299 = arith.constant 0 : index
    %c0_300 = arith.constant 0 : index
    %c105 = arith.constant 105 : index
    %417 = vector.load %arg2[%c0_299, %c0_300, %c105] : memref<2x13x156xf32, #tpu.memory_space<vmem>>, vector<2x13x1xf32>
    tpu.vector_store %arg2[%c0_299, %c0_300, %c105], %416 {strides = array<i32>} : memref<2x13x156xf32, #tpu.memory_space<vmem>>, vector<2x13x1xf32>,
    %418 = vector.extract_strided_slice %351 {offsets = [0, 1, 0, 9], sizes = [2, 1, 13, 1], strides = [1, 1, 1, 1]} : vector<2x4x13x13xf32> to vector<2x1x13x1xf32>
    %419 = vector.shape_cast %418 : vector<2x1x13x1xf32> to vector<2x13x1xf32>
    %c0_301 = arith.constant 0 : index
    %c0_302 = arith.constant 0 : index
    %c117 = arith.constant 117 : index
    %420 = vector.load %arg2[%c0_301, %c0_302, %c117] : memref<2x13x156xf32, #tpu.memory_space<vmem>>, vector<2x13x1xf32>
    tpu.vector_store %arg2[%c0_301, %c0_302, %c117], %419 {strides = array<i32>} : memref<2x13x156xf32, #tpu.memory_space<vmem>>, vector<2x13x1xf32>,
    %421 = vector.extract_strided_slice %351 {offsets = [0, 1, 0, 10], sizes = [2, 1, 13, 1], strides = [1, 1, 1, 1]} : vector<2x4x13x13xf32> to vector<2x1x13x1xf32>
    %422 = vector.shape_cast %421 : vector<2x1x13x1xf32> to vector<2x13x1xf32>
    %c0_303 = arith.constant 0 : index
    %c0_304 = arith.constant 0 : index
    %c129 = arith.constant 129 : index
    %423 = vector.load %arg2[%c0_303, %c0_304, %c129] : memref<2x13x156xf32, #tpu.memory_space<vmem>>, vector<2x13x1xf32>
    tpu.vector_store %arg2[%c0_303, %c0_304, %c129], %422 {strides = array<i32>} : memref<2x13x156xf32, #tpu.memory_space<vmem>>, vector<2x13x1xf32>,
    %424 = vector.extract_strided_slice %351 {offsets = [0, 1, 0, 11], sizes = [2, 1, 13, 1], strides = [1, 1, 1, 1]} : vector<2x4x13x13xf32> to vector<2x1x13x1xf32>
    %425 = vector.shape_cast %424 : vector<2x1x13x1xf32> to vector<2x13x1xf32>
    %c0_305 = arith.constant 0 : index
    %c0_306 = arith.constant 0 : index
    %c141 = arith.constant 141 : index
    %426 = vector.load %arg2[%c0_305, %c0_306, %c141] : memref<2x13x156xf32, #tpu.memory_space<vmem>>, vector<2x13x1xf32>
    tpu.vector_store %arg2[%c0_305, %c0_306, %c141], %425 {strides = array<i32>} : memref<2x13x156xf32, #tpu.memory_space<vmem>>, vector<2x13x1xf32>,
    %427 = vector.extract_strided_slice %351 {offsets = [0, 1, 0, 12], sizes = [2, 1, 13, 1], strides = [1, 1, 1, 1]} : vector<2x4x13x13xf32> to vector<2x1x13x1xf32>
    %428 = vector.shape_cast %427 : vector<2x1x13x1xf32> to vector<2x13x1xf32>
    %c0_307 = arith.constant 0 : index
    %c0_308 = arith.constant 0 : index
    %c153 = arith.constant 153 : index
    %429 = vector.load %arg2[%c0_307, %c0_308, %c153] : memref<2x13x156xf32, #tpu.memory_space<vmem>>, vector<2x13x1xf32>
    tpu.vector_store %arg2[%c0_307, %c0_308, %c153], %428 {strides = array<i32>} : memref<2x13x156xf32, #tpu.memory_space<vmem>>, vector<2x13x1xf32>,
    %430 = vector.extract_strided_slice %351 {offsets = [0, 2, 0, 0], sizes = [2, 1, 13, 1], strides = [1, 1, 1, 1]} : vector<2x4x13x13xf32> to vector<2x1x13x1xf32>
    %431 = vector.shape_cast %430 : vector<2x1x13x1xf32> to vector<2x13x1xf32>
    %c0_309 = arith.constant 0 : index
    %c0_310 = arith.constant 0 : index
    %c10 = arith.constant 10 : index
    %432 = vector.load %arg2[%c0_309, %c0_310, %c10] : memref<2x13x156xf32, #tpu.memory_space<vmem>>, vector<2x13x1xf32>
    tpu.vector_store %arg2[%c0_309, %c0_310, %c10], %431 {strides = array<i32>} : memref<2x13x156xf32, #tpu.memory_space<vmem>>, vector<2x13x1xf32>,
    %433 = vector.extract_strided_slice %351 {offsets = [0, 2, 0, 1], sizes = [2, 1, 13, 1], strides = [1, 1, 1, 1]} : vector<2x4x13x13xf32> to vector<2x1x13x1xf32>
    %434 = vector.shape_cast %433 : vector<2x1x13x1xf32> to vector<2x13x1xf32>
    %c0_311 = arith.constant 0 : index
    %c0_312 = arith.constant 0 : index
    %c22 = arith.constant 22 : index
    %435 = vector.load %arg2[%c0_311, %c0_312, %c22] : memref<2x13x156xf32, #tpu.memory_space<vmem>>, vector<2x13x1xf32>
    tpu.vector_store %arg2[%c0_311, %c0_312, %c22], %434 {strides = array<i32>} : memref<2x13x156xf32, #tpu.memory_space<vmem>>, vector<2x13x1xf32>,
    %436 = vector.extract_strided_slice %351 {offsets = [0, 2, 0, 2], sizes = [2, 1, 13, 1], strides = [1, 1, 1, 1]} : vector<2x4x13x13xf32> to vector<2x1x13x1xf32>
    %437 = vector.shape_cast %436 : vector<2x1x13x1xf32> to vector<2x13x1xf32>
    %c0_313 = arith.constant 0 : index
    %c0_314 = arith.constant 0 : index
    %c34 = arith.constant 34 : index
    %438 = vector.load %arg2[%c0_313, %c0_314, %c34] : memref<2x13x156xf32, #tpu.memory_space<vmem>>, vector<2x13x1xf32>
    tpu.vector_store %arg2[%c0_313, %c0_314, %c34], %437 {strides = array<i32>} : memref<2x13x156xf32, #tpu.memory_space<vmem>>, vector<2x13x1xf32>,
    %439 = vector.extract_strided_slice %351 {offsets = [0, 2, 0, 3], sizes = [2, 1, 13, 1], strides = [1, 1, 1, 1]} : vector<2x4x13x13xf32> to vector<2x1x13x1xf32>
    %440 = vector.shape_cast %439 : vector<2x1x13x1xf32> to vector<2x13x1xf32>
    %c0_315 = arith.constant 0 : index
    %c0_316 = arith.constant 0 : index
    %c46 = arith.constant 46 : index
    %441 = vector.load %arg2[%c0_315, %c0_316, %c46] : memref<2x13x156xf32, #tpu.memory_space<vmem>>, vector<2x13x1xf32>
    tpu.vector_store %arg2[%c0_315, %c0_316, %c46], %440 {strides = array<i32>} : memref<2x13x156xf32, #tpu.memory_space<vmem>>, vector<2x13x1xf32>,
    %442 = vector.extract_strided_slice %351 {offsets = [0, 2, 0, 4], sizes = [2, 1, 13, 1], strides = [1, 1, 1, 1]} : vector<2x4x13x13xf32> to vector<2x1x13x1xf32>
    %443 = vector.shape_cast %442 : vector<2x1x13x1xf32> to vector<2x13x1xf32>
    %c0_317 = arith.constant 0 : index
    %c0_318 = arith.constant 0 : index
    %c58 = arith.constant 58 : index
    %444 = vector.load %arg2[%c0_317, %c0_318, %c58] : memref<2x13x156xf32, #tpu.memory_space<vmem>>, vector<2x13x1xf32>
    tpu.vector_store %arg2[%c0_317, %c0_318, %c58], %443 {strides = array<i32>} : memref<2x13x156xf32, #tpu.memory_space<vmem>>, vector<2x13x1xf32>,
    %445 = vector.extract_strided_slice %351 {offsets = [0, 2, 0, 5], sizes = [2, 1, 13, 1], strides = [1, 1, 1, 1]} : vector<2x4x13x13xf32> to vector<2x1x13x1xf32>
    %446 = vector.shape_cast %445 : vector<2x1x13x1xf32> to vector<2x13x1xf32>
    %c0_319 = arith.constant 0 : index
    %c0_320 = arith.constant 0 : index
    %c70 = arith.constant 70 : index
    %447 = vector.load %arg2[%c0_319, %c0_320, %c70] : memref<2x13x156xf32, #tpu.memory_space<vmem>>, vector<2x13x1xf32>
    tpu.vector_store %arg2[%c0_319, %c0_320, %c70], %446 {strides = array<i32>} : memref<2x13x156xf32, #tpu.memory_space<vmem>>, vector<2x13x1xf32>,
    %448 = vector.extract_strided_slice %351 {offsets = [0, 2, 0, 6], sizes = [2, 1, 13, 1], strides = [1, 1, 1, 1]} : vector<2x4x13x13xf32> to vector<2x1x13x1xf32>
    %449 = vector.shape_cast %448 : vector<2x1x13x1xf32> to vector<2x13x1xf32>
    %c0_321 = arith.constant 0 : index
    %c0_322 = arith.constant 0 : index
    %c82 = arith.constant 82 : index
    %450 = vector.load %arg2[%c0_321, %c0_322, %c82] : memref<2x13x156xf32, #tpu.memory_space<vmem>>, vector<2x13x1xf32>
    tpu.vector_store %arg2[%c0_321, %c0_322, %c82], %449 {strides = array<i32>} : memref<2x13x156xf32, #tpu.memory_space<vmem>>, vector<2x13x1xf32>,
    %451 = vector.extract_strided_slice %351 {offsets = [0, 2, 0, 7], sizes = [2, 1, 13, 1], strides = [1, 1, 1, 1]} : vector<2x4x13x13xf32> to vector<2x1x13x1xf32>
    %452 = vector.shape_cast %451 : vector<2x1x13x1xf32> to vector<2x13x1xf32>
    %c0_323 = arith.constant 0 : index
    %c0_324 = arith.constant 0 : index
    %c94 = arith.constant 94 : index
    %453 = vector.load %arg2[%c0_323, %c0_324, %c94] : memref<2x13x156xf32, #tpu.memory_space<vmem>>, vector<2x13x1xf32>
    tpu.vector_store %arg2[%c0_323, %c0_324, %c94], %452 {strides = array<i32>} : memref<2x13x156xf32, #tpu.memory_space<vmem>>, vector<2x13x1xf32>,
    %454 = vector.extract_strided_slice %351 {offsets = [0, 2, 0, 8], sizes = [2, 1, 13, 1], strides = [1, 1, 1, 1]} : vector<2x4x13x13xf32> to vector<2x1x13x1xf32>
    %455 = vector.shape_cast %454 : vector<2x1x13x1xf32> to vector<2x13x1xf32>
    %c0_325 = arith.constant 0 : index
    %c0_326 = arith.constant 0 : index
    %c106 = arith.constant 106 : index
    %456 = vector.load %arg2[%c0_325, %c0_326, %c106] : memref<2x13x156xf32, #tpu.memory_space<vmem>>, vector<2x13x1xf32>
    tpu.vector_store %arg2[%c0_325, %c0_326, %c106], %455 {strides = array<i32>} : memref<2x13x156xf32, #tpu.memory_space<vmem>>, vector<2x13x1xf32>,
    %457 = vector.extract_strided_slice %351 {offsets = [0, 2, 0, 9], sizes = [2, 1, 13, 1], strides = [1, 1, 1, 1]} : vector<2x4x13x13xf32> to vector<2x1x13x1xf32>
    %458 = vector.shape_cast %457 : vector<2x1x13x1xf32> to vector<2x13x1xf32>
    %c0_327 = arith.constant 0 : index
    %c0_328 = arith.constant 0 : index
    %c118 = arith.constant 118 : index
    %459 = vector.load %arg2[%c0_327, %c0_328, %c118] : memref<2x13x156xf32, #tpu.memory_space<vmem>>, vector<2x13x1xf32>
    tpu.vector_store %arg2[%c0_327, %c0_328, %c118], %458 {strides = array<i32>} : memref<2x13x156xf32, #tpu.memory_space<vmem>>, vector<2x13x1xf32>,
    %460 = vector.extract_strided_slice %351 {offsets = [0, 2, 0, 10], sizes = [2, 1, 13, 1], strides = [1, 1, 1, 1]} : vector<2x4x13x13xf32> to vector<2x1x13x1xf32>
    %461 = vector.shape_cast %460 : vector<2x1x13x1xf32> to vector<2x13x1xf32>
    %c0_329 = arith.constant 0 : index
    %c0_330 = arith.constant 0 : index
    %c130 = arith.constant 130 : index
    %462 = vector.load %arg2[%c0_329, %c0_330, %c130] : memref<2x13x156xf32, #tpu.memory_space<vmem>>, vector<2x13x1xf32>
    tpu.vector_store %arg2[%c0_329, %c0_330, %c130], %461 {strides = array<i32>} : memref<2x13x156xf32, #tpu.memory_space<vmem>>, vector<2x13x1xf32>,
    %463 = vector.extract_strided_slice %351 {offsets = [0, 2, 0, 11], sizes = [2, 1, 13, 1], strides = [1, 1, 1, 1]} : vector<2x4x13x13xf32> to vector<2x1x13x1xf32>
    %464 = vector.shape_cast %463 : vector<2x1x13x1xf32> to vector<2x13x1xf32>
    %c0_331 = arith.constant 0 : index
    %c0_332 = arith.constant 0 : index
    %c142 = arith.constant 142 : index
    %465 = vector.load %arg2[%c0_331, %c0_332, %c142] : memref<2x13x156xf32, #tpu.memory_space<vmem>>, vector<2x13x1xf32>
    tpu.vector_store %arg2[%c0_331, %c0_332, %c142], %464 {strides = array<i32>} : memref<2x13x156xf32, #tpu.memory_space<vmem>>, vector<2x13x1xf32>,
    %466 = vector.extract_strided_slice %351 {offsets = [0, 2, 0, 12], sizes = [2, 1, 13, 1], strides = [1, 1, 1, 1]} : vector<2x4x13x13xf32> to vector<2x1x13x1xf32>
    %467 = vector.shape_cast %466 : vector<2x1x13x1xf32> to vector<2x13x1xf32>
    %c0_333 = arith.constant 0 : index
    %c0_334 = arith.constant 0 : index
    %c154 = arith.constant 154 : index
    %468 = vector.load %arg2[%c0_333, %c0_334, %c154] : memref<2x13x156xf32, #tpu.memory_space<vmem>>, vector<2x13x1xf32>
    tpu.vector_store %arg2[%c0_333, %c0_334, %c154], %467 {strides = array<i32>} : memref<2x13x156xf32, #tpu.memory_space<vmem>>, vector<2x13x1xf32>,
    %469 = vector.extract_strided_slice %351 {offsets = [0, 3, 0, 0], sizes = [2, 1, 13, 1], strides = [1, 1, 1, 1]} : vector<2x4x13x13xf32> to vector<2x1x13x1xf32>
    %470 = vector.shape_cast %469 : vector<2x1x13x1xf32> to vector<2x13x1xf32>
    %c0_335 = arith.constant 0 : index
    %c0_336 = arith.constant 0 : index
    %c11 = arith.constant 11 : index
    %471 = vector.load %arg2[%c0_335, %c0_336, %c11] : memref<2x13x156xf32, #tpu.memory_space<vmem>>, vector<2x13x1xf32>
    tpu.vector_store %arg2[%c0_335, %c0_336, %c11], %470 {strides = array<i32>} : memref<2x13x156xf32, #tpu.memory_space<vmem>>, vector<2x13x1xf32>,
    %472 = vector.extract_strided_slice %351 {offsets = [0, 3, 0, 1], sizes = [2, 1, 13, 1], strides = [1, 1, 1, 1]} : vector<2x4x13x13xf32> to vector<2x1x13x1xf32>
    %473 = vector.shape_cast %472 : vector<2x1x13x1xf32> to vector<2x13x1xf32>
    %c0_337 = arith.constant 0 : index
    %c0_338 = arith.constant 0 : index
    %c23 = arith.constant 23 : index
    %474 = vector.load %arg2[%c0_337, %c0_338, %c23] : memref<2x13x156xf32, #tpu.memory_space<vmem>>, vector<2x13x1xf32>
    tpu.vector_store %arg2[%c0_337, %c0_338, %c23], %473 {strides = array<i32>} : memref<2x13x156xf32, #tpu.memory_space<vmem>>, vector<2x13x1xf32>,
    %475 = vector.extract_strided_slice %351 {offsets = [0, 3, 0, 2], sizes = [2, 1, 13, 1], strides = [1, 1, 1, 1]} : vector<2x4x13x13xf32> to vector<2x1x13x1xf32>
    %476 = vector.shape_cast %475 : vector<2x1x13x1xf32> to vector<2x13x1xf32>
    %c0_339 = arith.constant 0 : index
    %c0_340 = arith.constant 0 : index
    %c35 = arith.constant 35 : index
    %477 = vector.load %arg2[%c0_339, %c0_340, %c35] : memref<2x13x156xf32, #tpu.memory_space<vmem>>, vector<2x13x1xf32>
    tpu.vector_store %arg2[%c0_339, %c0_340, %c35], %476 {strides = array<i32>} : memref<2x13x156xf32, #tpu.memory_space<vmem>>, vector<2x13x1xf32>,
    %478 = vector.extract_strided_slice %351 {offsets = [0, 3, 0, 3], sizes = [2, 1, 13, 1], strides = [1, 1, 1, 1]} : vector<2x4x13x13xf32> to vector<2x1x13x1xf32>
    %479 = vector.shape_cast %478 : vector<2x1x13x1xf32> to vector<2x13x1xf32>
    %c0_341 = arith.constant 0 : index
    %c0_342 = arith.constant 0 : index
    %c47 = arith.constant 47 : index
    %480 = vector.load %arg2[%c0_341, %c0_342, %c47] : memref<2x13x156xf32, #tpu.memory_space<vmem>>, vector<2x13x1xf32>
    tpu.vector_store %arg2[%c0_341, %c0_342, %c47], %479 {strides = array<i32>} : memref<2x13x156xf32, #tpu.memory_space<vmem>>, vector<2x13x1xf32>,
    %481 = vector.extract_strided_slice %351 {offsets = [0, 3, 0, 4], sizes = [2, 1, 13, 1], strides = [1, 1, 1, 1]} : vector<2x4x13x13xf32> to vector<2x1x13x1xf32>
    %482 = vector.shape_cast %481 : vector<2x1x13x1xf32> to vector<2x13x1xf32>
    %c0_343 = arith.constant 0 : index
    %c0_344 = arith.constant 0 : index
    %c59 = arith.constant 59 : index
    %483 = vector.load %arg2[%c0_343, %c0_344, %c59] : memref<2x13x156xf32, #tpu.memory_space<vmem>>, vector<2x13x1xf32>
    tpu.vector_store %arg2[%c0_343, %c0_344, %c59], %482 {strides = array<i32>} : memref<2x13x156xf32, #tpu.memory_space<vmem>>, vector<2x13x1xf32>,
    %484 = vector.extract_strided_slice %351 {offsets = [0, 3, 0, 5], sizes = [2, 1, 13, 1], strides = [1, 1, 1, 1]} : vector<2x4x13x13xf32> to vector<2x1x13x1xf32>
    %485 = vector.shape_cast %484 : vector<2x1x13x1xf32> to vector<2x13x1xf32>
    %c0_345 = arith.constant 0 : index
    %c0_346 = arith.constant 0 : index
    %c71 = arith.constant 71 : index
    %486 = vector.load %arg2[%c0_345, %c0_346, %c71] : memref<2x13x156xf32, #tpu.memory_space<vmem>>, vector<2x13x1xf32>
    tpu.vector_store %arg2[%c0_345, %c0_346, %c71], %485 {strides = array<i32>} : memref<2x13x156xf32, #tpu.memory_space<vmem>>, vector<2x13x1xf32>,
    %487 = vector.extract_strided_slice %351 {offsets = [0, 3, 0, 6], sizes = [2, 1, 13, 1], strides = [1, 1, 1, 1]} : vector<2x4x13x13xf32> to vector<2x1x13x1xf32>
    %488 = vector.shape_cast %487 : vector<2x1x13x1xf32> to vector<2x13x1xf32>
    %c0_347 = arith.constant 0 : index
    %c0_348 = arith.constant 0 : index
    %c83 = arith.constant 83 : index
    %489 = vector.load %arg2[%c0_347, %c0_348, %c83] : memref<2x13x156xf32, #tpu.memory_space<vmem>>, vector<2x13x1xf32>
    tpu.vector_store %arg2[%c0_347, %c0_348, %c83], %488 {strides = array<i32>} : memref<2x13x156xf32, #tpu.memory_space<vmem>>, vector<2x13x1xf32>,
    %490 = vector.extract_strided_slice %351 {offsets = [0, 3, 0, 7], sizes = [2, 1, 13, 1], strides = [1, 1, 1, 1]} : vector<2x4x13x13xf32> to vector<2x1x13x1xf32>
    %491 = vector.shape_cast %490 : vector<2x1x13x1xf32> to vector<2x13x1xf32>
    %c0_349 = arith.constant 0 : index
    %c0_350 = arith.constant 0 : index
    %c95 = arith.constant 95 : index
    %492 = vector.load %arg2[%c0_349, %c0_350, %c95] : memref<2x13x156xf32, #tpu.memory_space<vmem>>, vector<2x13x1xf32>
    tpu.vector_store %arg2[%c0_349, %c0_350, %c95], %491 {strides = array<i32>} : memref<2x13x156xf32, #tpu.memory_space<vmem>>, vector<2x13x1xf32>,
    %493 = vector.extract_strided_slice %351 {offsets = [0, 3, 0, 8], sizes = [2, 1, 13, 1], strides = [1, 1, 1, 1]} : vector<2x4x13x13xf32> to vector<2x1x13x1xf32>
    %494 = vector.shape_cast %493 : vector<2x1x13x1xf32> to vector<2x13x1xf32>
    %c0_351 = arith.constant 0 : index
    %c0_352 = arith.constant 0 : index
    %c107 = arith.constant 107 : index
    %495 = vector.load %arg2[%c0_351, %c0_352, %c107] : memref<2x13x156xf32, #tpu.memory_space<vmem>>, vector<2x13x1xf32>
    tpu.vector_store %arg2[%c0_351, %c0_352, %c107], %494 {strides = array<i32>} : memref<2x13x156xf32, #tpu.memory_space<vmem>>, vector<2x13x1xf32>,
    %496 = vector.extract_strided_slice %351 {offsets = [0, 3, 0, 9], sizes = [2, 1, 13, 1], strides = [1, 1, 1, 1]} : vector<2x4x13x13xf32> to vector<2x1x13x1xf32>
    %497 = vector.shape_cast %496 : vector<2x1x13x1xf32> to vector<2x13x1xf32>
    %c0_353 = arith.constant 0 : index
    %c0_354 = arith.constant 0 : index
    %c119 = arith.constant 119 : index
    %498 = vector.load %arg2[%c0_353, %c0_354, %c119] : memref<2x13x156xf32, #tpu.memory_space<vmem>>, vector<2x13x1xf32>
    tpu.vector_store %arg2[%c0_353, %c0_354, %c119], %497 {strides = array<i32>} : memref<2x13x156xf32, #tpu.memory_space<vmem>>, vector<2x13x1xf32>,
    %499 = vector.extract_strided_slice %351 {offsets = [0, 3, 0, 10], sizes = [2, 1, 13, 1], strides = [1, 1, 1, 1]} : vector<2x4x13x13xf32> to vector<2x1x13x1xf32>
    %500 = vector.shape_cast %499 : vector<2x1x13x1xf32> to vector<2x13x1xf32>
    %c0_355 = arith.constant 0 : index
    %c0_356 = arith.constant 0 : index
    %c131 = arith.constant 131 : index
    %501 = vector.load %arg2[%c0_355, %c0_356, %c131] : memref<2x13x156xf32, #tpu.memory_space<vmem>>, vector<2x13x1xf32>
    tpu.vector_store %arg2[%c0_355, %c0_356, %c131], %500 {strides = array<i32>} : memref<2x13x156xf32, #tpu.memory_space<vmem>>, vector<2x13x1xf32>,
    %502 = vector.extract_strided_slice %351 {offsets = [0, 3, 0, 11], sizes = [2, 1, 13, 1], strides = [1, 1, 1, 1]} : vector<2x4x13x13xf32> to vector<2x1x13x1xf32>
    %503 = vector.shape_cast %502 : vector<2x1x13x1xf32> to vector<2x13x1xf32>
    %c0_357 = arith.constant 0 : index
    %c0_358 = arith.constant 0 : index
    %c143 = arith.constant 143 : index
    %504 = vector.load %arg2[%c0_357, %c0_358, %c143] : memref<2x13x156xf32, #tpu.memory_space<vmem>>, vector<2x13x1xf32>
    tpu.vector_store %arg2[%c0_357, %c0_358, %c143], %503 {strides = array<i32>} : memref<2x13x156xf32, #tpu.memory_space<vmem>>, vector<2x13x1xf32>,
    %505 = vector.extract_strided_slice %351 {offsets = [0, 3, 0, 12], sizes = [2, 1, 13, 1], strides = [1, 1, 1, 1]} : vector<2x4x13x13xf32> to vector<2x1x13x1xf32>
    %506 = vector.shape_cast %505 : vector<2x1x13x1xf32> to vector<2x13x1xf32>
    %c0_359 = arith.constant 0 : index
    %c0_360 = arith.constant 0 : index
    %c155 = arith.constant 155 : index
    %507 = vector.load %arg2[%c0_359, %c0_360, %c155] : memref<2x13x156xf32, #tpu.memory_space<vmem>>, vector<2x13x1xf32>
    tpu.vector_store %arg2[%c0_359, %c0_360, %c155], %506 {strides = array<i32>} : memref<2x13x156xf32, #tpu.memory_space<vmem>>, vector<2x13x1xf32>,
    return
  }
}

</mosaic_0001>

<llo_original>
// kernel: tpu_custom_call.1
$region0: #{tpu_custom_call.1}
  #allocation0 [shape = 'u32[]', space=smem, size = 0x4, offset = 0x4, fixed_abs, tag = 'smem constant byte address 0x4 - core index']
  #allocation1 [shape = 'u32[144,128]{1,0:T(1,128)}', space=vmem, size = 0x12000, scoped, tag = 'internal scratch']
  %s0 = inlined_call_operand.vmem [shape: f32[2,8,16,16], index: 0, kind: input, shape index: {}]
  %s1 = inlined_call_operand.vmem [shape: f32[2,4,20,16], index: 1, kind: input, shape index: {}]
  %s2 = inlined_call_operand.vmem [shape: f32[2,13,156], index: 2, kind: output, shape index: {}]
  %s3 = sld [smem:[#allocation0]]
  $region18: #{tpu_custom_call.1} parent=0
    _
  %s5 = ssub.s32 1, %s3
  %s6 = scalar_select 0, %s5, %s3
  // Predicated region
  $region2: #{tpu_custom_call.1} parent=0 // pred_check
    _
  $region3: #{tpu_custom_call.1} parent=0 // pred_check_branch
    %8 = sbr.rel (0) target = $region5
  $region4: #{tpu_custom_call.1} parent=0 // pred_region
    _
  $region5: #{tpu_custom_call.1} parent=0 // pred_fallthru
    _
  // Predicated region
  $region6: #{tpu_custom_call.1} parent=0 // pred_check
    _
  $region7: #{tpu_custom_call.1} parent=0 // pred_check_branch
    %10 = sbr.rel (0) target = $region9
  $region8: #{tpu_custom_call.1} parent=0 // pred_region
    _
  $region9: #{tpu_custom_call.1} parent=0 // pred_fallthru
    _
  %v11 = vld [vmem:[%s0] sm:$0xff]
  %v12 = vld [vmem:[%s0 + $0x8] sm:$0x1f]
  %v13 = vld [vmem:[%s0 + $0x10] sm:$0xff]
  %v14 = vld [vmem:[%s0 + $0x18] sm:$0x1f]
  %v15 = vld [vmem:[%s0 + $0x20] sm:$0xff]
  %v16 = vld [vmem:[%s0 + $0x28] sm:$0x1f]
  %v17 = vld [vmem:[%s0 + $0x30] sm:$0xff]
  %v18 = vld [vmem:[%s0 + $0x38] sm:$0x1f]
  %v19 = vld [vmem:[%s0 + $0x40] sm:$0xff]
  %v20 = vld [vmem:[%s0 + $0x48] sm:$0x1f]
  %v21 = vld [vmem:[%s0 + $0x50] sm:$0xff]
  %v22 = vld [vmem:[%s0 + $0x58] sm:$0x1f]
  %v23 = vld [vmem:[%s0 + $0x60] sm:$0xff]
  %v24 = vld [vmem:[%s0 + $0x68] sm:$0x1f]
  %v25 = vld [vmem:[%s0 + $0x70] sm:$0xff]
  %v26 = vld [vmem:[%s0 + $0x78] sm:$0x1f]
  %v27 = vld [vmem:[%s0 + $0x80] sm:$0xff]
  %v28 = vld [vmem:[%s0 + $0x88] sm:$0x1f]
  %v29 = vld [vmem:[%s0 + $0x90] sm:$0xff]
  %v30 = vld [vmem:[%s0 + $0x98] sm:$0x1f]
  %v31 = vld [vmem:[%s0 + $0xa0] sm:$0xff]
  %v32 = vld [vmem:[%s0 + $0xa8] sm:$0x1f]
  %v33 = vld [vmem:[%s0 + $0xb0] sm:$0xff]
  %v34 = vld [vmem:[%s0 + $0xb8] sm:$0x1f]
  %v35 = vld [vmem:[%s0 + $0xc0] sm:$0xff]
  %v36 = vld [vmem:[%s0 + $0xc8] sm:$0x1f]
  %v37 = vld [vmem:[%s0 + $0xd0] sm:$0xff]
  %v38 = vld [vmem:[%s0 + $0xd8] sm:$0x1f]
  %v39 = vld [vmem:[%s0 + $0xe0] sm:$0xff]
  %v40 = vld [vmem:[%s0 + $0xe8] sm:$0x1f]
  %v41 = vld [vmem:[%s0 + $0xf0] sm:$0xff]
  %v42 = vld [vmem:[%s0 + $0xf8] sm:$0x1f]
  %v43 = vld [vmem:[%s0 + $0x1] sm:$0xff]
  %v44 = vld [vmem:[%s0 + $0x9] sm:$0x1f]
  %v45 = vld [vmem:[%s0 + $0x11] sm:$0xff]
  %v46 = vld [vmem:[%s0 + $0x19] sm:$0x1f]
  %v47 = vld [vmem:[%s0 + $0x21] sm:$0xff]
  %v48 = vld [vmem:[%s0 + $0x29] sm:$0x1f]
  %v49 = vld [vmem:[%s0 + $0x31] sm:$0xff]
  %v50 = vld [vmem:[%s0 + $0x39] sm:$0x1f]
  %v51 = vld [vmem:[%s0 + $0x41] sm:$0xff]
  %v52 = vld [vmem:[%s0 + $0x49] sm:$0x1f]
  %v53 = vld [vmem:[%s0 + $0x51] sm:$0xff]
  %v54 = vld [vmem:[%s0 + $0x59] sm:$0x1f]
  %v55 = vld [vmem:[%s0 + $0x61] sm:$0xff]
  %v56 = vld [vmem:[%s0 + $0x69] sm:$0x1f]
  %v57 = vld [vmem:[%s0 + $0x71] sm:$0xff]
  %v58 = vld [vmem:[%s0 + $0x79] sm:$0x1f]
  %v59 = vld [vmem:[%s0 + $0x81] sm:$0xff]
  %v60 = vld [vmem:[%s0 + $0x89] sm:$0x1f]
  %v61 = vld [vmem:[%s0 + $0x91] sm:$0xff]
  %v62 = vld [vmem:[%s0 + $0x99] sm:$0x1f]
  %v63 = vld [vmem:[%s0 + $0xa1] sm:$0xff]
  %v64 = vld [vmem:[%s0 + $0xa9] sm:$0x1f]
  %v65 = vld [vmem:[%s0 + $0xb1] sm:$0xff]
  %v66 = vld [vmem:[%s0 + $0xb9] sm:$0x1f]
  %v67 = vld [vmem:[%s0 + $0xc1] sm:$0xff]
  %v68 = vld [vmem:[%s0 + $0xc9] sm:$0x1f]
  %v69 = vld [vmem:[%s0 + $0xd1] sm:$0xff]
  %v70 = vld [vmem:[%s0 + $0xd9] sm:$0x1f]
  %v71 = vld [vmem:[%s0 + $0xe1] sm:$0xff]
  %v72 = vld [vmem:[%s0 + $0xe9] sm:$0x1f]
  %v73 = vld [vmem:[%s0 + $0xf1] sm:$0xff]
  %v74 = vld [vmem:[%s0 + $0xf9] sm:$0x1f]
  %v75 = vld [vmem:[%s0 + $0x2] sm:$0xff]
  %v76 = vld [vmem:[%s0 + $0xa] sm:$0x1f]
  %v77 = vld [vmem:[%s0 + $0x12] sm:$0xff]
  %v78 = vld [vmem:[%s0 + $0x1a] sm:$0x1f]
  %v79 = vld [vmem:[%s0 + $0x22] sm:$0xff]
  %v80 = vld [vmem:[%s0 + $0x2a] sm:$0x1f]
  %v81 = vld [vmem:[%s0 + $0x32] sm:$0xff]
  %v82 = vld [vmem:[%s0 + $0x3a] sm:$0x1f]
  %v83 = vld [vmem:[%s0 + $0x42] sm:$0xff]
  %v84 = vld [vmem:[%s0 + $0x4a] sm:$0x1f]
  %v85 = vld [vmem:[%s0 + $0x52] sm:$0xff]
  %v86 = vld [vmem:[%s0 + $0x5a] sm:$0x1f]
  %v87 = vld [vmem:[%s0 + $0x62] sm:$0xff]
  %v88 = vld [vmem:[%s0 + $0x6a] sm:$0x1f]
  %v89 = vld [vmem:[%s0 + $0x72] sm:$0xff]
  %v90 = vld [vmem:[%s0 + $0x7a] sm:$0x1f]
  %v91 = vld [vmem:[%s0 + $0x82] sm:$0xff]
  %v92 = vld [vmem:[%s0 + $0x8a] sm:$0x1f]
  %v93 = vld [vmem:[%s0 + $0x92] sm:$0xff]
  %v94 = vld [vmem:[%s0 + $0x9a] sm:$0x1f]
  %v95 = vld [vmem:[%s0 + $0xa2] sm:$0xff]
  %v96 = vld [vmem:[%s0 + $0xaa] sm:$0x1f]
  %v97 = vld [vmem:[%s0 + $0xb2] sm:$0xff]
  %v98 = vld [vmem:[%s0 + $0xba] sm:$0x1f]
  %v99 = vld [vmem:[%s0 + $0xc2] sm:$0xff]
  %v100 = vld [vmem:[%s0 + $0xca] sm:$0x1f]
  %v101 = vld [vmem:[%s0 + $0xd2] sm:$0xff]
  %v102 = vld [vmem:[%s0 + $0xda] sm:$0x1f]
  %v103 = vld [vmem:[%s0 + $0xe2] sm:$0xff]
  %v104 = vld [vmem:[%s0 + $0xea] sm:$0x1f]
  %v105 = vld [vmem:[%s0 + $0xf2] sm:$0xff]
  %v106 = vld [vmem:[%s0 + $0xfa] sm:$0x1f]
  %v107 = vld [vmem:[%s0 + $0x3] sm:$0xff]
  %v108 = vld [vmem:[%s0 + $0xb] sm:$0x1f]
  %v109 = vld [vmem:[%s0 + $0x13] sm:$0xff]
  %v110 = vld [vmem:[%s0 + $0x1b] sm:$0x1f]
  %v111 = vld [vmem:[%s0 + $0x23] sm:$0xff]
  %v112 = vld [vmem:[%s0 + $0x2b] sm:$0x1f]
  %v113 = vld [vmem:[%s0 + $0x33] sm:$0xff]
  %v114 = vld [vmem:[%s0 + $0x3b] sm:$0x1f]
  %v115 = vld [vmem:[%s0 + $0x43] sm:$0xff]
  %v116 = vld [vmem:[%s0 + $0x4b] sm:$0x1f]
  %v117 = vld [vmem:[%s0 + $0x53] sm:$0xff]
  %v118 = vld [vmem:[%s0 + $0x5b] sm:$0x1f]
  %v119 = vld [vmem:[%s0 + $0x63] sm:$0xff]
  %v120 = vld [vmem:[%s0 + $0x6b] sm:$0x1f]
  %v121 = vld [vmem:[%s0 + $0x73] sm:$0xff]
  %v122 = vld [vmem:[%s0 + $0x7b] sm:$0x1f]
  %v123 = vld [vmem:[%s0 + $0x83] sm:$0xff]
  %v124 = vld [vmem:[%s0 + $0x8b] sm:$0x1f]
  %v125 = vld [vmem:[%s0 + $0x93] sm:$0xff]
  %v126 = vld [vmem:[%s0 + $0x9b] sm:$0x1f]
  %v127 = vld [vmem:[%s0 + $0xa3] sm:$0xff]
  %v128 = vld [vmem:[%s0 + $0xab] sm:$0x1f]
  %v129 = vld [vmem:[%s0 + $0xb3] sm:$0xff]
  %v130 = vld [vmem:[%s0 + $0xbb] sm:$0x1f]
  %v131 = vld [vmem:[%s0 + $0xc3] sm:$0xff]
  %v132 = vld [vmem:[%s0 + $0xcb] sm:$0x1f]
  %v133 = vld [vmem:[%s0 + $0xd3] sm:$0xff]
  %v134 = vld [vmem:[%s0 + $0xdb] sm:$0x1f]
  %v135 = vld [vmem:[%s0 + $0xe3] sm:$0xff]
  %v136 = vld [vmem:[%s0 + $0xeb] sm:$0x1f]
  %v137 = vld [vmem:[%s0 + $0xf3] sm:$0xff]
  %v138 = vld [vmem:[%s0 + $0xfb] sm:$0x1f]
  %v139 = vadd.f32 %v11, %v43
  %v140 = vadd.f32 %v12, %v44
  %v141 = vadd.f32 %v13, %v45
  %v142 = vadd.f32 %v14, %v46
  %v143 = vadd.f32 %v15, %v47
  %v144 = vadd.f32 %v16, %v48
  %v145 = vadd.f32 %v17, %v49
  %v146 = vadd.f32 %v18, %v50
  %v147 = vadd.f32 %v19, %v51
  %v148 = vadd.f32 %v20, %v52
  %v149 = vadd.f32 %v21, %v53
  %v150 = vadd.f32 %v22, %v54
  %v151 = vadd.f32 %v23, %v55
  %v152 = vadd.f32 %v24, %v56
  %v153 = vadd.f32 %v25, %v57
  %v154 = vadd.f32 %v26, %v58
  %v155 = vadd.f32 %v27, %v59
  %v156 = vadd.f32 %v28, %v60
  %v157 = vadd.f32 %v29, %v61
  %v158 = vadd.f32 %v30, %v62
  %v159 = vadd.f32 %v31, %v63
  %v160 = vadd.f32 %v32, %v64
  %v161 = vadd.f32 %v33, %v65
  %v162 = vadd.f32 %v34, %v66
  %v163 = vadd.f32 %v35, %v67
  %v164 = vadd.f32 %v36, %v68
  %v165 = vadd.f32 %v37, %v69
  %v166 = vadd.f32 %v38, %v70
  %v167 = vadd.f32 %v39, %v71
  %v168 = vadd.f32 %v40, %v72
  %v169 = vadd.f32 %v41, %v73
  %v170 = vadd.f32 %v42, %v74
  %v171 = vadd.f32 %v75, %v107
  %v172 = vadd.f32 %v76, %v108
  %v173 = vadd.f32 %v77, %v109
  %v174 = vadd.f32 %v78, %v110
  %v175 = vadd.f32 %v79, %v111
  %v176 = vadd.f32 %v80, %v112
  %v177 = vadd.f32 %v81, %v113
  %v178 = vadd.f32 %v82, %v114
  %v179 = vadd.f32 %v83, %v115
  %v180 = vadd.f32 %v84, %v116
  %v181 = vadd.f32 %v85, %v117
  %v182 = vadd.f32 %v86, %v118
  %v183 = vadd.f32 %v87, %v119
  %v184 = vadd.f32 %v88, %v120
  %v185 = vadd.f32 %v89, %v121
  %v186 = vadd.f32 %v90, %v122
  %v187 = vadd.f32 %v91, %v123
  %v188 = vadd.f32 %v92, %v124
  %v189 = vadd.f32 %v93, %v125
  %v190 = vadd.f32 %v94, %v126
  %v191 = vadd.f32 %v95, %v127
  %v192 = vadd.f32 %v96, %v128
  %v193 = vadd.f32 %v97, %v129
  %v194 = vadd.f32 %v98, %v130
  %v195 = vadd.f32 %v99, %v131
  %v196 = vadd.f32 %v100, %v132
  %v197 = vadd.f32 %v101, %v133
  %v198 = vadd.f32 %v102, %v134
  %v199 = vadd.f32 %v103, %v135
  %v200 = vadd.f32 %v104, %v136
  %v201 = vadd.f32 %v105, %v137
  %v202 = vadd.f32 %v106, %v138
  %v203 = vadd.f32 %v139, %v171
  %v204 = vadd.f32 %v140, %v172
  %v205 = vadd.f32 %v141, %v173
  %v206 = vadd.f32 %v142, %v174
  %v207 = vadd.f32 %v143, %v175
  %v208 = vadd.f32 %v144, %v176
  %v209 = vadd.f32 %v145, %v177
  %v210 = vadd.f32 %v146, %v178
  %v211 = vadd.f32 %v147, %v179
  %v212 = vadd.f32 %v148, %v180
  %v213 = vadd.f32 %v149, %v181
  %v214 = vadd.f32 %v150, %v182
  %v215 = vadd.f32 %v151, %v183
  %v216 = vadd.f32 %v152, %v184
  %v217 = vadd.f32 %v153, %v185
  %v218 = vadd.f32 %v154, %v186
  %v219 = vadd.f32 %v155, %v187
  %v220 = vadd.f32 %v156, %v188
  %v221 = vadd.f32 %v157, %v189
  %v222 = vadd.f32 %v158, %v190
  %v223 = vadd.f32 %v159, %v191
  %v224 = vadd.f32 %v160, %v192
  %v225 = vadd.f32 %v161, %v193
  %v226 = vadd.f32 %v162, %v194
  %v227 = vadd.f32 %v163, %v195
  %v228 = vadd.f32 %v164, %v196
  %v229 = vadd.f32 %v165, %v197
  %v230 = vadd.f32 %v166, %v198
  %v231 = vadd.f32 %v167, %v199
  %v232 = vadd.f32 %v168, %v200
  %v233 = vadd.f32 %v169, %v201
  %v234 = vadd.f32 %v170, %v202
  %267 = vrot.lane.b32.xlu0 %v203, 127
  %v268 = vpop.permute.xlu0 %267
  %269 = vrot.lane.b32.xlu0 %v204, 127
  %v270 = vpop.permute.xlu0 %269
  %271 = vrot.lane.b32.xlu0 %v205, 127
  %v272 = vpop.permute.xlu0 %271
  %273 = vrot.lane.b32.xlu0 %v206, 127
  %v274 = vpop.permute.xlu0 %273
  %275 = vrot.lane.b32.xlu0 %v207, 127
  %v276 = vpop.permute.xlu0 %275
  %277 = vrot.lane.b32.xlu0 %v208, 127
  %v278 = vpop.permute.xlu0 %277
  %279 = vrot.lane.b32.xlu0 %v209, 127
  %v280 = vpop.permute.xlu0 %279
  %281 = vrot.lane.b32.xlu0 %v210, 127
  %v282 = vpop.permute.xlu0 %281
  %283 = vrot.lane.b32.xlu0 %v211, 127
  %v284 = vpop.permute.xlu0 %283
  %285 = vrot.lane.b32.xlu0 %v212, 127
  %v286 = vpop.permute.xlu0 %285
  %287 = vrot.lane.b32.xlu0 %v213, 127
  %v288 = vpop.permute.xlu0 %287
  %289 = vrot.lane.b32.xlu0 %v214, 127
  %v290 = vpop.permute.xlu0 %289
  %291 = vrot.lane.b32.xlu0 %v215, 127
  %v292 = vpop.permute.xlu0 %291
  %293 = vrot.lane.b32.xlu0 %v216, 127
  %v294 = vpop.permute.xlu0 %293
  %295 = vrot.lane.b32.xlu0 %v217, 127
  %v296 = vpop.permute.xlu0 %295
  %297 = vrot.lane.b32.xlu0 %v218, 127
  %v298 = vpop.permute.xlu0 %297
  %299 = vrot.lane.b32.xlu0 %v219, 127
  %v300 = vpop.permute.xlu0 %299
  %301 = vrot.lane.b32.xlu0 %v220, 127
  %v302 = vpop.permute.xlu0 %301
  %303 = vrot.lane.b32.xlu0 %v221, 127
  %v304 = vpop.permute.xlu0 %303
  %305 = vrot.lane.b32.xlu0 %v222, 127
  %v306 = vpop.permute.xlu0 %305
  %307 = vrot.lane.b32.xlu0 %v223, 127
  %v308 = vpop.permute.xlu0 %307
  %309 = vrot.lane.b32.xlu0 %v224, 127
  %v310 = vpop.permute.xlu0 %309
  %311 = vrot.lane.b32.xlu0 %v225, 127
  %v312 = vpop.permute.xlu0 %311
  %313 = vrot.lane.b32.xlu0 %v226, 127
  %v314 = vpop.permute.xlu0 %313
  %315 = vrot.lane.b32.xlu0 %v227, 127
  %v316 = vpop.permute.xlu0 %315
  %317 = vrot.lane.b32.xlu0 %v228, 127
  %v318 = vpop.permute.xlu0 %317
  %319 = vrot.lane.b32.xlu0 %v229, 127
  %v320 = vpop.permute.xlu0 %319
  %321 = vrot.lane.b32.xlu0 %v230, 127
  %v322 = vpop.permute.xlu0 %321
  %323 = vrot.lane.b32.xlu0 %v231, 127
  %v324 = vpop.permute.xlu0 %323
  %325 = vrot.lane.b32.xlu0 %v232, 127
  %v326 = vpop.permute.xlu0 %325
  %327 = vrot.lane.b32.xlu0 %v233, 127
  %v328 = vpop.permute.xlu0 %327
  %329 = vrot.lane.b32.xlu0 %v234, 127
  %v330 = vpop.permute.xlu0 %329
  %v363 = vadd.f32 %v203, %v268
  %v364 = vadd.f32 %v204, %v270
  %v365 = vadd.f32 %v205, %v272
  %v366 = vadd.f32 %v206, %v274
  %v367 = vadd.f32 %v207, %v276
  %v368 = vadd.f32 %v208, %v278
  %v369 = vadd.f32 %v209, %v280
  %v370 = vadd.f32 %v210, %v282
  %v371 = vadd.f32 %v211, %v284
  %v372 = vadd.f32 %v212, %v286
  %v373 = vadd.f32 %v213, %v288
  %v374 = vadd.f32 %v214, %v290
  %v375 = vadd.f32 %v215, %v292
  %v376 = vadd.f32 %v216, %v294
  %v377 = vadd.f32 %v217, %v296
  %v378 = vadd.f32 %v218, %v298
  %v379 = vadd.f32 %v219, %v300
  %v380 = vadd.f32 %v220, %v302
  %v381 = vadd.f32 %v221, %v304
  %v382 = vadd.f32 %v222, %v306
  %v383 = vadd.f32 %v223, %v308
  %v384 = vadd.f32 %v224, %v310
  %v385 = vadd.f32 %v225, %v312
  %v386 = vadd.f32 %v226, %v314
  %v387 = vadd.f32 %v227, %v316
  %v388 = vadd.f32 %v228, %v318
  %v389 = vadd.f32 %v229, %v320
  %v390 = vadd.f32 %v230, %v322
  %v391 = vadd.f32 %v231, %v324
  %v392 = vadd.f32 %v232, %v326
  %v393 = vadd.f32 %v233, %v328
  %v394 = vadd.f32 %v234, %v330
  %427 = vrot.lane.b32.xlu0 %v363, 126
  %v428 = vpop.permute.xlu0 %427
  %429 = vrot.lane.b32.xlu0 %v364, 126
  %v430 = vpop.permute.xlu0 %429
  %431 = vrot.lane.b32.xlu0 %v365, 126
  %v432 = vpop.permute.xlu0 %431
  %433 = vrot.lane.b32.xlu0 %v366, 126
  %v434 = vpop.permute.xlu0 %433
  %435 = vrot.lane.b32.xlu0 %v367, 126
  %v436 = vpop.permute.xlu0 %435
  %437 = vrot.lane.b32.xlu0 %v368, 126
  %v438 = vpop.permute.xlu0 %437
  %439 = vrot.lane.b32.xlu0 %v369, 126
  %v440 = vpop.permute.xlu0 %439
  %441 = vrot.lane.b32.xlu0 %v370, 126
  %v442 = vpop.permute.xlu0 %441
  %443 = vrot.lane.b32.xlu0 %v371, 126
  %v444 = vpop.permute.xlu0 %443
  %445 = vrot.lane.b32.xlu0 %v372, 126
  %v446 = vpop.permute.xlu0 %445
  %447 = vrot.lane.b32.xlu0 %v373, 126
  %v448 = vpop.permute.xlu0 %447
  %449 = vrot.lane.b32.xlu0 %v374, 126
  %v450 = vpop.permute.xlu0 %449
  %451 = vrot.lane.b32.xlu0 %v375, 126
  %v452 = vpop.permute.xlu0 %451
  %453 = vrot.lane.b32.xlu0 %v376, 126
  %v454 = vpop.permute.xlu0 %453
  %455 = vrot.lane.b32.xlu0 %v377, 126
  %v456 = vpop.permute.xlu0 %455
  %457 = vrot.lane.b32.xlu0 %v378, 126
  %v458 = vpop.permute.xlu0 %457
  %459 = vrot.lane.b32.xlu0 %v379, 126
  %v460 = vpop.permute.xlu0 %459
  %461 = vrot.lane.b32.xlu0 %v380, 126
  %v462 = vpop.permute.xlu0 %461
  %463 = vrot.lane.b32.xlu0 %v381, 126
  %v464 = vpop.permute.xlu0 %463
  %465 = vrot.lane.b32.xlu0 %v382, 126
  %v466 = vpop.permute.xlu0 %465
  %467 = vrot.lane.b32.xlu0 %v383, 126
  %v468 = vpop.permute.xlu0 %467
  %469 = vrot.lane.b32.xlu0 %v384, 126
  %v470 = vpop.permute.xlu0 %469
  %471 = vrot.lane.b32.xlu0 %v385, 126
  %v472 = vpop.permute.xlu0 %471
  %473 = vrot.lane.b32.xlu0 %v386, 126
  %v474 = vpop.permute.xlu0 %473
  %475 = vrot.lane.b32.xlu0 %v387, 126
  %v476 = vpop.permute.xlu0 %475
  %477 = vrot.lane.b32.xlu0 %v388, 126
  %v478 = vpop.permute.xlu0 %477
  %479 = vrot.lane.b32.xlu0 %v389, 126
  %v480 = vpop.permute.xlu0 %479
  %481 = vrot.lane.b32.xlu0 %v390, 126
  %v482 = vpop.permute.xlu0 %481
  %483 = vrot.lane.b32.xlu0 %v391, 126
  %v484 = vpop.permute.xlu0 %483
  %485 = vrot.lane.b32.xlu0 %v392, 126
  %v486 = vpop.permute.xlu0 %485
  %487 = vrot.lane.b32.xlu0 %v393, 126
  %v488 = vpop.permute.xlu0 %487
  %489 = vrot.lane.b32.xlu0 %v394, 126
  %v490 = vpop.permute.xlu0 %489
  %v523 = vadd.f32 %v363, %v428
  %v524 = vadd.f32 %v364, %v430
  %v525 = vadd.f32 %v365, %v432
  %v526 = vadd.f32 %v366, %v434
  %v527 = vadd.f32 %v367, %v436
  %v528 = vadd.f32 %v368, %v438
  %v529 = vadd.f32 %v369, %v440
  %v530 = vadd.f32 %v370, %v442
  %v531 = vadd.f32 %v371, %v444
  %v532 = vadd.f32 %v372, %v446
  %v533 = vadd.f32 %v373, %v448
  %v534 = vadd.f32 %v374, %v450
  %v535 = vadd.f32 %v375, %v452
  %v536 = vadd.f32 %v376, %v454
  %v537 = vadd.f32 %v377, %v456
  %v538 = vadd.f32 %v378, %v458
  %v539 = vadd.f32 %v379, %v460
  %v540 = vadd.f32 %v380, %v462
  %v541 = vadd.f32 %v381, %v464
  %v542 = vadd.f32 %v382, %v466
  %v543 = vadd.f32 %v383, %v468
  %v544 = vadd.f32 %v384, %v470
  %v545 = vadd.f32 %v385, %v472
  %v546 = vadd.f32 %v386, %v474
  %v547 = vadd.f32 %v387, %v476
  %v548 = vadd.f32 %v388, %v478
  %v549 = vadd.f32 %v389, %v480
  %v550 = vadd.f32 %v390, %v482
  %v551 = vadd.f32 %v391, %v484
  %v552 = vadd.f32 %v392, %v486
  %v553 = vadd.f32 %v393, %v488
  %v554 = vadd.f32 %v394, %v490
  %v555 = vmul.f32 %v523, 0.0625
  %v556 = vmul.f32 %v524, 0.0625
  %v557 = vmul.f32 %v525, 0.0625
  %v558 = vmul.f32 %v526, 0.0625
  %v559 = vmul.f32 %v527, 0.0625
  %v560 = vmul.f32 %v528, 0.0625
  %v561 = vmul.f32 %v529, 0.0625
  %v562 = vmul.f32 %v530, 0.0625
  %v563 = vmul.f32 %v531, 0.0625
  %v564 = vmul.f32 %v532, 0.0625
  %v565 = vmul.f32 %v533, 0.0625
  %v566 = vmul.f32 %v534, 0.0625
  %v567 = vmul.f32 %v535, 0.0625
  %v568 = vmul.f32 %v536, 0.0625
  %v569 = vmul.f32 %v537, 0.0625
  %v570 = vmul.f32 %v538, 0.0625
  %v571 = vmul.f32 %v539, 0.0625
  %v572 = vmul.f32 %v540, 0.0625
  %v573 = vmul.f32 %v541, 0.0625
  %v574 = vmul.f32 %v542, 0.0625
  %v575 = vmul.f32 %v543, 0.0625
  %v576 = vmul.f32 %v544, 0.0625
  %v577 = vmul.f32 %v545, 0.0625
  %v578 = vmul.f32 %v546, 0.0625
  %v579 = vmul.f32 %v547, 0.0625
  %v580 = vmul.f32 %v548, 0.0625
  %v581 = vmul.f32 %v549, 0.0625
  %v582 = vmul.f32 %v550, 0.0625
  %v583 = vmul.f32 %v551, 0.0625
  %v584 = vmul.f32 %v552, 0.0625
  %v585 = vmul.f32 %v553, 0.0625
  %v586 = vmul.f32 %v554, 0.0625
  %vm587 = vcmask 7168
  %588 = vst.msk [vmem:[%s2] sm:$0xff] %vm587, %v555
  %vm589 = vcmask 4096
  %590 = vst.msk [vmem:[%s2 + $0x10] sm:$0x1f] %vm589, %v556
  %591 = vst.msk [vmem:[%s2 + $0x20] sm:$0xff] %vm587, %v571
  %592 = vst.msk [vmem:[%s2 + $0x30] sm:$0x1f] %vm589, %v572
  %597 = vrot.lane.b32.xlu0 %v555, 11
  %v598 = vpop.permute.xlu0 %597
  %599 = vrot.lane.b32.xlu0 %v556, 11
  %v600 = vpop.permute.xlu0 %599
  %601 = vrot.lane.b32.xlu0 %v571, 11
  %v602 = vpop.permute.xlu0 %601
  %603 = vrot.lane.b32.xlu0 %v572, 11
  %v604 = vpop.permute.xlu0 %603
  %vm609 = vcmask 105568
  %610 = vst.msk [vmem:[%s2] sm:$0xff] %vm609, %v598
  %vm611 = vcmask 102496
  %612 = vst.msk [vmem:[%s2 + $0x10] sm:$0x1f] %vm611, %v600
  %613 = vst.msk [vmem:[%s2 + $0x20] sm:$0xff] %vm609, %v602
  %614 = vst.msk [vmem:[%s2 + $0x30] sm:$0x1f] %vm611, %v604
  %615 = vrot.lane.b32.xlu0 %v555, 22
  %v616 = vpop.permute.xlu0 %615
  %617 = vrot.lane.b32.xlu0 %v556, 22
  %v618 = vpop.permute.xlu0 %617
  %619 = vrot.lane.b32.xlu0 %v571, 22
  %v620 = vpop.permute.xlu0 %619
  %621 = vrot.lane.b32.xlu0 %v572, 22
  %v622 = vpop.permute.xlu0 %621
  %vm627 = vcmask 203968
  %628 = vst.msk [vmem:[%s2] sm:$0xff] %vm627, %v616
  %vm629 = vcmask 200896
  %630 = vst.msk [vmem:[%s2 + $0x10] sm:$0x1f] %vm629, %v618
  %631 = vst.msk [vmem:[%s2 + $0x20] sm:$0xff] %vm627, %v620
  %632 = vst.msk [vmem:[%s2 + $0x30] sm:$0x1f] %vm629, %v622
  %633 = vrot.lane.b32.xlu0 %v555, 33
  %v634 = vpop.permute.xlu0 %633
  %635 = vrot.lane.b32.xlu0 %v556, 33
  %v636 = vpop.permute.xlu0 %635
  %637 = vrot.lane.b32.xlu0 %v571, 33
  %v638 = vpop.permute.xlu0 %637
  %639 = vrot.lane.b32.xlu0 %v572, 33
  %v640 = vpop.permute.xlu0 %639
  %vm645 = vcmask 302368
  %646 = vst.msk [vmem:[%s2] sm:$0xff] %vm645, %v634
  %vm647 = vcmask 299296
  %648 = vst.msk [vmem:[%s2 + $0x10] sm:$0x1f] %vm647, %v636
  %649 = vst.msk [vmem:[%s2 + $0x20] sm:$0xff] %vm645, %v638
  %650 = vst.msk [vmem:[%s2 + $0x30] sm:$0x1f] %vm647, %v640
  %651 = vrot.lane.b32.xlu0 %v555, 44
  %v652 = vpop.permute.xlu0 %651
  %653 = vrot.lane.b32.xlu0 %v556, 44
  %v654 = vpop.permute.xlu0 %653
  %655 = vrot.lane.b32.xlu0 %v571, 44
  %v656 = vpop.permute.xlu0 %655
  %657 = vrot.lane.b32.xlu0 %v572, 44
  %v658 = vpop.permute.xlu0 %657
  %vm663 = vcmask 400768
  %664 = vst.msk [vmem:[%s2] sm:$0xff] %vm663, %v652
  %vm665 = vcmask 397696
  %666 = vst.msk [vmem:[%s2 + $0x10] sm:$0x1f] %vm665, %v654
  %667 = vst.msk [vmem:[%s2 + $0x20] sm:$0xff] %vm663, %v656
  %668 = vst.msk [vmem:[%s2 + $0x30] sm:$0x1f] %vm665, %v658
  %669 = vrot.lane.b32.xlu0 %v555, 55
  %v670 = vpop.permute.xlu0 %669
  %671 = vrot.lane.b32.xlu0 %v556, 55
  %v672 = vpop.permute.xlu0 %671
  %673 = vrot.lane.b32.xlu0 %v571, 55
  %v674 = vpop.permute.xlu0 %673
  %675 = vrot.lane.b32.xlu0 %v572, 55
  %v676 = vpop.permute.xlu0 %675
  %vm681 = vcmask 499168
  %682 = vst.msk [vmem:[%s2] sm:$0xff] %vm681, %v670
  %vm683 = vcmask 496096
  %684 = vst.msk [vmem:[%s2 + $0x10] sm:$0x1f] %vm683, %v672
  %685 = vst.msk [vmem:[%s2 + $0x20] sm:$0xff] %vm681, %v674
  %686 = vst.msk [vmem:[%s2 + $0x30] sm:$0x1f] %vm683, %v676
  %687 = vrot.lane.b32.xlu0 %v555, 66
  %v688 = vpop.permute.xlu0 %687
  %689 = vrot.lane.b32.xlu0 %v556, 66
  %v690 = vpop.permute.xlu0 %689
  %691 = vrot.lane.b32.xlu0 %v571, 66
  %v692 = vpop.permute.xlu0 %691
  %693 = vrot.lane.b32.xlu0 %v572, 66
  %v694 = vpop.permute.xlu0 %693
  %vm699 = vcmask 597568
  %700 = vst.msk [vmem:[%s2] sm:$0xff] %vm699, %v688
  %vm701 = vcmask 594496
  %702 = vst.msk [vmem:[%s2 + $0x10] sm:$0x1f] %vm701, %v690
  %703 = vst.msk [vmem:[%s2 + $0x20] sm:$0xff] %vm699, %v692
  %704 = vst.msk [vmem:[%s2 + $0x30] sm:$0x1f] %vm701, %v694
  %705 = vrot.lane.b32.xlu0 %v555, 77
  %v706 = vpop.permute.xlu0 %705
  %707 = vrot.lane.b32.xlu0 %v556, 77
  %v708 = vpop.permute.xlu0 %707
  %709 = vrot.lane.b32.xlu0 %v571, 77
  %v710 = vpop.permute.xlu0 %709
  %711 = vrot.lane.b32.xlu0 %v572, 77
  %v712 = vpop.permute.xlu0 %711
  %vm717 = vcmask 695968
  %718 = vst.msk [vmem:[%s2] sm:$0xff] %vm717, %v706
  %vm719 = vcmask 692896
  %720 = vst.msk [vmem:[%s2 + $0x10] sm:$0x1f] %vm719, %v708
  %721 = vst.msk [vmem:[%s2 + $0x20] sm:$0xff] %vm717, %v710
  %722 = vst.msk [vmem:[%s2 + $0x30] sm:$0x1f] %vm719, %v712
  %723 = vrot.lane.b32.xlu0 %v555, 88
  %v724 = vpop.permute.xlu0 %723
  %725 = vrot.lane.b32.xlu0 %v556, 88
  %v726 = vpop.permute.xlu0 %725
  %727 = vrot.lane.b32.xlu0 %v571, 88
  %v728 = vpop.permute.xlu0 %727
  %729 = vrot.lane.b32.xlu0 %v572, 88
  %v730 = vpop.permute.xlu0 %729
  %vm735 = vcmask 794368
  %736 = vst.msk [vmem:[%s2] sm:$0xff] %vm735, %v724
  %vm737 = vcmask 791296
  %738 = vst.msk [vmem:[%s2 + $0x10] sm:$0x1f] %vm737, %v726
  %739 = vst.msk [vmem:[%s2 + $0x20] sm:$0xff] %vm735, %v728
  %740 = vst.msk [vmem:[%s2 + $0x30] sm:$0x1f] %vm737, %v730
  %741 = vrot.lane.b32.xlu0 %v555, 99
  %v742 = vpop.permute.xlu0 %741
  %743 = vrot.lane.b32.xlu0 %v556, 99
  %v744 = vpop.permute.xlu0 %743
  %745 = vrot.lane.b32.xlu0 %v571, 99
  %v746 = vpop.permute.xlu0 %745
  %747 = vrot.lane.b32.xlu0 %v572, 99
  %v748 = vpop.permute.xlu0 %747
  %vm753 = vcmask 892768
  %754 = vst.msk [vmem:[%s2] sm:$0xff] %vm753, %v742
  %vm755 = vcmask 889696
  %756 = vst.msk [vmem:[%s2 + $0x10] sm:$0x1f] %vm755, %v744
  %757 = vst.msk [vmem:[%s2 + $0x20] sm:$0xff] %vm753, %v746
  %758 = vst.msk [vmem:[%s2 + $0x30] sm:$0x1f] %vm755, %v748
  %759 = vrot.lane.b32.xlu0 %v555, 110
  %v760 = vpop.permute.xlu0 %759
  %761 = vrot.lane.b32.xlu0 %v556, 110
  %v762 = vpop.permute.xlu0 %761
  %763 = vrot.lane.b32.xlu0 %v571, 110
  %v764 = vpop.permute.xlu0 %763
  %765 = vrot.lane.b32.xlu0 %v572, 110
  %v766 = vpop.permute.xlu0 %765
  %vm771 = vcmask 991168
  %772 = vst.msk [vmem:[%s2] sm:$0xff] %vm771, %v760
  %vm773 = vcmask 988096
  %774 = vst.msk [vmem:[%s2 + $0x10] sm:$0x1f] %vm773, %v762
  %775 = vst.msk [vmem:[%s2 + $0x20] sm:$0xff] %vm771, %v764
  %776 = vst.msk [vmem:[%s2 + $0x30] sm:$0x1f] %vm773, %v766
  %777 = vrot.lane.b32.xlu0 %v555, 121
  %v778 = vpop.permute.xlu0 %777
  %779 = vrot.lane.b32.xlu0 %v556, 121
  %v780 = vpop.permute.xlu0 %779
  %781 = vrot.lane.b32.xlu0 %v571, 121
  %v782 = vpop.permute.xlu0 %781
  %783 = vrot.lane.b32.xlu0 %v572, 121
  %v784 = vpop.permute.xlu0 %783
  %vm789 = vcmask 39968
  %790 = vst.msk [vmem:[%s2 + $0x8] sm:$0xff] %vm789, %v778
  %vm791 = vcmask 36896
  %792 = vst.msk [vmem:[%s2 + $0x18] sm:$0x1f] %vm791, %v780
  %793 = vst.msk [vmem:[%s2 + $0x28] sm:$0xff] %vm789, %v782
  %794 = vst.msk [vmem:[%s2 + $0x38] sm:$0x1f] %vm791, %v784
  %795 = vrot.lane.b32.xlu0 %v555, 4
  %v796 = vpop.permute.xlu0 %795
  %797 = vrot.lane.b32.xlu0 %v556, 4
  %v798 = vpop.permute.xlu0 %797
  %799 = vrot.lane.b32.xlu0 %v571, 4
  %v800 = vpop.permute.xlu0 %799
  %801 = vrot.lane.b32.xlu0 %v572, 4
  %v802 = vpop.permute.xlu0 %801
  %vm807 = vcmask 138368
  %808 = vst.msk [vmem:[%s2 + $0x8] sm:$0xff] %vm807, %v796
  %vm809 = vcmask 135296
  %810 = vst.msk [vmem:[%s2 + $0x18] sm:$0x1f] %vm809, %v798
  %811 = vst.msk [vmem:[%s2 + $0x28] sm:$0xff] %vm807, %v800
  %812 = vst.msk [vmem:[%s2 + $0x38] sm:$0x1f] %vm809, %v802
  %817 = vrot.lane.b32.xlu0 %v557, 1
  %v818 = vpop.permute.xlu0 %817
  %819 = vrot.lane.b32.xlu0 %v558, 1
  %v820 = vpop.permute.xlu0 %819
  %821 = vrot.lane.b32.xlu0 %v573, 1
  %v822 = vpop.permute.xlu0 %821
  %823 = vrot.lane.b32.xlu0 %v574, 1
  %v824 = vpop.permute.xlu0 %823
  %vm829 = vcmask 15368
  %830 = vst.msk [vmem:[%s2] sm:$0xff] %vm829, %v818
  %vm831 = vcmask 12296
  %832 = vst.msk [vmem:[%s2 + $0x10] sm:$0x1f] %vm831, %v820
  %833 = vst.msk [vmem:[%s2 + $0x20] sm:$0xff] %vm829, %v822
  %834 = vst.msk [vmem:[%s2 + $0x30] sm:$0x1f] %vm831, %v824
  %835 = vrot.lane.b32.xlu0 %v557, 12
  %v836 = vpop.permute.xlu0 %835
  %837 = vrot.lane.b32.xlu0 %v558, 12
  %v838 = vpop.permute.xlu0 %837
  %839 = vrot.lane.b32.xlu0 %v573, 12
  %v840 = vpop.permute.xlu0 %839
  %841 = vrot.lane.b32.xlu0 %v574, 12
  %v842 = vpop.permute.xlu0 %841
  %vm847 = vcmask 113768
  %848 = vst.msk [vmem:[%s2] sm:$0xff] %vm847, %v836
  %vm849 = vcmask 110696
  %850 = vst.msk [vmem:[%s2 + $0x10] sm:$0x1f] %vm849, %v838
  %851 = vst.msk [vmem:[%s2 + $0x20] sm:$0xff] %vm847, %v840
  %852 = vst.msk [vmem:[%s2 + $0x30] sm:$0x1f] %vm849, %v842
  %853 = vrot.lane.b32.xlu0 %v557, 23
  %v854 = vpop.permute.xlu0 %853
  %855 = vrot.lane.b32.xlu0 %v558, 23
  %v856 = vpop.permute.xlu0 %855
  %857 = vrot.lane.b32.xlu0 %v573, 23
  %v858 = vpop.permute.xlu0 %857
  %859 = vrot.lane.b32.xlu0 %v574, 23
  %v860 = vpop.permute.xlu0 %859
  %vm865 = vcmask 212168
  %866 = vst.msk [vmem:[%s2] sm:$0xff] %vm865, %v854
  %vm867 = vcmask 209096
  %868 = vst.msk [vmem:[%s2 + $0x10] sm:$0x1f] %vm867, %v856
  %869 = vst.msk [vmem:[%s2 + $0x20] sm:$0xff] %vm865, %v858
  %870 = vst.msk [vmem:[%s2 + $0x30] sm:$0x1f] %vm867, %v860
  %871 = vrot.lane.b32.xlu0 %v557, 34
  %v872 = vpop.permute.xlu0 %871
  %873 = vrot.lane.b32.xlu0 %v558, 34
  %v874 = vpop.permute.xlu0 %873
  %875 = vrot.lane.b32.xlu0 %v573, 34
  %v876 = vpop.permute.xlu0 %875
  %877 = vrot.lane.b32.xlu0 %v574, 34
  %v878 = vpop.permute.xlu0 %877
  %vm883 = vcmask 310568
  %884 = vst.msk [vmem:[%s2] sm:$0xff] %vm883, %v872
  %vm885 = vcmask 307496
  %886 = vst.msk [vmem:[%s2 + $0x10] sm:$0x1f] %vm885, %v874
  %887 = vst.msk [vmem:[%s2 + $0x20] sm:$0xff] %vm883, %v876
  %888 = vst.msk [vmem:[%s2 + $0x30] sm:$0x1f] %vm885, %v878
  %889 = vrot.lane.b32.xlu0 %v557, 45
  %v890 = vpop.permute.xlu0 %889
  %891 = vrot.lane.b32.xlu0 %v558, 45
  %v892 = vpop.permute.xlu0 %891
  %893 = vrot.lane.b32.xlu0 %v573, 45
  %v894 = vpop.permute.xlu0 %893
  %895 = vrot.lane.b32.xlu0 %v574, 45
  %v896 = vpop.permute.xlu0 %895
  %vm901 = vcmask 408968
  %902 = vst.msk [vmem:[%s2] sm:$0xff] %vm901, %v890
  %vm903 = vcmask 405896
  %904 = vst.msk [vmem:[%s2 + $0x10] sm:$0x1f] %vm903, %v892
  %905 = vst.msk [vmem:[%s2 + $0x20] sm:$0xff] %vm901, %v894
  %906 = vst.msk [vmem:[%s2 + $0x30] sm:$0x1f] %vm903, %v896
  %907 = vrot.lane.b32.xlu0 %v557, 56
  %v908 = vpop.permute.xlu0 %907
  %909 = vrot.lane.b32.xlu0 %v558, 56
  %v910 = vpop.permute.xlu0 %909
  %911 = vrot.lane.b32.xlu0 %v573, 56
  %v912 = vpop.permute.xlu0 %911
  %913 = vrot.lane.b32.xlu0 %v574, 56
  %v914 = vpop.permute.xlu0 %913
  %vm919 = vcmask 507368
  %920 = vst.msk [vmem:[%s2] sm:$0xff] %vm919, %v908
  %vm921 = vcmask 504296
  %922 = vst.msk [vmem:[%s2 + $0x10] sm:$0x1f] %vm921, %v910
  %923 = vst.msk [vmem:[%s2 + $0x20] sm:$0xff] %vm919, %v912
  %924 = vst.msk [vmem:[%s2 + $0x30] sm:$0x1f] %vm921, %v914
  %925 = vrot.lane.b32.xlu0 %v557, 67
  %v926 = vpop.permute.xlu0 %925
  %927 = vrot.lane.b32.xlu0 %v558, 67
  %v928 = vpop.permute.xlu0 %927
  %929 = vrot.lane.b32.xlu0 %v573, 67
  %v930 = vpop.permute.xlu0 %929
  %931 = vrot.lane.b32.xlu0 %v574, 67
  %v932 = vpop.permute.xlu0 %931
  %vm937 = vcmask 605768
  %938 = vst.msk [vmem:[%s2] sm:$0xff] %vm937, %v926
  %vm939 = vcmask 602696
  %940 = vst.msk [vmem:[%s2 + $0x10] sm:$0x1f] %vm939, %v928
  %941 = vst.msk [vmem:[%s2 + $0x20] sm:$0xff] %vm937, %v930
  %942 = vst.msk [vmem:[%s2 + $0x30] sm:$0x1f] %vm939, %v932
  %943 = vrot.lane.b32.xlu0 %v557, 78
  %v944 = vpop.permute.xlu0 %943
  %945 = vrot.lane.b32.xlu0 %v558, 78
  %v946 = vpop.permute.xlu0 %945
  %947 = vrot.lane.b32.xlu0 %v573, 78
  %v948 = vpop.permute.xlu0 %947
  %949 = vrot.lane.b32.xlu0 %v574, 78
  %v950 = vpop.permute.xlu0 %949
  %vm955 = vcmask 704168
  %956 = vst.msk [vmem:[%s2] sm:$0xff] %vm955, %v944
  %vm957 = vcmask 701096
  %958 = vst.msk [vmem:[%s2 + $0x10] sm:$0x1f] %vm957, %v946
  %959 = vst.msk [vmem:[%s2 + $0x20] sm:$0xff] %vm955, %v948
  %960 = vst.msk [vmem:[%s2 + $0x30] sm:$0x1f] %vm957, %v950
  %961 = vrot.lane.b32.xlu0 %v557, 89
  %v962 = vpop.permute.xlu0 %961
  %963 = vrot.lane.b32.xlu0 %v558, 89
  %v964 = vpop.permute.xlu0 %963
  %965 = vrot.lane.b32.xlu0 %v573, 89
  %v966 = vpop.permute.xlu0 %965
  %967 = vrot.lane.b32.xlu0 %v574, 89
  %v968 = vpop.permute.xlu0 %967
  %vm973 = vcmask 802568
  %974 = vst.msk [vmem:[%s2] sm:$0xff] %vm973, %v962
  %vm975 = vcmask 799496
  %976 = vst.msk [vmem:[%s2 + $0x10] sm:$0x1f] %vm975, %v964
  %977 = vst.msk [vmem:[%s2 + $0x20] sm:$0xff] %vm973, %v966
  %978 = vst.msk [vmem:[%s2 + $0x30] sm:$0x1f] %vm975, %v968
  %979 = vrot.lane.b32.xlu0 %v557, 100
  %v980 = vpop.permute.xlu0 %979
  %981 = vrot.lane.b32.xlu0 %v558, 100
  %v982 = vpop.permute.xlu0 %981
  %983 = vrot.lane.b32.xlu0 %v573, 100
  %v984 = vpop.permute.xlu0 %983
  %985 = vrot.lane.b32.xlu0 %v574, 100
  %v986 = vpop.permute.xlu0 %985
  %vm991 = vcmask 900968
  %992 = vst.msk [vmem:[%s2] sm:$0xff] %vm991, %v980
  %vm993 = vcmask 897896
  %994 = vst.msk [vmem:[%s2 + $0x10] sm:$0x1f] %vm993, %v982
  %995 = vst.msk [vmem:[%s2 + $0x20] sm:$0xff] %vm991, %v984
  %996 = vst.msk [vmem:[%s2 + $0x30] sm:$0x1f] %vm993, %v986
  %997 = vrot.lane.b32.xlu0 %v557, 111
  %v998 = vpop.permute.xlu0 %997
  %999 = vrot.lane.b32.xlu0 %v558, 111
  %v1000 = vpop.permute.xlu0 %999
  %1001 = vrot.lane.b32.xlu0 %v573, 111
  %v1002 = vpop.permute.xlu0 %1001
  %1003 = vrot.lane.b32.xlu0 %v574, 111
  %v1004 = vpop.permute.xlu0 %1003
  %vm1009 = vcmask 999368
  %1010 = vst.msk [vmem:[%s2] sm:$0xff] %vm1009, %v998
  %vm1011 = vcmask 996296
  %1012 = vst.msk [vmem:[%s2 + $0x10] sm:$0x1f] %vm1011, %v1000
  %1013 = vst.msk [vmem:[%s2 + $0x20] sm:$0xff] %vm1009, %v1002
  %1014 = vst.msk [vmem:[%s2 + $0x30] sm:$0x1f] %vm1011, %v1004
  %1015 = vrot.lane.b32.xlu0 %v557, 122
  %v1016 = vpop.permute.xlu0 %1015
  %1017 = vrot.lane.b32.xlu0 %v558, 122
  %v1018 = vpop.permute.xlu0 %1017
  %1019 = vrot.lane.b32.xlu0 %v573, 122
  %v1020 = vpop.permute.xlu0 %1019
  %1021 = vrot.lane.b32.xlu0 %v574, 122
  %v1022 = vpop.permute.xlu0 %1021
  %vm1027 = vcmask 48168
  %1028 = vst.msk [vmem:[%s2 + $0x8] sm:$0xff] %vm1027, %v1016
  %vm1029 = vcmask 45096
  %1030 = vst.msk [vmem:[%s2 + $0x18] sm:$0x1f] %vm1029, %v1018
  %1031 = vst.msk [vmem:[%s2 + $0x28] sm:$0xff] %vm1027, %v1020
  %1032 = vst.msk [vmem:[%s2 + $0x38] sm:$0x1f] %vm1029, %v1022
  %1033 = vrot.lane.b32.xlu0 %v557, 5
  %v1034 = vpop.permute.xlu0 %1033
  %1035 = vrot.lane.b32.xlu0 %v558, 5
  %v1036 = vpop.permute.xlu0 %1035
  %1037 = vrot.lane.b32.xlu0 %v573, 5
  %v1038 = vpop.permute.xlu0 %1037
  %1039 = vrot.lane.b32.xlu0 %v574, 5
  %v1040 = vpop.permute.xlu0 %1039
  %vm1045 = vcmask 146568
  %1046 = vst.msk [vmem:[%s2 + $0x8] sm:$0xff] %vm1045, %v1034
  %vm1047 = vcmask 143496
  %1048 = vst.msk [vmem:[%s2 + $0x18] sm:$0x1f] %vm1047, %v1036
  %1049 = vst.msk [vmem:[%s2 + $0x28] sm:$0xff] %vm1045, %v1038
  %1050 = vst.msk [vmem:[%s2 + $0x38] sm:$0x1f] %vm1047, %v1040
  %1055 = vrot.lane.b32.xlu0 %v559, 2
  %v1056 = vpop.permute.xlu0 %1055
  %1057 = vrot.lane.b32.xlu0 %v560, 2
  %v1058 = vpop.permute.xlu0 %1057
  %1059 = vrot.lane.b32.xlu0 %v575, 2
  %v1060 = vpop.permute.xlu0 %1059
  %1061 = vrot.lane.b32.xlu0 %v576, 2
  %v1062 = vpop.permute.xlu0 %1061
  %vm1067 = vcmask 23568
  %1068 = vst.msk [vmem:[%s2] sm:$0xff] %vm1067, %v1056
  %vm1069 = vcmask 20496
  %1070 = vst.msk [vmem:[%s2 + $0x10] sm:$0x1f] %vm1069, %v1058
  %1071 = vst.msk [vmem:[%s2 + $0x20] sm:$0xff] %vm1067, %v1060
  %1072 = vst.msk [vmem:[%s2 + $0x30] sm:$0x1f] %vm1069, %v1062
  %1073 = vrot.lane.b32.xlu0 %v559, 13
  %v1074 = vpop.permute.xlu0 %1073
  %1075 = vrot.lane.b32.xlu0 %v560, 13
  %v1076 = vpop.permute.xlu0 %1075
  %1077 = vrot.lane.b32.xlu0 %v575, 13
  %v1078 = vpop.permute.xlu0 %1077
  %1079 = vrot.lane.b32.xlu0 %v576, 13
  %v1080 = vpop.permute.xlu0 %1079
  %vm1085 = vcmask 121968
  %1086 = vst.msk [vmem:[%s2] sm:$0xff] %vm1085, %v1074
  %vm1087 = vcmask 118896
  %1088 = vst.msk [vmem:[%s2 + $0x10] sm:$0x1f] %vm1087, %v1076
  %1089 = vst.msk [vmem:[%s2 + $0x20] sm:$0xff] %vm1085, %v1078
  %1090 = vst.msk [vmem:[%s2 + $0x30] sm:$0x1f] %vm1087, %v1080
  %1091 = vrot.lane.b32.xlu0 %v559, 24
  %v1092 = vpop.permute.xlu0 %1091
  %1093 = vrot.lane.b32.xlu0 %v560, 24
  %v1094 = vpop.permute.xlu0 %1093
  %1095 = vrot.lane.b32.xlu0 %v575, 24
  %v1096 = vpop.permute.xlu0 %1095
  %1097 = vrot.lane.b32.xlu0 %v576, 24
  %v1098 = vpop.permute.xlu0 %1097
  %vm1103 = vcmask 220368
  %1104 = vst.msk [vmem:[%s2] sm:$0xff] %vm1103, %v1092
  %vm1105 = vcmask 217296
  %1106 = vst.msk [vmem:[%s2 + $0x10] sm:$0x1f] %vm1105, %v1094
  %1107 = vst.msk [vmem:[%s2 + $0x20] sm:$0xff] %vm1103, %v1096
  %1108 = vst.msk [vmem:[%s2 + $0x30] sm:$0x1f] %vm1105, %v1098
  %1109 = vrot.lane.b32.xlu0 %v559, 35
  %v1110 = vpop.permute.xlu0 %1109
  %1111 = vrot.lane.b32.xlu0 %v560, 35
  %v1112 = vpop.permute.xlu0 %1111
  %1113 = vrot.lane.b32.xlu0 %v575, 35
  %v1114 = vpop.permute.xlu0 %1113
  %1115 = vrot.lane.b32.xlu0 %v576, 35
  %v1116 = vpop.permute.xlu0 %1115
  %vm1121 = vcmask 318768
  %1122 = vst.msk [vmem:[%s2] sm:$0xff] %vm1121, %v1110
  %vm1123 = vcmask 315696
  %1124 = vst.msk [vmem:[%s2 + $0x10] sm:$0x1f] %vm1123, %v1112
  %1125 = vst.msk [vmem:[%s2 + $0x20] sm:$0xff] %vm1121, %v1114
  %1126 = vst.msk [vmem:[%s2 + $0x30] sm:$0x1f] %vm1123, %v1116
  %1127 = vrot.lane.b32.xlu0 %v559, 46
  %v1128 = vpop.permute.xlu0 %1127
  %1129 = vrot.lane.b32.xlu0 %v560, 46
  %v1130 = vpop.permute.xlu0 %1129
  %1131 = vrot.lane.b32.xlu0 %v575, 46
  %v1132 = vpop.permute.xlu0 %1131
  %1133 = vrot.lane.b32.xlu0 %v576, 46
  %v1134 = vpop.permute.xlu0 %1133
  %vm1139 = vcmask 417168
  %1140 = vst.msk [vmem:[%s2] sm:$0xff] %vm1139, %v1128
  %vm1141 = vcmask 414096
  %1142 = vst.msk [vmem:[%s2 + $0x10] sm:$0x1f] %vm1141, %v1130
  %1143 = vst.msk [vmem:[%s2 + $0x20] sm:$0xff] %vm1139, %v1132
  %1144 = vst.msk [vmem:[%s2 + $0x30] sm:$0x1f] %vm1141, %v1134
  %1145 = vrot.lane.b32.xlu0 %v559, 57
  %v1146 = vpop.permute.xlu0 %1145
  %1147 = vrot.lane.b32.xlu0 %v560, 57
  %v1148 = vpop.permute.xlu0 %1147
  %1149 = vrot.lane.b32.xlu0 %v575, 57
  %v1150 = vpop.permute.xlu0 %1149
  %1151 = vrot.lane.b32.xlu0 %v576, 57
  %v1152 = vpop.permute.xlu0 %1151
  %vm1157 = vcmask 515568
  %1158 = vst.msk [vmem:[%s2] sm:$0xff] %vm1157, %v1146
  %vm1159 = vcmask 512496
  %1160 = vst.msk [vmem:[%s2 + $0x10] sm:$0x1f] %vm1159, %v1148
  %1161 = vst.msk [vmem:[%s2 + $0x20] sm:$0xff] %vm1157, %v1150
  %1162 = vst.msk [vmem:[%s2 + $0x30] sm:$0x1f] %vm1159, %v1152
  %1163 = vrot.lane.b32.xlu0 %v559, 68
  %v1164 = vpop.permute.xlu0 %1163
  %1165 = vrot.lane.b32.xlu0 %v560, 68
  %v1166 = vpop.permute.xlu0 %1165
  %1167 = vrot.lane.b32.xlu0 %v575, 68
  %v1168 = vpop.permute.xlu0 %1167
  %1169 = vrot.lane.b32.xlu0 %v576, 68
  %v1170 = vpop.permute.xlu0 %1169
  %vm1175 = vcmask 613968
  %1176 = vst.msk [vmem:[%s2] sm:$0xff] %vm1175, %v1164
  %vm1177 = vcmask 610896
  %1178 = vst.msk [vmem:[%s2 + $0x10] sm:$0x1f] %vm1177, %v1166
  %1179 = vst.msk [vmem:[%s2 + $0x20] sm:$0xff] %vm1175, %v1168
  %1180 = vst.msk [vmem:[%s2 + $0x30] sm:$0x1f] %vm1177, %v1170
  %1181 = vrot.lane.b32.xlu0 %v559, 79
  %v1182 = vpop.permute.xlu0 %1181
  %1183 = vrot.lane.b32.xlu0 %v560, 79
  %v1184 = vpop.permute.xlu0 %1183
  %1185 = vrot.lane.b32.xlu0 %v575, 79
  %v1186 = vpop.permute.xlu0 %1185
  %1187 = vrot.lane.b32.xlu0 %v576, 79
  %v1188 = vpop.permute.xlu0 %1187
  %vm1193 = vcmask 712368
  %1194 = vst.msk [vmem:[%s2] sm:$0xff] %vm1193, %v1182
  %vm1195 = vcmask 709296
  %1196 = vst.msk [vmem:[%s2 + $0x10] sm:$0x1f] %vm1195, %v1184
  %1197 = vst.msk [vmem:[%s2 + $0x20] sm:$0xff] %vm1193, %v1186
  %1198 = vst.msk [vmem:[%s2 + $0x30] sm:$0x1f] %vm1195, %v1188
  %1199 = vrot.lane.b32.xlu0 %v559, 90
  %v1200 = vpop.permute.xlu0 %1199
  %1201 = vrot.lane.b32.xlu0 %v560, 90
  %v1202 = vpop.permute.xlu0 %1201
  %1203 = vrot.lane.b32.xlu0 %v575, 90
  %v1204 = vpop.permute.xlu0 %1203
  %1205 = vrot.lane.b32.xlu0 %v576, 90
  %v1206 = vpop.permute.xlu0 %1205
  %vm1211 = vcmask 810768
  %1212 = vst.msk [vmem:[%s2] sm:$0xff] %vm1211, %v1200
  %vm1213 = vcmask 807696
  %1214 = vst.msk [vmem:[%s2 + $0x10] sm:$0x1f] %vm1213, %v1202
  %1215 = vst.msk [vmem:[%s2 + $0x20] sm:$0xff] %vm1211, %v1204
  %1216 = vst.msk [vmem:[%s2 + $0x30] sm:$0x1f] %vm1213, %v1206
  %1217 = vrot.lane.b32.xlu0 %v559, 101
  %v1218 = vpop.permute.xlu0 %1217
  %1219 = vrot.lane.b32.xlu0 %v560, 101
  %v1220 = vpop.permute.xlu0 %1219
  %1221 = vrot.lane.b32.xlu0 %v575, 101
  %v1222 = vpop.permute.xlu0 %1221
  %1223 = vrot.lane.b32.xlu0 %v576, 101
  %v1224 = vpop.permute.xlu0 %1223
  %vm1229 = vcmask 909168
  %1230 = vst.msk [vmem:[%s2] sm:$0xff] %vm1229, %v1218
  %vm1231 = vcmask 906096
  %1232 = vst.msk [vmem:[%s2 + $0x10] sm:$0x1f] %vm1231, %v1220
  %1233 = vst.msk [vmem:[%s2 + $0x20] sm:$0xff] %vm1229, %v1222
  %1234 = vst.msk [vmem:[%s2 + $0x30] sm:$0x1f] %vm1231, %v1224
  %1235 = vrot.lane.b32.xlu0 %v559, 112
  %v1236 = vpop.permute.xlu0 %1235
  %1237 = vrot.lane.b32.xlu0 %v560, 112
  %v1238 = vpop.permute.xlu0 %1237
  %1239 = vrot.lane.b32.xlu0 %v575, 112
  %v1240 = vpop.permute.xlu0 %1239
  %1241 = vrot.lane.b32.xlu0 %v576, 112
  %v1242 = vpop.permute.xlu0 %1241
  %vm1247 = vcmask 1007568
  %1248 = vst.msk [vmem:[%s2] sm:$0xff] %vm1247, %v1236
  %vm1249 = vcmask 1004496
  %1250 = vst.msk [vmem:[%s2 + $0x10] sm:$0x1f] %vm1249, %v1238
  %1251 = vst.msk [vmem:[%s2 + $0x20] sm:$0xff] %vm1247, %v1240
  %1252 = vst.msk [vmem:[%s2 + $0x30] sm:$0x1f] %vm1249, %v1242
  %1253 = vrot.lane.b32.xlu0 %v559, 123
  %v1254 = vpop.permute.xlu0 %1253
  %1255 = vrot.lane.b32.xlu0 %v560, 123
  %v1256 = vpop.permute.xlu0 %1255
  %1257 = vrot.lane.b32.xlu0 %v575, 123
  %v1258 = vpop.permute.xlu0 %1257
  %1259 = vrot.lane.b32.xlu0 %v576, 123
  %v1260 = vpop.permute.xlu0 %1259
  %vm1265 = vcmask 56368
  %1266 = vst.msk [vmem:[%s2 + $0x8] sm:$0xff] %vm1265, %v1254
  %vm1267 = vcmask 53296
  %1268 = vst.msk [vmem:[%s2 + $0x18] sm:$0x1f] %vm1267, %v1256
  %1269 = vst.msk [vmem:[%s2 + $0x28] sm:$0xff] %vm1265, %v1258
  %1270 = vst.msk [vmem:[%s2 + $0x38] sm:$0x1f] %vm1267, %v1260
  %1271 = vrot.lane.b32.xlu0 %v559, 6
  %v1272 = vpop.permute.xlu0 %1271
  %1273 = vrot.lane.b32.xlu0 %v560, 6
  %v1274 = vpop.permute.xlu0 %1273
  %1275 = vrot.lane.b32.xlu0 %v575, 6
  %v1276 = vpop.permute.xlu0 %1275
  %1277 = vrot.lane.b32.xlu0 %v576, 6
  %v1278 = vpop.permute.xlu0 %1277
  %vm1283 = vcmask 154768
  %1284 = vst.msk [vmem:[%s2 + $0x8] sm:$0xff] %vm1283, %v1272
  %vm1285 = vcmask 151696
  %1286 = vst.msk [vmem:[%s2 + $0x18] sm:$0x1f] %vm1285, %v1274
  %1287 = vst.msk [vmem:[%s2 + $0x28] sm:$0xff] %vm1283, %v1276
  %1288 = vst.msk [vmem:[%s2 + $0x38] sm:$0x1f] %vm1285, %v1278
  %1293 = vrot.lane.b32.xlu0 %v561, 3
  %v1294 = vpop.permute.xlu0 %1293
  %1295 = vrot.lane.b32.xlu0 %v562, 3
  %v1296 = vpop.permute.xlu0 %1295
  %1297 = vrot.lane.b32.xlu0 %v577, 3
  %v1298 = vpop.permute.xlu0 %1297
  %1299 = vrot.lane.b32.xlu0 %v578, 3
  %v1300 = vpop.permute.xlu0 %1299
  %vm1305 = vcmask 31768
  %1306 = vst.msk [vmem:[%s2] sm:$0xff] %vm1305, %v1294
  %vm1307 = vcmask 28696
  %1308 = vst.msk [vmem:[%s2 + $0x10] sm:$0x1f] %vm1307, %v1296
  %1309 = vst.msk [vmem:[%s2 + $0x20] sm:$0xff] %vm1305, %v1298
  %1310 = vst.msk [vmem:[%s2 + $0x30] sm:$0x1f] %vm1307, %v1300
  %1311 = vrot.lane.b32.xlu0 %v561, 14
  %v1312 = vpop.permute.xlu0 %1311
  %1313 = vrot.lane.b32.xlu0 %v562, 14
  %v1314 = vpop.permute.xlu0 %1313
  %1315 = vrot.lane.b32.xlu0 %v577, 14
  %v1316 = vpop.permute.xlu0 %1315
  %1317 = vrot.lane.b32.xlu0 %v578, 14
  %v1318 = vpop.permute.xlu0 %1317
  %vm1323 = vcmask 130168
  %1324 = vst.msk [vmem:[%s2] sm:$0xff] %vm1323, %v1312
  %vm1325 = vcmask 127096
  %1326 = vst.msk [vmem:[%s2 + $0x10] sm:$0x1f] %vm1325, %v1314
  %1327 = vst.msk [vmem:[%s2 + $0x20] sm:$0xff] %vm1323, %v1316
  %1328 = vst.msk [vmem:[%s2 + $0x30] sm:$0x1f] %vm1325, %v1318
  %1329 = vrot.lane.b32.xlu0 %v561, 25
  %v1330 = vpop.permute.xlu0 %1329
  %1331 = vrot.lane.b32.xlu0 %v562, 25
  %v1332 = vpop.permute.xlu0 %1331
  %1333 = vrot.lane.b32.xlu0 %v577, 25
  %v1334 = vpop.permute.xlu0 %1333
  %1335 = vrot.lane.b32.xlu0 %v578, 25
  %v1336 = vpop.permute.xlu0 %1335
  %vm1341 = vcmask 228568
  %1342 = vst.msk [vmem:[%s2] sm:$0xff] %vm1341, %v1330
  %vm1343 = vcmask 225496
  %1344 = vst.msk [vmem:[%s2 + $0x10] sm:$0x1f] %vm1343, %v1332
  %1345 = vst.msk [vmem:[%s2 + $0x20] sm:$0xff] %vm1341, %v1334
  %1346 = vst.msk [vmem:[%s2 + $0x30] sm:$0x1f] %vm1343, %v1336
  %1347 = vrot.lane.b32.xlu0 %v561, 36
  %v1348 = vpop.permute.xlu0 %1347
  %1349 = vrot.lane.b32.xlu0 %v562, 36
  %v1350 = vpop.permute.xlu0 %1349
  %1351 = vrot.lane.b32.xlu0 %v577, 36
  %v1352 = vpop.permute.xlu0 %1351
  %1353 = vrot.lane.b32.xlu0 %v578, 36
  %v1354 = vpop.permute.xlu0 %1353
  %vm1359 = vcmask 326968
  %1360 = vst.msk [vmem:[%s2] sm:$0xff] %vm1359, %v1348
  %vm1361 = vcmask 323896
  %1362 = vst.msk [vmem:[%s2 + $0x10] sm:$0x1f] %vm1361, %v1350
  %1363 = vst.msk [vmem:[%s2 + $0x20] sm:$0xff] %vm1359, %v1352
  %1364 = vst.msk [vmem:[%s2 + $0x30] sm:$0x1f] %vm1361, %v1354
  %1365 = vrot.lane.b32.xlu0 %v561, 47
  %v1366 = vpop.permute.xlu0 %1365
  %1367 = vrot.lane.b32.xlu0 %v562, 47
  %v1368 = vpop.permute.xlu0 %1367
  %1369 = vrot.lane.b32.xlu0 %v577, 47
  %v1370 = vpop.permute.xlu0 %1369
  %1371 = vrot.lane.b32.xlu0 %v578, 47
  %v1372 = vpop.permute.xlu0 %1371
  %vm1377 = vcmask 425368
  %1378 = vst.msk [vmem:[%s2] sm:$0xff] %vm1377, %v1366
  %vm1379 = vcmask 422296
  %1380 = vst.msk [vmem:[%s2 + $0x10] sm:$0x1f] %vm1379, %v1368
  %1381 = vst.msk [vmem:[%s2 + $0x20] sm:$0xff] %vm1377, %v1370
  %1382 = vst.msk [vmem:[%s2 + $0x30] sm:$0x1f] %vm1379, %v1372
  %1383 = vrot.lane.b32.xlu0 %v561, 58
  %v1384 = vpop.permute.xlu0 %1383
  %1385 = vrot.lane.b32.xlu0 %v562, 58
  %v1386 = vpop.permute.xlu0 %1385
  %1387 = vrot.lane.b32.xlu0 %v577, 58
  %v1388 = vpop.permute.xlu0 %1387
  %1389 = vrot.lane.b32.xlu0 %v578, 58
  %v1390 = vpop.permute.xlu0 %1389
  %vm1395 = vcmask 523768
  %1396 = vst.msk [vmem:[%s2] sm:$0xff] %vm1395, %v1384
  %vm1397 = vcmask 520696
  %1398 = vst.msk [vmem:[%s2 + $0x10] sm:$0x1f] %vm1397, %v1386
  %1399 = vst.msk [vmem:[%s2 + $0x20] sm:$0xff] %vm1395, %v1388
  %1400 = vst.msk [vmem:[%s2 + $0x30] sm:$0x1f] %vm1397, %v1390
  %1401 = vrot.lane.b32.xlu0 %v561, 69
  %v1402 = vpop.permute.xlu0 %1401
  %1403 = vrot.lane.b32.xlu0 %v562, 69
  %v1404 = vpop.permute.xlu0 %1403
  %1405 = vrot.lane.b32.xlu0 %v577, 69
  %v1406 = vpop.permute.xlu0 %1405
  %1407 = vrot.lane.b32.xlu0 %v578, 69
  %v1408 = vpop.permute.xlu0 %1407
  %vm1413 = vcmask 622168
  %1414 = vst.msk [vmem:[%s2] sm:$0xff] %vm1413, %v1402
  %vm1415 = vcmask 619096
  %1416 = vst.msk [vmem:[%s2 + $0x10] sm:$0x1f] %vm1415, %v1404
  %1417 = vst.msk [vmem:[%s2 + $0x20] sm:$0xff] %vm1413, %v1406
  %1418 = vst.msk [vmem:[%s2 + $0x30] sm:$0x1f] %vm1415, %v1408
  %1419 = vrot.lane.b32.xlu0 %v561, 80
  %v1420 = vpop.permute.xlu0 %1419
  %1421 = vrot.lane.b32.xlu0 %v562, 80
  %v1422 = vpop.permute.xlu0 %1421
  %1423 = vrot.lane.b32.xlu0 %v577, 80
  %v1424 = vpop.permute.xlu0 %1423
  %1425 = vrot.lane.b32.xlu0 %v578, 80
  %v1426 = vpop.permute.xlu0 %1425
  %vm1431 = vcmask 720568
  %1432 = vst.msk [vmem:[%s2] sm:$0xff] %vm1431, %v1420
  %vm1433 = vcmask 717496
  %1434 = vst.msk [vmem:[%s2 + $0x10] sm:$0x1f] %vm1433, %v1422
  %1435 = vst.msk [vmem:[%s2 + $0x20] sm:$0xff] %vm1431, %v1424
  %1436 = vst.msk [vmem:[%s2 + $0x30] sm:$0x1f] %vm1433, %v1426
  %1437 = vrot.lane.b32.xlu0 %v561, 91
  %v1438 = vpop.permute.xlu0 %1437
  %1439 = vrot.lane.b32.xlu0 %v562, 91
  %v1440 = vpop.permute.xlu0 %1439
  %1441 = vrot.lane.b32.xlu0 %v577, 91
  %v1442 = vpop.permute.xlu0 %1441
  %1443 = vrot.lane.b32.xlu0 %v578, 91
  %v1444 = vpop.permute.xlu0 %1443
  %vm1449 = vcmask 818968
  %1450 = vst.msk [vmem:[%s2] sm:$0xff] %vm1449, %v1438
  %vm1451 = vcmask 815896
  %1452 = vst.msk [vmem:[%s2 + $0x10] sm:$0x1f] %vm1451, %v1440
  %1453 = vst.msk [vmem:[%s2 + $0x20] sm:$0xff] %vm1449, %v1442
  %1454 = vst.msk [vmem:[%s2 + $0x30] sm:$0x1f] %vm1451, %v1444
  %1455 = vrot.lane.b32.xlu0 %v561, 102
  %v1456 = vpop.permute.xlu0 %1455
  %1457 = vrot.lane.b32.xlu0 %v562, 102
  %v1458 = vpop.permute.xlu0 %1457
  %1459 = vrot.lane.b32.xlu0 %v577, 102
  %v1460 = vpop.permute.xlu0 %1459
  %1461 = vrot.lane.b32.xlu0 %v578, 102
  %v1462 = vpop.permute.xlu0 %1461
  %vm1467 = vcmask 917368
  %1468 = vst.msk [vmem:[%s2] sm:$0xff] %vm1467, %v1456
  %vm1469 = vcmask 914296
  %1470 = vst.msk [vmem:[%s2 + $0x10] sm:$0x1f] %vm1469, %v1458
  %1471 = vst.msk [vmem:[%s2 + $0x20] sm:$0xff] %vm1467, %v1460
  %1472 = vst.msk [vmem:[%s2 + $0x30] sm:$0x1f] %vm1469, %v1462
  %1473 = vrot.lane.b32.xlu0 %v561, 113
  %v1474 = vpop.permute.xlu0 %1473
  %1475 = vrot.lane.b32.xlu0 %v562, 113
  %v1476 = vpop.permute.xlu0 %1475
  %1477 = vrot.lane.b32.xlu0 %v577, 113
  %v1478 = vpop.permute.xlu0 %1477
  %1479 = vrot.lane.b32.xlu0 %v578, 113
  %v1480 = vpop.permute.xlu0 %1479
  %vm1485 = vcmask 1015768
  %1486 = vst.msk [vmem:[%s2] sm:$0xff] %vm1485, %v1474
  %vm1487 = vcmask 1012696
  %1488 = vst.msk [vmem:[%s2 + $0x10] sm:$0x1f] %vm1487, %v1476
  %1489 = vst.msk [vmem:[%s2 + $0x20] sm:$0xff] %vm1485, %v1478
  %1490 = vst.msk [vmem:[%s2 + $0x30] sm:$0x1f] %vm1487, %v1480
  %1491 = vrot.lane.b32.xlu0 %v561, 124
  %v1492 = vpop.permute.xlu0 %1491
  %1493 = vrot.lane.b32.xlu0 %v562, 124
  %v1494 = vpop.permute.xlu0 %1493
  %1495 = vrot.lane.b32.xlu0 %v577, 124
  %v1496 = vpop.permute.xlu0 %1495
  %1497 = vrot.lane.b32.xlu0 %v578, 124
  %v1498 = vpop.permute.xlu0 %1497
  %vm1503 = vcmask 64568
  %1504 = vst.msk [vmem:[%s2 + $0x8] sm:$0xff] %vm1503, %v1492
  %vm1505 = vcmask 61496
  %1506 = vst.msk [vmem:[%s2 + $0x18] sm:$0x1f] %vm1505, %v1494
  %1507 = vst.msk [vmem:[%s2 + $0x28] sm:$0xff] %vm1503, %v1496
  %1508 = vst.msk [vmem:[%s2 + $0x38] sm:$0x1f] %vm1505, %v1498
  %1509 = vrot.lane.b32.xlu0 %v561, 7
  %v1510 = vpop.permute.xlu0 %1509
  %1511 = vrot.lane.b32.xlu0 %v562, 7
  %v1512 = vpop.permute.xlu0 %1511
  %1513 = vrot.lane.b32.xlu0 %v577, 7
  %v1514 = vpop.permute.xlu0 %1513
  %1515 = vrot.lane.b32.xlu0 %v578, 7
  %v1516 = vpop.permute.xlu0 %1515
  %vm1521 = vcmask 162968
  %1522 = vst.msk [vmem:[%s2 + $0x8] sm:$0xff] %vm1521, %v1510
  %vm1523 = vcmask 159896
  %1524 = vst.msk [vmem:[%s2 + $0x18] sm:$0x1f] %vm1523, %v1512
  %1525 = vst.msk [vmem:[%s2 + $0x28] sm:$0xff] %vm1521, %v1514
  %1526 = vst.msk [vmem:[%s2 + $0x38] sm:$0x1f] %vm1523, %v1516
  %1531 = vrot.lane.b32.xlu0 %v563, 4
  %v1532 = vpop.permute.xlu0 %1531
  %1533 = vrot.lane.b32.xlu0 %v564, 4
  %v1534 = vpop.permute.xlu0 %1533
  %1535 = vrot.lane.b32.xlu0 %v579, 4
  %v1536 = vpop.permute.xlu0 %1535
  %1537 = vrot.lane.b32.xlu0 %v580, 4
  %v1538 = vpop.permute.xlu0 %1537
  %1543 = vst.msk [vmem:[%s2] sm:$0xff] %vm789, %v1532
  %1544 = vst.msk [vmem:[%s2 + $0x10] sm:$0x1f] %vm791, %v1534
  %1545 = vst.msk [vmem:[%s2 + $0x20] sm:$0xff] %vm789, %v1536
  %1546 = vst.msk [vmem:[%s2 + $0x30] sm:$0x1f] %vm791, %v1538
  %1547 = vrot.lane.b32.xlu0 %v563, 15
  %v1548 = vpop.permute.xlu0 %1547
  %1549 = vrot.lane.b32.xlu0 %v564, 15
  %v1550 = vpop.permute.xlu0 %1549
  %1551 = vrot.lane.b32.xlu0 %v579, 15
  %v1552 = vpop.permute.xlu0 %1551
  %1553 = vrot.lane.b32.xlu0 %v580, 15
  %v1554 = vpop.permute.xlu0 %1553
  %1559 = vst.msk [vmem:[%s2] sm:$0xff] %vm807, %v1548
  %1560 = vst.msk [vmem:[%s2 + $0x10] sm:$0x1f] %vm809, %v1550
  %1561 = vst.msk [vmem:[%s2 + $0x20] sm:$0xff] %vm807, %v1552
  %1562 = vst.msk [vmem:[%s2 + $0x30] sm:$0x1f] %vm809, %v1554
  %1563 = vrot.lane.b32.xlu0 %v563, 26
  %v1564 = vpop.permute.xlu0 %1563
  %1565 = vrot.lane.b32.xlu0 %v564, 26
  %v1566 = vpop.permute.xlu0 %1565
  %1567 = vrot.lane.b32.xlu0 %v579, 26
  %v1568 = vpop.permute.xlu0 %1567
  %1569 = vrot.lane.b32.xlu0 %v580, 26
  %v1570 = vpop.permute.xlu0 %1569
  %vm1575 = vcmask 236768
  %1576 = vst.msk [vmem:[%s2] sm:$0xff] %vm1575, %v1564
  %vm1577 = vcmask 233696
  %1578 = vst.msk [vmem:[%s2 + $0x10] sm:$0x1f] %vm1577, %v1566
  %1579 = vst.msk [vmem:[%s2 + $0x20] sm:$0xff] %vm1575, %v1568
  %1580 = vst.msk [vmem:[%s2 + $0x30] sm:$0x1f] %vm1577, %v1570
  %1581 = vrot.lane.b32.xlu0 %v563, 37
  %v1582 = vpop.permute.xlu0 %1581
  %1583 = vrot.lane.b32.xlu0 %v564, 37
  %v1584 = vpop.permute.xlu0 %1583
  %1585 = vrot.lane.b32.xlu0 %v579, 37
  %v1586 = vpop.permute.xlu0 %1585
  %1587 = vrot.lane.b32.xlu0 %v580, 37
  %v1588 = vpop.permute.xlu0 %1587
  %vm1593 = vcmask 335168
  %1594 = vst.msk [vmem:[%s2] sm:$0xff] %vm1593, %v1582
  %vm1595 = vcmask 332096
  %1596 = vst.msk [vmem:[%s2 + $0x10] sm:$0x1f] %vm1595, %v1584
  %1597 = vst.msk [vmem:[%s2 + $0x20] sm:$0xff] %vm1593, %v1586
  %1598 = vst.msk [vmem:[%s2 + $0x30] sm:$0x1f] %vm1595, %v1588
  %1599 = vrot.lane.b32.xlu0 %v563, 48
  %v1600 = vpop.permute.xlu0 %1599
  %1601 = vrot.lane.b32.xlu0 %v564, 48
  %v1602 = vpop.permute.xlu0 %1601
  %1603 = vrot.lane.b32.xlu0 %v579, 48
  %v1604 = vpop.permute.xlu0 %1603
  %1605 = vrot.lane.b32.xlu0 %v580, 48
  %v1606 = vpop.permute.xlu0 %1605
  %vm1611 = vcmask 433568
  %1612 = vst.msk [vmem:[%s2] sm:$0xff] %vm1611, %v1600
  %vm1613 = vcmask 430496
  %1614 = vst.msk [vmem:[%s2 + $0x10] sm:$0x1f] %vm1613, %v1602
  %1615 = vst.msk [vmem:[%s2 + $0x20] sm:$0xff] %vm1611, %v1604
  %1616 = vst.msk [vmem:[%s2 + $0x30] sm:$0x1f] %vm1613, %v1606
  %1617 = vrot.lane.b32.xlu0 %v563, 59
  %v1618 = vpop.permute.xlu0 %1617
  %1619 = vrot.lane.b32.xlu0 %v564, 59
  %v1620 = vpop.permute.xlu0 %1619
  %1621 = vrot.lane.b32.xlu0 %v579, 59
  %v1622 = vpop.permute.xlu0 %1621
  %1623 = vrot.lane.b32.xlu0 %v580, 59
  %v1624 = vpop.permute.xlu0 %1623
  %vm1629 = vcmask 531968
  %1630 = vst.msk [vmem:[%s2] sm:$0xff] %vm1629, %v1618
  %vm1631 = vcmask 528896
  %1632 = vst.msk [vmem:[%s2 + $0x10] sm:$0x1f] %vm1631, %v1620
  %1633 = vst.msk [vmem:[%s2 + $0x20] sm:$0xff] %vm1629, %v1622
  %1634 = vst.msk [vmem:[%s2 + $0x30] sm:$0x1f] %vm1631, %v1624
  %1635 = vrot.lane.b32.xlu0 %v563, 70
  %v1636 = vpop.permute.xlu0 %1635
  %1637 = vrot.lane.b32.xlu0 %v564, 70
  %v1638 = vpop.permute.xlu0 %1637
  %1639 = vrot.lane.b32.xlu0 %v579, 70
  %v1640 = vpop.permute.xlu0 %1639
  %1641 = vrot.lane.b32.xlu0 %v580, 70
  %v1642 = vpop.permute.xlu0 %1641
  %vm1647 = vcmask 630368
  %1648 = vst.msk [vmem:[%s2] sm:$0xff] %vm1647, %v1636
  %vm1649 = vcmask 627296
  %1650 = vst.msk [vmem:[%s2 + $0x10] sm:$0x1f] %vm1649, %v1638
  %1651 = vst.msk [vmem:[%s2 + $0x20] sm:$0xff] %vm1647, %v1640
  %1652 = vst.msk [vmem:[%s2 + $0x30] sm:$0x1f] %vm1649, %v1642
  %1653 = vrot.lane.b32.xlu0 %v563, 81
  %v1654 = vpop.permute.xlu0 %1653
  %1655 = vrot.lane.b32.xlu0 %v564, 81
  %v1656 = vpop.permute.xlu0 %1655
  %1657 = vrot.lane.b32.xlu0 %v579, 81
  %v1658 = vpop.permute.xlu0 %1657
  %1659 = vrot.lane.b32.xlu0 %v580, 81
  %v1660 = vpop.permute.xlu0 %1659
  %vm1665 = vcmask 728768
  %1666 = vst.msk [vmem:[%s2] sm:$0xff] %vm1665, %v1654
  %vm1667 = vcmask 725696
  %1668 = vst.msk [vmem:[%s2 + $0x10] sm:$0x1f] %vm1667, %v1656
  %1669 = vst.msk [vmem:[%s2 + $0x20] sm:$0xff] %vm1665, %v1658
  %1670 = vst.msk [vmem:[%s2 + $0x30] sm:$0x1f] %vm1667, %v1660
  %1671 = vrot.lane.b32.xlu0 %v563, 92
  %v1672 = vpop.permute.xlu0 %1671
  %1673 = vrot.lane.b32.xlu0 %v564, 92
  %v1674 = vpop.permute.xlu0 %1673
  %1675 = vrot.lane.b32.xlu0 %v579, 92
  %v1676 = vpop.permute.xlu0 %1675
  %1677 = vrot.lane.b32.xlu0 %v580, 92
  %v1678 = vpop.permute.xlu0 %1677
  %vm1683 = vcmask 827168
  %1684 = vst.msk [vmem:[%s2] sm:$0xff] %vm1683, %v1672
  %vm1685 = vcmask 824096
  %1686 = vst.msk [vmem:[%s2 + $0x10] sm:$0x1f] %vm1685, %v1674
  %1687 = vst.msk [vmem:[%s2 + $0x20] sm:$0xff] %vm1683, %v1676
  %1688 = vst.msk [vmem:[%s2 + $0x30] sm:$0x1f] %vm1685, %v1678
  %1689 = vrot.lane.b32.xlu0 %v563, 103
  %v1690 = vpop.permute.xlu0 %1689
  %1691 = vrot.lane.b32.xlu0 %v564, 103
  %v1692 = vpop.permute.xlu0 %1691
  %1693 = vrot.lane.b32.xlu0 %v579, 103
  %v1694 = vpop.permute.xlu0 %1693
  %1695 = vrot.lane.b32.xlu0 %v580, 103
  %v1696 = vpop.permute.xlu0 %1695
  %vm1701 = vcmask 925568
  %1702 = vst.msk [vmem:[%s2] sm:$0xff] %vm1701, %v1690
  %vm1703 = vcmask 922496
  %1704 = vst.msk [vmem:[%s2 + $0x10] sm:$0x1f] %vm1703, %v1692
  %1705 = vst.msk [vmem:[%s2 + $0x20] sm:$0xff] %vm1701, %v1694
  %1706 = vst.msk [vmem:[%s2 + $0x30] sm:$0x1f] %vm1703, %v1696
  %1707 = vrot.lane.b32.xlu0 %v563, 114
  %v1708 = vpop.permute.xlu0 %1707
  %1709 = vrot.lane.b32.xlu0 %v564, 114
  %v1710 = vpop.permute.xlu0 %1709
  %1711 = vrot.lane.b32.xlu0 %v579, 114
  %v1712 = vpop.permute.xlu0 %1711
  %1713 = vrot.lane.b32.xlu0 %v580, 114
  %v1714 = vpop.permute.xlu0 %1713
  %vm1719 = vcmask 1023968
  %1720 = vst.msk [vmem:[%s2] sm:$0xff] %vm1719, %v1708
  %vm1721 = vcmask 1020896
  %1722 = vst.msk [vmem:[%s2 + $0x10] sm:$0x1f] %vm1721, %v1710
  %1723 = vst.msk [vmem:[%s2 + $0x20] sm:$0xff] %vm1719, %v1712
  %1724 = vst.msk [vmem:[%s2 + $0x30] sm:$0x1f] %vm1721, %v1714
  %1725 = vrot.lane.b32.xlu0 %v563, 125
  %v1726 = vpop.permute.xlu0 %1725
  %1727 = vrot.lane.b32.xlu0 %v564, 125
  %v1728 = vpop.permute.xlu0 %1727
  %1729 = vrot.lane.b32.xlu0 %v579, 125
  %v1730 = vpop.permute.xlu0 %1729
  %1731 = vrot.lane.b32.xlu0 %v580, 125
  %v1732 = vpop.permute.xlu0 %1731
  %vm1737 = vcmask 72768
  %1738 = vst.msk [vmem:[%s2 + $0x8] sm:$0xff] %vm1737, %v1726
  %vm1739 = vcmask 69696
  %1740 = vst.msk [vmem:[%s2 + $0x18] sm:$0x1f] %vm1739, %v1728
  %1741 = vst.msk [vmem:[%s2 + $0x28] sm:$0xff] %vm1737, %v1730
  %1742 = vst.msk [vmem:[%s2 + $0x38] sm:$0x1f] %vm1739, %v1732
  %1743 = vrot.lane.b32.xlu0 %v563, 8
  %v1744 = vpop.permute.xlu0 %1743
  %1745 = vrot.lane.b32.xlu0 %v564, 8
  %v1746 = vpop.permute.xlu0 %1745
  %1747 = vrot.lane.b32.xlu0 %v579, 8
  %v1748 = vpop.permute.xlu0 %1747
  %1749 = vrot.lane.b32.xlu0 %v580, 8
  %v1750 = vpop.permute.xlu0 %1749
  %vm1755 = vcmask 171168
  %1756 = vst.msk [vmem:[%s2 + $0x8] sm:$0xff] %vm1755, %v1744
  %vm1757 = vcmask 168096
  %1758 = vst.msk [vmem:[%s2 + $0x18] sm:$0x1f] %vm1757, %v1746
  %1759 = vst.msk [vmem:[%s2 + $0x28] sm:$0xff] %vm1755, %v1748
  %1760 = vst.msk [vmem:[%s2 + $0x38] sm:$0x1f] %vm1757, %v1750
  %1765 = vrot.lane.b32.xlu0 %v565, 5
  %v1766 = vpop.permute.xlu0 %1765
  %1767 = vrot.lane.b32.xlu0 %v566, 5
  %v1768 = vpop.permute.xlu0 %1767
  %1769 = vrot.lane.b32.xlu0 %v581, 5
  %v1770 = vpop.permute.xlu0 %1769
  %1771 = vrot.lane.b32.xlu0 %v582, 5
  %v1772 = vpop.permute.xlu0 %1771
  %1777 = vst.msk [vmem:[%s2] sm:$0xff] %vm1027, %v1766
  %1778 = vst.msk [vmem:[%s2 + $0x10] sm:$0x1f] %vm1029, %v1768
  %1779 = vst.msk [vmem:[%s2 + $0x20] sm:$0xff] %vm1027, %v1770
  %1780 = vst.msk [vmem:[%s2 + $0x30] sm:$0x1f] %vm1029, %v1772
  %1781 = vrot.lane.b32.xlu0 %v565, 16
  %v1782 = vpop.permute.xlu0 %1781
  %1783 = vrot.lane.b32.xlu0 %v566, 16
  %v1784 = vpop.permute.xlu0 %1783
  %1785 = vrot.lane.b32.xlu0 %v581, 16
  %v1786 = vpop.permute.xlu0 %1785
  %1787 = vrot.lane.b32.xlu0 %v582, 16
  %v1788 = vpop.permute.xlu0 %1787
  %1793 = vst.msk [vmem:[%s2] sm:$0xff] %vm1045, %v1782
  %1794 = vst.msk [vmem:[%s2 + $0x10] sm:$0x1f] %vm1047, %v1784
  %1795 = vst.msk [vmem:[%s2 + $0x20] sm:$0xff] %vm1045, %v1786
  %1796 = vst.msk [vmem:[%s2 + $0x30] sm:$0x1f] %vm1047, %v1788
  %1797 = vrot.lane.b32.xlu0 %v565, 27
  %v1798 = vpop.permute.xlu0 %1797
  %1799 = vrot.lane.b32.xlu0 %v566, 27
  %v1800 = vpop.permute.xlu0 %1799
  %1801 = vrot.lane.b32.xlu0 %v581, 27
  %v1802 = vpop.permute.xlu0 %1801
  %1803 = vrot.lane.b32.xlu0 %v582, 27
  %v1804 = vpop.permute.xlu0 %1803
  %vm1809 = vcmask 244968
  %1810 = vst.msk [vmem:[%s2] sm:$0xff] %vm1809, %v1798
  %vm1811 = vcmask 241896
  %1812 = vst.msk [vmem:[%s2 + $0x10] sm:$0x1f] %vm1811, %v1800
  %1813 = vst.msk [vmem:[%s2 + $0x20] sm:$0xff] %vm1809, %v1802
  %1814 = vst.msk [vmem:[%s2 + $0x30] sm:$0x1f] %vm1811, %v1804
  %1815 = vrot.lane.b32.xlu0 %v565, 38
  %v1816 = vpop.permute.xlu0 %1815
  %1817 = vrot.lane.b32.xlu0 %v566, 38
  %v1818 = vpop.permute.xlu0 %1817
  %1819 = vrot.lane.b32.xlu0 %v581, 38
  %v1820 = vpop.permute.xlu0 %1819
  %1821 = vrot.lane.b32.xlu0 %v582, 38
  %v1822 = vpop.permute.xlu0 %1821
  %vm1827 = vcmask 343368
  %1828 = vst.msk [vmem:[%s2] sm:$0xff] %vm1827, %v1816
  %vm1829 = vcmask 340296
  %1830 = vst.msk [vmem:[%s2 + $0x10] sm:$0x1f] %vm1829, %v1818
  %1831 = vst.msk [vmem:[%s2 + $0x20] sm:$0xff] %vm1827, %v1820
  %1832 = vst.msk [vmem:[%s2 + $0x30] sm:$0x1f] %vm1829, %v1822
  %1833 = vrot.lane.b32.xlu0 %v565, 49
  %v1834 = vpop.permute.xlu0 %1833
  %1835 = vrot.lane.b32.xlu0 %v566, 49
  %v1836 = vpop.permute.xlu0 %1835
  %1837 = vrot.lane.b32.xlu0 %v581, 49
  %v1838 = vpop.permute.xlu0 %1837
  %1839 = vrot.lane.b32.xlu0 %v582, 49
  %v1840 = vpop.permute.xlu0 %1839
  %vm1845 = vcmask 441768
  %1846 = vst.msk [vmem:[%s2] sm:$0xff] %vm1845, %v1834
  %vm1847 = vcmask 438696
  %1848 = vst.msk [vmem:[%s2 + $0x10] sm:$0x1f] %vm1847, %v1836
  %1849 = vst.msk [vmem:[%s2 + $0x20] sm:$0xff] %vm1845, %v1838
  %1850 = vst.msk [vmem:[%s2 + $0x30] sm:$0x1f] %vm1847, %v1840
  %1851 = vrot.lane.b32.xlu0 %v565, 60
  %v1852 = vpop.permute.xlu0 %1851
  %1853 = vrot.lane.b32.xlu0 %v566, 60
  %v1854 = vpop.permute.xlu0 %1853
  %1855 = vrot.lane.b32.xlu0 %v581, 60
  %v1856 = vpop.permute.xlu0 %1855
  %1857 = vrot.lane.b32.xlu0 %v582, 60
  %v1858 = vpop.permute.xlu0 %1857
  %vm1863 = vcmask 540168
  %1864 = vst.msk [vmem:[%s2] sm:$0xff] %vm1863, %v1852
  %vm1865 = vcmask 537096
  %1866 = vst.msk [vmem:[%s2 + $0x10] sm:$0x1f] %vm1865, %v1854
  %1867 = vst.msk [vmem:[%s2 + $0x20] sm:$0xff] %vm1863, %v1856
  %1868 = vst.msk [vmem:[%s2 + $0x30] sm:$0x1f] %vm1865, %v1858
  %1869 = vrot.lane.b32.xlu0 %v565, 71
  %v1870 = vpop.permute.xlu0 %1869
  %1871 = vrot.lane.b32.xlu0 %v566, 71
  %v1872 = vpop.permute.xlu0 %1871
  %1873 = vrot.lane.b32.xlu0 %v581, 71
  %v1874 = vpop.permute.xlu0 %1873
  %1875 = vrot.lane.b32.xlu0 %v582, 71
  %v1876 = vpop.permute.xlu0 %1875
  %vm1881 = vcmask 638568
  %1882 = vst.msk [vmem:[%s2] sm:$0xff] %vm1881, %v1870
  %vm1883 = vcmask 635496
  %1884 = vst.msk [vmem:[%s2 + $0x10] sm:$0x1f] %vm1883, %v1872
  %1885 = vst.msk [vmem:[%s2 + $0x20] sm:$0xff] %vm1881, %v1874
  %1886 = vst.msk [vmem:[%s2 + $0x30] sm:$0x1f] %vm1883, %v1876
  %1887 = vrot.lane.b32.xlu0 %v565, 82
  %v1888 = vpop.permute.xlu0 %1887
  %1889 = vrot.lane.b32.xlu0 %v566, 82
  %v1890 = vpop.permute.xlu0 %1889
  %1891 = vrot.lane.b32.xlu0 %v581, 82
  %v1892 = vpop.permute.xlu0 %1891
  %1893 = vrot.lane.b32.xlu0 %v582, 82
  %v1894 = vpop.permute.xlu0 %1893
  %vm1899 = vcmask 736968
  %1900 = vst.msk [vmem:[%s2] sm:$0xff] %vm1899, %v1888
  %vm1901 = vcmask 733896
  %1902 = vst.msk [vmem:[%s2 + $0x10] sm:$0x1f] %vm1901, %v1890
  %1903 = vst.msk [vmem:[%s2 + $0x20] sm:$0xff] %vm1899, %v1892
  %1904 = vst.msk [vmem:[%s2 + $0x30] sm:$0x1f] %vm1901, %v1894
  %1905 = vrot.lane.b32.xlu0 %v565, 93
  %v1906 = vpop.permute.xlu0 %1905
  %1907 = vrot.lane.b32.xlu0 %v566, 93
  %v1908 = vpop.permute.xlu0 %1907
  %1909 = vrot.lane.b32.xlu0 %v581, 93
  %v1910 = vpop.permute.xlu0 %1909
  %1911 = vrot.lane.b32.xlu0 %v582, 93
  %v1912 = vpop.permute.xlu0 %1911
  %vm1917 = vcmask 835368
  %1918 = vst.msk [vmem:[%s2] sm:$0xff] %vm1917, %v1906
  %vm1919 = vcmask 832296
  %1920 = vst.msk [vmem:[%s2 + $0x10] sm:$0x1f] %vm1919, %v1908
  %1921 = vst.msk [vmem:[%s2 + $0x20] sm:$0xff] %vm1917, %v1910
  %1922 = vst.msk [vmem:[%s2 + $0x30] sm:$0x1f] %vm1919, %v1912
  %1923 = vrot.lane.b32.xlu0 %v565, 104
  %v1924 = vpop.permute.xlu0 %1923
  %1925 = vrot.lane.b32.xlu0 %v566, 104
  %v1926 = vpop.permute.xlu0 %1925
  %1927 = vrot.lane.b32.xlu0 %v581, 104
  %v1928 = vpop.permute.xlu0 %1927
  %1929 = vrot.lane.b32.xlu0 %v582, 104
  %v1930 = vpop.permute.xlu0 %1929
  %vm1935 = vcmask 933768
  %1936 = vst.msk [vmem:[%s2] sm:$0xff] %vm1935, %v1924
  %vm1937 = vcmask 930696
  %1938 = vst.msk [vmem:[%s2 + $0x10] sm:$0x1f] %vm1937, %v1926
  %1939 = vst.msk [vmem:[%s2 + $0x20] sm:$0xff] %vm1935, %v1928
  %1940 = vst.msk [vmem:[%s2 + $0x30] sm:$0x1f] %vm1937, %v1930
  %1941 = vrot.lane.b32.xlu0 %v565, 115
  %v1942 = vpop.permute.xlu0 %1941
  %1943 = vrot.lane.b32.xlu0 %v566, 115
  %v1944 = vpop.permute.xlu0 %1943
  %1945 = vrot.lane.b32.xlu0 %v581, 115
  %v1946 = vpop.permute.xlu0 %1945
  %1947 = vrot.lane.b32.xlu0 %v582, 115
  %v1948 = vpop.permute.xlu0 %1947
  %vm1953 = vcmask 1032168
  %1954 = vst.msk [vmem:[%s2] sm:$0xff] %vm1953, %v1942
  %vm1955 = vcmask 1029096
  %1956 = vst.msk [vmem:[%s2 + $0x10] sm:$0x1f] %vm1955, %v1944
  %1957 = vst.msk [vmem:[%s2 + $0x20] sm:$0xff] %vm1953, %v1946
  %1958 = vst.msk [vmem:[%s2 + $0x30] sm:$0x1f] %vm1955, %v1948
  %1959 = vrot.lane.b32.xlu0 %v565, 126
  %v1960 = vpop.permute.xlu0 %1959
  %1961 = vrot.lane.b32.xlu0 %v566, 126
  %v1962 = vpop.permute.xlu0 %1961
  %1963 = vrot.lane.b32.xlu0 %v581, 126
  %v1964 = vpop.permute.xlu0 %1963
  %1965 = vrot.lane.b32.xlu0 %v582, 126
  %v1966 = vpop.permute.xlu0 %1965
  %vm1971 = vcmask 80968
  %1972 = vst.msk [vmem:[%s2 + $0x8] sm:$0xff] %vm1971, %v1960
  %vm1973 = vcmask 77896
  %1974 = vst.msk [vmem:[%s2 + $0x18] sm:$0x1f] %vm1973, %v1962
  %1975 = vst.msk [vmem:[%s2 + $0x28] sm:$0xff] %vm1971, %v1964
  %1976 = vst.msk [vmem:[%s2 + $0x38] sm:$0x1f] %vm1973, %v1966
  %1977 = vrot.lane.b32.xlu0 %v565, 9
  %v1978 = vpop.permute.xlu0 %1977
  %1979 = vrot.lane.b32.xlu0 %v566, 9
  %v1980 = vpop.permute.xlu0 %1979
  %1981 = vrot.lane.b32.xlu0 %v581, 9
  %v1982 = vpop.permute.xlu0 %1981
  %1983 = vrot.lane.b32.xlu0 %v582, 9
  %v1984 = vpop.permute.xlu0 %1983
  %vm1989 = vcmask 179368
  %1990 = vst.msk [vmem:[%s2 + $0x8] sm:$0xff] %vm1989, %v1978
  %vm1991 = vcmask 176296
  %1992 = vst.msk [vmem:[%s2 + $0x18] sm:$0x1f] %vm1991, %v1980
  %1993 = vst.msk [vmem:[%s2 + $0x28] sm:$0xff] %vm1989, %v1982
  %1994 = vst.msk [vmem:[%s2 + $0x38] sm:$0x1f] %vm1991, %v1984
  %1999 = vrot.lane.b32.xlu0 %v567, 6
  %v2000 = vpop.permute.xlu0 %1999
  %2001 = vrot.lane.b32.xlu0 %v568, 6
  %v2002 = vpop.permute.xlu0 %2001
  %2003 = vrot.lane.b32.xlu0 %v583, 6
  %v2004 = vpop.permute.xlu0 %2003
  %2005 = vrot.lane.b32.xlu0 %v584, 6
  %v2006 = vpop.permute.xlu0 %2005
  %2011 = vst.msk [vmem:[%s2] sm:$0xff] %vm1265, %v2000
  %2012 = vst.msk [vmem:[%s2 + $0x10] sm:$0x1f] %vm1267, %v2002
  %2013 = vst.msk [vmem:[%s2 + $0x20] sm:$0xff] %vm1265, %v2004
  %2014 = vst.msk [vmem:[%s2 + $0x30] sm:$0x1f] %vm1267, %v2006
  %2015 = vrot.lane.b32.xlu0 %v567, 17
  %v2016 = vpop.permute.xlu0 %2015
  %2017 = vrot.lane.b32.xlu0 %v568, 17
  %v2018 = vpop.permute.xlu0 %2017
  %2019 = vrot.lane.b32.xlu0 %v583, 17
  %v2020 = vpop.permute.xlu0 %2019
  %2021 = vrot.lane.b32.xlu0 %v584, 17
  %v2022 = vpop.permute.xlu0 %2021
  %2027 = vst.msk [vmem:[%s2] sm:$0xff] %vm1283, %v2016
  %2028 = vst.msk [vmem:[%s2 + $0x10] sm:$0x1f] %vm1285, %v2018
  %2029 = vst.msk [vmem:[%s2 + $0x20] sm:$0xff] %vm1283, %v2020
  %2030 = vst.msk [vmem:[%s2 + $0x30] sm:$0x1f] %vm1285, %v2022
  %2031 = vrot.lane.b32.xlu0 %v567, 28
  %v2032 = vpop.permute.xlu0 %2031
  %2033 = vrot.lane.b32.xlu0 %v568, 28
  %v2034 = vpop.permute.xlu0 %2033
  %2035 = vrot.lane.b32.xlu0 %v583, 28
  %v2036 = vpop.permute.xlu0 %2035
  %2037 = vrot.lane.b32.xlu0 %v584, 28
  %v2038 = vpop.permute.xlu0 %2037
  %vm2043 = vcmask 253168
  %2044 = vst.msk [vmem:[%s2] sm:$0xff] %vm2043, %v2032
  %vm2045 = vcmask 250096
  %2046 = vst.msk [vmem:[%s2 + $0x10] sm:$0x1f] %vm2045, %v2034
  %2047 = vst.msk [vmem:[%s2 + $0x20] sm:$0xff] %vm2043, %v2036
  %2048 = vst.msk [vmem:[%s2 + $0x30] sm:$0x1f] %vm2045, %v2038
  %2049 = vrot.lane.b32.xlu0 %v567, 39
  %v2050 = vpop.permute.xlu0 %2049
  %2051 = vrot.lane.b32.xlu0 %v568, 39
  %v2052 = vpop.permute.xlu0 %2051
  %2053 = vrot.lane.b32.xlu0 %v583, 39
  %v2054 = vpop.permute.xlu0 %2053
  %2055 = vrot.lane.b32.xlu0 %v584, 39
  %v2056 = vpop.permute.xlu0 %2055
  %vm2061 = vcmask 351568
  %2062 = vst.msk [vmem:[%s2] sm:$0xff] %vm2061, %v2050
  %vm2063 = vcmask 348496
  %2064 = vst.msk [vmem:[%s2 + $0x10] sm:$0x1f] %vm2063, %v2052
  %2065 = vst.msk [vmem:[%s2 + $0x20] sm:$0xff] %vm2061, %v2054
  %2066 = vst.msk [vmem:[%s2 + $0x30] sm:$0x1f] %vm2063, %v2056
  %2067 = vrot.lane.b32.xlu0 %v567, 50
  %v2068 = vpop.permute.xlu0 %2067
  %2069 = vrot.lane.b32.xlu0 %v568, 50
  %v2070 = vpop.permute.xlu0 %2069
  %2071 = vrot.lane.b32.xlu0 %v583, 50
  %v2072 = vpop.permute.xlu0 %2071
  %2073 = vrot.lane.b32.xlu0 %v584, 50
  %v2074 = vpop.permute.xlu0 %2073
  %vm2079 = vcmask 449968
  %2080 = vst.msk [vmem:[%s2] sm:$0xff] %vm2079, %v2068
  %vm2081 = vcmask 446896
  %2082 = vst.msk [vmem:[%s2 + $0x10] sm:$0x1f] %vm2081, %v2070
  %2083 = vst.msk [vmem:[%s2 + $0x20] sm:$0xff] %vm2079, %v2072
  %2084 = vst.msk [vmem:[%s2 + $0x30] sm:$0x1f] %vm2081, %v2074
  %2085 = vrot.lane.b32.xlu0 %v567, 61
  %v2086 = vpop.permute.xlu0 %2085
  %2087 = vrot.lane.b32.xlu0 %v568, 61
  %v2088 = vpop.permute.xlu0 %2087
  %2089 = vrot.lane.b32.xlu0 %v583, 61
  %v2090 = vpop.permute.xlu0 %2089
  %2091 = vrot.lane.b32.xlu0 %v584, 61
  %v2092 = vpop.permute.xlu0 %2091
  %vm2097 = vcmask 548368
  %2098 = vst.msk [vmem:[%s2] sm:$0xff] %vm2097, %v2086
  %vm2099 = vcmask 545296
  %2100 = vst.msk [vmem:[%s2 + $0x10] sm:$0x1f] %vm2099, %v2088
  %2101 = vst.msk [vmem:[%s2 + $0x20] sm:$0xff] %vm2097, %v2090
  %2102 = vst.msk [vmem:[%s2 + $0x30] sm:$0x1f] %vm2099, %v2092
  %2103 = vrot.lane.b32.xlu0 %v567, 72
  %v2104 = vpop.permute.xlu0 %2103
  %2105 = vrot.lane.b32.xlu0 %v568, 72
  %v2106 = vpop.permute.xlu0 %2105
  %2107 = vrot.lane.b32.xlu0 %v583, 72
  %v2108 = vpop.permute.xlu0 %2107
  %2109 = vrot.lane.b32.xlu0 %v584, 72
  %v2110 = vpop.permute.xlu0 %2109
  %vm2115 = vcmask 646768
  %2116 = vst.msk [vmem:[%s2] sm:$0xff] %vm2115, %v2104
  %vm2117 = vcmask 643696
  %2118 = vst.msk [vmem:[%s2 + $0x10] sm:$0x1f] %vm2117, %v2106
  %2119 = vst.msk [vmem:[%s2 + $0x20] sm:$0xff] %vm2115, %v2108
  %2120 = vst.msk [vmem:[%s2 + $0x30] sm:$0x1f] %vm2117, %v2110
  %2121 = vrot.lane.b32.xlu0 %v567, 83
  %v2122 = vpop.permute.xlu0 %2121
  %2123 = vrot.lane.b32.xlu0 %v568, 83
  %v2124 = vpop.permute.xlu0 %2123
  %2125 = vrot.lane.b32.xlu0 %v583, 83
  %v2126 = vpop.permute.xlu0 %2125
  %2127 = vrot.lane.b32.xlu0 %v584, 83
  %v2128 = vpop.permute.xlu0 %2127
  %vm2133 = vcmask 745168
  %2134 = vst.msk [vmem:[%s2] sm:$0xff] %vm2133, %v2122
  %vm2135 = vcmask 742096
  %2136 = vst.msk [vmem:[%s2 + $0x10] sm:$0x1f] %vm2135, %v2124
  %2137 = vst.msk [vmem:[%s2 + $0x20] sm:$0xff] %vm2133, %v2126
  %2138 = vst.msk [vmem:[%s2 + $0x30] sm:$0x1f] %vm2135, %v2128
  %2139 = vrot.lane.b32.xlu0 %v567, 94
  %v2140 = vpop.permute.xlu0 %2139
  %2141 = vrot.lane.b32.xlu0 %v568, 94
  %v2142 = vpop.permute.xlu0 %2141
  %2143 = vrot.lane.b32.xlu0 %v583, 94
  %v2144 = vpop.permute.xlu0 %2143
  %2145 = vrot.lane.b32.xlu0 %v584, 94
  %v2146 = vpop.permute.xlu0 %2145
  %vm2151 = vcmask 843568
  %2152 = vst.msk [vmem:[%s2] sm:$0xff] %vm2151, %v2140
  %vm2153 = vcmask 840496
  %2154 = vst.msk [vmem:[%s2 + $0x10] sm:$0x1f] %vm2153, %v2142
  %2155 = vst.msk [vmem:[%s2 + $0x20] sm:$0xff] %vm2151, %v2144
  %2156 = vst.msk [vmem:[%s2 + $0x30] sm:$0x1f] %vm2153, %v2146
  %2157 = vrot.lane.b32.xlu0 %v567, 105
  %v2158 = vpop.permute.xlu0 %2157
  %2159 = vrot.lane.b32.xlu0 %v568, 105
  %v2160 = vpop.permute.xlu0 %2159
  %2161 = vrot.lane.b32.xlu0 %v583, 105
  %v2162 = vpop.permute.xlu0 %2161
  %2163 = vrot.lane.b32.xlu0 %v584, 105
  %v2164 = vpop.permute.xlu0 %2163
  %vm2169 = vcmask 941968
  %2170 = vst.msk [vmem:[%s2] sm:$0xff] %vm2169, %v2158
  %vm2171 = vcmask 938896
  %2172 = vst.msk [vmem:[%s2 + $0x10] sm:$0x1f] %vm2171, %v2160
  %2173 = vst.msk [vmem:[%s2 + $0x20] sm:$0xff] %vm2169, %v2162
  %2174 = vst.msk [vmem:[%s2 + $0x30] sm:$0x1f] %vm2171, %v2164
  %2175 = vrot.lane.b32.xlu0 %v567, 116
  %v2176 = vpop.permute.xlu0 %2175
  %2177 = vrot.lane.b32.xlu0 %v568, 116
  %v2178 = vpop.permute.xlu0 %2177
  %2179 = vrot.lane.b32.xlu0 %v583, 116
  %v2180 = vpop.permute.xlu0 %2179
  %2181 = vrot.lane.b32.xlu0 %v584, 116
  %v2182 = vpop.permute.xlu0 %2181
  %vm2187 = vcmask 1040368
  %2188 = vst.msk [vmem:[%s2] sm:$0xff] %vm2187, %v2176
  %vm2189 = vcmask 1037296
  %2190 = vst.msk [vmem:[%s2 + $0x10] sm:$0x1f] %vm2189, %v2178
  %2191 = vst.msk [vmem:[%s2 + $0x20] sm:$0xff] %vm2187, %v2180
  %2192 = vst.msk [vmem:[%s2 + $0x30] sm:$0x1f] %vm2189, %v2182
  %2193 = vrot.lane.b32.xlu0 %v567, 127
  %v2194 = vpop.permute.xlu0 %2193
  %2195 = vrot.lane.b32.xlu0 %v568, 127
  %v2196 = vpop.permute.xlu0 %2195
  %2197 = vrot.lane.b32.xlu0 %v583, 127
  %v2198 = vpop.permute.xlu0 %2197
  %2199 = vrot.lane.b32.xlu0 %v584, 127
  %v2200 = vpop.permute.xlu0 %2199
  %vm2205 = vcmask 89168
  %2206 = vst.msk [vmem:[%s2 + $0x8] sm:$0xff] %vm2205, %v2194
  %vm2207 = vcmask 86096
  %2208 = vst.msk [vmem:[%s2 + $0x18] sm:$0x1f] %vm2207, %v2196
  %2209 = vst.msk [vmem:[%s2 + $0x28] sm:$0xff] %vm2205, %v2198
  %2210 = vst.msk [vmem:[%s2 + $0x38] sm:$0x1f] %vm2207, %v2200
  %2211 = vrot.lane.b32.xlu0 %v567, 10
  %v2212 = vpop.permute.xlu0 %2211
  %2213 = vrot.lane.b32.xlu0 %v568, 10
  %v2214 = vpop.permute.xlu0 %2213
  %2215 = vrot.lane.b32.xlu0 %v583, 10
  %v2216 = vpop.permute.xlu0 %2215
  %2217 = vrot.lane.b32.xlu0 %v584, 10
  %v2218 = vpop.permute.xlu0 %2217
  %vm2223 = vcmask 187568
  %2224 = vst.msk [vmem:[%s2 + $0x8] sm:$0xff] %vm2223, %v2212
  %vm2225 = vcmask 184496
  %2226 = vst.msk [vmem:[%s2 + $0x18] sm:$0x1f] %vm2225, %v2214
  %2227 = vst.msk [vmem:[%s2 + $0x28] sm:$0xff] %vm2223, %v2216
  %2228 = vst.msk [vmem:[%s2 + $0x38] sm:$0x1f] %vm2225, %v2218
  %2233 = vrot.lane.b32.xlu0 %v569, 7
  %v2234 = vpop.permute.xlu0 %2233
  %2235 = vrot.lane.b32.xlu0 %v570, 7
  %v2236 = vpop.permute.xlu0 %2235
  %2237 = vrot.lane.b32.xlu0 %v585, 7
  %v2238 = vpop.permute.xlu0 %2237
  %2239 = vrot.lane.b32.xlu0 %v586, 7
  %v2240 = vpop.permute.xlu0 %2239
  %2245 = vst.msk [vmem:[%s2] sm:$0xff] %vm1503, %v2234
  %2246 = vst.msk [vmem:[%s2 + $0x10] sm:$0x1f] %vm1505, %v2236
  %2247 = vst.msk [vmem:[%s2 + $0x20] sm:$0xff] %vm1503, %v2238
  %2248 = vst.msk [vmem:[%s2 + $0x30] sm:$0x1f] %vm1505, %v2240
  %2249 = vrot.lane.b32.xlu0 %v569, 18
  %v2250 = vpop.permute.xlu0 %2249
  %2251 = vrot.lane.b32.xlu0 %v570, 18
  %v2252 = vpop.permute.xlu0 %2251
  %2253 = vrot.lane.b32.xlu0 %v585, 18
  %v2254 = vpop.permute.xlu0 %2253
  %2255 = vrot.lane.b32.xlu0 %v586, 18
  %v2256 = vpop.permute.xlu0 %2255
  %2261 = vst.msk [vmem:[%s2] sm:$0xff] %vm1521, %v2250
  %2262 = vst.msk [vmem:[%s2 + $0x10] sm:$0x1f] %vm1523, %v2252
  %2263 = vst.msk [vmem:[%s2 + $0x20] sm:$0xff] %vm1521, %v2254
  %2264 = vst.msk [vmem:[%s2 + $0x30] sm:$0x1f] %vm1523, %v2256
  %2265 = vrot.lane.b32.xlu0 %v569, 29
  %v2266 = vpop.permute.xlu0 %2265
  %2267 = vrot.lane.b32.xlu0 %v570, 29
  %v2268 = vpop.permute.xlu0 %2267
  %2269 = vrot.lane.b32.xlu0 %v585, 29
  %v2270 = vpop.permute.xlu0 %2269
  %2271 = vrot.lane.b32.xlu0 %v586, 29
  %v2272 = vpop.permute.xlu0 %2271
  %vm2277 = vcmask 261368
  %2278 = vst.msk [vmem:[%s2] sm:$0xff] %vm2277, %v2266
  %vm2279 = vcmask 258296
  %2280 = vst.msk [vmem:[%s2 + $0x10] sm:$0x1f] %vm2279, %v2268
  %2281 = vst.msk [vmem:[%s2 + $0x20] sm:$0xff] %vm2277, %v2270
  %2282 = vst.msk [vmem:[%s2 + $0x30] sm:$0x1f] %vm2279, %v2272
  %2283 = vrot.lane.b32.xlu0 %v569, 40
  %v2284 = vpop.permute.xlu0 %2283
  %2285 = vrot.lane.b32.xlu0 %v570, 40
  %v2286 = vpop.permute.xlu0 %2285
  %2287 = vrot.lane.b32.xlu0 %v585, 40
  %v2288 = vpop.permute.xlu0 %2287
  %2289 = vrot.lane.b32.xlu0 %v586, 40
  %v2290 = vpop.permute.xlu0 %2289
  %vm2295 = vcmask 359768
  %2296 = vst.msk [vmem:[%s2] sm:$0xff] %vm2295, %v2284
  %vm2297 = vcmask 356696
  %2298 = vst.msk [vmem:[%s2 + $0x10] sm:$0x1f] %vm2297, %v2286
  %2299 = vst.msk [vmem:[%s2 + $0x20] sm:$0xff] %vm2295, %v2288
  %2300 = vst.msk [vmem:[%s2 + $0x30] sm:$0x1f] %vm2297, %v2290
  %2301 = vrot.lane.b32.xlu0 %v569, 51
  %v2302 = vpop.permute.xlu0 %2301
  %2303 = vrot.lane.b32.xlu0 %v570, 51
  %v2304 = vpop.permute.xlu0 %2303
  %2305 = vrot.lane.b32.xlu0 %v585, 51
  %v2306 = vpop.permute.xlu0 %2305
  %2307 = vrot.lane.b32.xlu0 %v586, 51
  %v2308 = vpop.permute.xlu0 %2307
  %vm2313 = vcmask 458168
  %2314 = vst.msk [vmem:[%s2] sm:$0xff] %vm2313, %v2302
  %vm2315 = vcmask 455096
  %2316 = vst.msk [vmem:[%s2 + $0x10] sm:$0x1f] %vm2315, %v2304
  %2317 = vst.msk [vmem:[%s2 + $0x20] sm:$0xff] %vm2313, %v2306
  %2318 = vst.msk [vmem:[%s2 + $0x30] sm:$0x1f] %vm2315, %v2308
  %2319 = vrot.lane.b32.xlu0 %v569, 62
  %v2320 = vpop.permute.xlu0 %2319
  %2321 = vrot.lane.b32.xlu0 %v570, 62
  %v2322 = vpop.permute.xlu0 %2321
  %2323 = vrot.lane.b32.xlu0 %v585, 62
  %v2324 = vpop.permute.xlu0 %2323
  %2325 = vrot.lane.b32.xlu0 %v586, 62
  %v2326 = vpop.permute.xlu0 %2325
  %vm2331 = vcmask 556568
  %2332 = vst.msk [vmem:[%s2] sm:$0xff] %vm2331, %v2320
  %vm2333 = vcmask 553496
  %2334 = vst.msk [vmem:[%s2 + $0x10] sm:$0x1f] %vm2333, %v2322
  %2335 = vst.msk [vmem:[%s2 + $0x20] sm:$0xff] %vm2331, %v2324
  %2336 = vst.msk [vmem:[%s2 + $0x30] sm:$0x1f] %vm2333, %v2326
  %2337 = vrot.lane.b32.xlu0 %v569, 73
  %v2338 = vpop.permute.xlu0 %2337
  %2339 = vrot.lane.b32.xlu0 %v570, 73
  %v2340 = vpop.permute.xlu0 %2339
  %2341 = vrot.lane.b32.xlu0 %v585, 73
  %v2342 = vpop.permute.xlu0 %2341
  %2343 = vrot.lane.b32.xlu0 %v586, 73
  %v2344 = vpop.permute.xlu0 %2343
  %vm2349 = vcmask 654968
  %2350 = vst.msk [vmem:[%s2] sm:$0xff] %vm2349, %v2338
  %vm2351 = vcmask 651896
  %2352 = vst.msk [vmem:[%s2 + $0x10] sm:$0x1f] %vm2351, %v2340
  %2353 = vst.msk [vmem:[%s2 + $0x20] sm:$0xff] %vm2349, %v2342
  %2354 = vst.msk [vmem:[%s2 + $0x30] sm:$0x1f] %vm2351, %v2344
  %2355 = vrot.lane.b32.xlu0 %v569, 84
  %v2356 = vpop.permute.xlu0 %2355
  %2357 = vrot.lane.b32.xlu0 %v570, 84
  %v2358 = vpop.permute.xlu0 %2357
  %2359 = vrot.lane.b32.xlu0 %v585, 84
  %v2360 = vpop.permute.xlu0 %2359
  %2361 = vrot.lane.b32.xlu0 %v586, 84
  %v2362 = vpop.permute.xlu0 %2361
  %vm2367 = vcmask 753368
  %2368 = vst.msk [vmem:[%s2] sm:$0xff] %vm2367, %v2356
  %vm2369 = vcmask 750296
  %2370 = vst.msk [vmem:[%s2 + $0x10] sm:$0x1f] %vm2369, %v2358
  %2371 = vst.msk [vmem:[%s2 + $0x20] sm:$0xff] %vm2367, %v2360
  %2372 = vst.msk [vmem:[%s2 + $0x30] sm:$0x1f] %vm2369, %v2362
  %2373 = vrot.lane.b32.xlu0 %v569, 95
  %v2374 = vpop.permute.xlu0 %2373
  %2375 = vrot.lane.b32.xlu0 %v570, 95
  %v2376 = vpop.permute.xlu0 %2375
  %2377 = vrot.lane.b32.xlu0 %v585, 95
  %v2378 = vpop.permute.xlu0 %2377
  %2379 = vrot.lane.b32.xlu0 %v586, 95
  %v2380 = vpop.permute.xlu0 %2379
  %vm2385 = vcmask 851768
  %2386 = vst.msk [vmem:[%s2] sm:$0xff] %vm2385, %v2374
  %vm2387 = vcmask 848696
  %2388 = vst.msk [vmem:[%s2 + $0x10] sm:$0x1f] %vm2387, %v2376
  %2389 = vst.msk [vmem:[%s2 + $0x20] sm:$0xff] %vm2385, %v2378
  %2390 = vst.msk [vmem:[%s2 + $0x30] sm:$0x1f] %vm2387, %v2380
  %2391 = vrot.lane.b32.xlu0 %v569, 106
  %v2392 = vpop.permute.xlu0 %2391
  %2393 = vrot.lane.b32.xlu0 %v570, 106
  %v2394 = vpop.permute.xlu0 %2393
  %2395 = vrot.lane.b32.xlu0 %v585, 106
  %v2396 = vpop.permute.xlu0 %2395
  %2397 = vrot.lane.b32.xlu0 %v586, 106
  %v2398 = vpop.permute.xlu0 %2397
  %vm2403 = vcmask 950168
  %2404 = vst.msk [vmem:[%s2] sm:$0xff] %vm2403, %v2392
  %vm2405 = vcmask 947096
  %2406 = vst.msk [vmem:[%s2 + $0x10] sm:$0x1f] %vm2405, %v2394
  %2407 = vst.msk [vmem:[%s2 + $0x20] sm:$0xff] %vm2403, %v2396
  %2408 = vst.msk [vmem:[%s2 + $0x30] sm:$0x1f] %vm2405, %v2398
  %2409 = vrot.lane.b32.xlu0 %v569, 117
  %v2410 = vpop.permute.xlu0 %2409
  %2411 = vrot.lane.b32.xlu0 %v570, 117
  %v2412 = vpop.permute.xlu0 %2411
  %2413 = vrot.lane.b32.xlu0 %v585, 117
  %v2414 = vpop.permute.xlu0 %2413
  %2415 = vrot.lane.b32.xlu0 %v586, 117
  %v2416 = vpop.permute.xlu0 %2415
  %vm2421 = vcmask 1048568
  %2422 = vst.msk [vmem:[%s2] sm:$0xff] %vm2421, %v2410
  %vm2423 = vcmask 1045496
  %2424 = vst.msk [vmem:[%s2 + $0x10] sm:$0x1f] %vm2423, %v2412
  %2425 = vst.msk [vmem:[%s2 + $0x20] sm:$0xff] %vm2421, %v2414
  %2426 = vst.msk [vmem:[%s2 + $0x30] sm:$0x1f] %vm2423, %v2416
  %vm2427 = vcmask 97368
  %2428 = vst.msk [vmem:[%s2 + $0x8] sm:$0xff] %vm2427, %v569
  %vm2429 = vcmask 94296
  %2430 = vst.msk [vmem:[%s2 + $0x18] sm:$0x1f] %vm2429, %v570
  %2431 = vst.msk [vmem:[%s2 + $0x28] sm:$0xff] %vm2427, %v585
  %2432 = vst.msk [vmem:[%s2 + $0x38] sm:$0x1f] %vm2429, %v586
  %2433 = vrot.lane.b32.xlu0 %v569, 11
  %v2434 = vpop.permute.xlu0 %2433
  %2435 = vrot.lane.b32.xlu0 %v570, 11
  %v2436 = vpop.permute.xlu0 %2435
  %2437 = vrot.lane.b32.xlu0 %v585, 11
  %v2438 = vpop.permute.xlu0 %2437
  %2439 = vrot.lane.b32.xlu0 %v586, 11
  %v2440 = vpop.permute.xlu0 %2439
  %vm2445 = vcmask 195768
  %2446 = vst.msk [vmem:[%s2 + $0x8] sm:$0xff] %vm2445, %v2434
  %vm2447 = vcmask 192696
  %2448 = vst.msk [vmem:[%s2 + $0x18] sm:$0x1f] %vm2447, %v2436
  %2449 = vst.msk [vmem:[%s2 + $0x28] sm:$0xff] %vm2445, %v2438
  %2450 = vst.msk [vmem:[%s2 + $0x38] sm:$0x1f] %vm2447, %v2440
  %v2451 = vld [vmem:[%s1] sm:$0xff]
  %v2452 = vld [vmem:[%s1 + $0x8] sm:$0x1f]
  %v2453 = vld [vmem:[%s1 + $0x18] sm:$0xff]
  %v2454 = vld [vmem:[%s1 + $0x20] sm:$0x1f]
  %v2455 = vld [vmem:[%s1 + $0x30] sm:$0xff]
  %v2456 = vld [vmem:[%s1 + $0x38] sm:$0x1f]
  %v2457 = vld [vmem:[%s1 + $0x48] sm:$0xff]
  %v2458 = vld [vmem:[%s1 + $0x50] sm:$0x1f]
  %v2459 = vld [vmem:[%s1 + $0x60] sm:$0xff]
  %v2460 = vld [vmem:[%s1 + $0x68] sm:$0x1f]
  %v2461 = vld [vmem:[%s1 + $0x78] sm:$0xff]
  %v2462 = vld [vmem:[%s1 + $0x80] sm:$0x1f]
  %v2463 = vld [vmem:[%s1 + $0x90] sm:$0xff]
  %v2464 = vld [vmem:[%s1 + $0x98] sm:$0x1f]
  %v2465 = vld [vmem:[%s1 + $0xa8] sm:$0xff]
  %v2466 = vld [vmem:[%s1 + $0xb0] sm:$0x1f]
  %v2467 = vld [vmem:[%s1 + $0x1] sm:$0xff]
  %v2468 = vld [vmem:[%s1 + $0x9] sm:$0x1f]
  %v2469 = vld [vmem:[%s1 + $0x19] sm:$0xff]
  %v2470 = vld [vmem:[%s1 + $0x21] sm:$0x1f]
  %v2471 = vld [vmem:[%s1 + $0x31] sm:$0xff]
  %v2472 = vld [vmem:[%s1 + $0x39] sm:$0x1f]
  %v2473 = vld [vmem:[%s1 + $0x49] sm:$0xff]
  %v2474 = vld [vmem:[%s1 + $0x51] sm:$0x1f]
  %v2475 = vld [vmem:[%s1 + $0x61] sm:$0xff]
  %v2476 = vld [vmem:[%s1 + $0x69] sm:$0x1f]
  %v2477 = vld [vmem:[%s1 + $0x79] sm:$0xff]
  %v2478 = vld [vmem:[%s1 + $0x81] sm:$0x1f]
  %v2479 = vld [vmem:[%s1 + $0x91] sm:$0xff]
  %v2480 = vld [vmem:[%s1 + $0x99] sm:$0x1f]
  %v2481 = vld [vmem:[%s1 + $0xa9] sm:$0xff]
  %v2482 = vld [vmem:[%s1 + $0xb1] sm:$0x1f]
  %v2483 = vld [vmem:[%s1 + $0x2] sm:$0xff]
  %v2484 = vld [vmem:[%s1 + $0xa] sm:$0x1f]
  %v2485 = vld [vmem:[%s1 + $0x1a] sm:$0xff]
  %v2486 = vld [vmem:[%s1 + $0x22] sm:$0x1f]
  %v2487 = vld [vmem:[%s1 + $0x32] sm:$0xff]
  %v2488 = vld [vmem:[%s1 + $0x3a] sm:$0x1f]
  %v2489 = vld [vmem:[%s1 + $0x4a] sm:$0xff]
  %v2490 = vld [vmem:[%s1 + $0x52] sm:$0x1f]
  %v2491 = vld [vmem:[%s1 + $0x62] sm:$0xff]
  %v2492 = vld [vmem:[%s1 + $0x6a] sm:$0x1f]
  %v2493 = vld [vmem:[%s1 + $0x7a] sm:$0xff]
  %v2494 = vld [vmem:[%s1 + $0x82] sm:$0x1f]
  %v2495 = vld [vmem:[%s1 + $0x92] sm:$0xff]
  %v2496 = vld [vmem:[%s1 + $0x9a] sm:$0x1f]
  %v2497 = vld [vmem:[%s1 + $0xaa] sm:$0xff]
  %v2498 = vld [vmem:[%s1 + $0xb2] sm:$0x1f]
  %v2499 = vld [vmem:[%s1 + $0x3] sm:$0xff]
  %v2500 = vld [vmem:[%s1 + $0xb] sm:$0x1f]
  %v2501 = vld [vmem:[%s1 + $0x1b] sm:$0xff]
  %v2502 = vld [vmem:[%s1 + $0x23] sm:$0x1f]
  %v2503 = vld [vmem:[%s1 + $0x33] sm:$0xff]
  %v2504 = vld [vmem:[%s1 + $0x3b] sm:$0x1f]
  %v2505 = vld [vmem:[%s1 + $0x4b] sm:$0xff]
  %v2506 = vld [vmem:[%s1 + $0x53] sm:$0x1f]
  %v2507 = vld [vmem:[%s1 + $0x63] sm:$0xff]
  %v2508 = vld [vmem:[%s1 + $0x6b] sm:$0x1f]
  %v2509 = vld [vmem:[%s1 + $0x7b] sm:$0xff]
  %v2510 = vld [vmem:[%s1 + $0x83] sm:$0x1f]
  %v2511 = vld [vmem:[%s1 + $0x93] sm:$0xff]
  %v2512 = vld [vmem:[%s1 + $0x9b] sm:$0x1f]
  %v2513 = vld [vmem:[%s1 + $0xab] sm:$0xff]
  %v2514 = vld [vmem:[%s1 + $0xb3] sm:$0x1f]
  %v2515 = vld [vmem:[%s1 + $0x4] sm:$0xff]
  %v2516 = vld [vmem:[%s1 + $0xc] sm:$0x1f]
  %v2517 = vld [vmem:[%s1 + $0x1c] sm:$0xff]
  %v2518 = vld [vmem:[%s1 + $0x24] sm:$0x1f]
  %v2519 = vld [vmem:[%s1 + $0x34] sm:$0xff]
  %v2520 = vld [vmem:[%s1 + $0x3c] sm:$0x1f]
  %v2521 = vld [vmem:[%s1 + $0x4c] sm:$0xff]
  %v2522 = vld [vmem:[%s1 + $0x54] sm:$0x1f]
  %v2523 = vld [vmem:[%s1 + $0x64] sm:$0xff]
  %v2524 = vld [vmem:[%s1 + $0x6c] sm:$0x1f]
  %v2525 = vld [vmem:[%s1 + $0x7c] sm:$0xff]
  %v2526 = vld [vmem:[%s1 + $0x84] sm:$0x1f]
  %v2527 = vld [vmem:[%s1 + $0x94] sm:$0xff]
  %v2528 = vld [vmem:[%s1 + $0x9c] sm:$0x1f]
  %v2529 = vld [vmem:[%s1 + $0xac] sm:$0xff]
  %v2530 = vld [vmem:[%s1 + $0xb4] sm:$0x1f]
  %v2531 = vld [vmem:[%s1 + $0x5] sm:$0xff]
  %v2532 = vld [vmem:[%s1 + $0xd] sm:$0x1f]
  %v2533 = vld [vmem:[%s1 + $0x1d] sm:$0xff]
  %v2534 = vld [vmem:[%s1 + $0x25] sm:$0x1f]
  %v2535 = vld [vmem:[%s1 + $0x35] sm:$0xff]
  %v2536 = vld [vmem:[%s1 + $0x3d] sm:$0x1f]
  %v2537 = vld [vmem:[%s1 + $0x4d] sm:$0xff]
  %v2538 = vld [vmem:[%s1 + $0x55] sm:$0x1f]
  %v2539 = vld [vmem:[%s1 + $0x65] sm:$0xff]
  %v2540 = vld [vmem:[%s1 + $0x6d] sm:$0x1f]
  %v2541 = vld [vmem:[%s1 + $0x7d] sm:$0xff]
  %v2542 = vld [vmem:[%s1 + $0x85] sm:$0x1f]
  %v2543 = vld [vmem:[%s1 + $0x95] sm:$0xff]
  %v2544 = vld [vmem:[%s1 + $0x9d] sm:$0x1f]
  %v2545 = vld [vmem:[%s1 + $0xad] sm:$0xff]
  %v2546 = vld [vmem:[%s1 + $0xb5] sm:$0x1f]
  %v2547 = vld [vmem:[%s1 + $0x6] sm:$0xff]
  %v2548 = vld [vmem:[%s1 + $0xe] sm:$0x1f]
  %v2549 = vld [vmem:[%s1 + $0x1e] sm:$0xff]
  %v2550 = vld [vmem:[%s1 + $0x26] sm:$0x1f]
  %v2551 = vld [vmem:[%s1 + $0x36] sm:$0xff]
  %v2552 = vld [vmem:[%s1 + $0x3e] sm:$0x1f]
  %v2553 = vld [vmem:[%s1 + $0x4e] sm:$0xff]
  %v2554 = vld [vmem:[%s1 + $0x56] sm:$0x1f]
  %v2555 = vld [vmem:[%s1 + $0x66] sm:$0xff]
  %v2556 = vld [vmem:[%s1 + $0x6e] sm:$0x1f]
  %v2557 = vld [vmem:[%s1 + $0x7e] sm:$0xff]
  %v2558 = vld [vmem:[%s1 + $0x86] sm:$0x1f]
  %v2559 = vld [vmem:[%s1 + $0x96] sm:$0xff]
  %v2560 = vld [vmem:[%s1 + $0x9e] sm:$0x1f]
  %v2561 = vld [vmem:[%s1 + $0xae] sm:$0xff]
  %v2562 = vld [vmem:[%s1 + $0xb6] sm:$0x1f]
  %v2563 = vld [vmem:[%s1 + $0x7] sm:$0xff]
  %v2564 = vld [vmem:[%s1 + $0xf] sm:$0x1f]
  %v2565 = vld [vmem:[%s1 + $0x1f] sm:$0xff]
  %v2566 = vld [vmem:[%s1 + $0x27] sm:$0x1f]
  %v2567 = vld [vmem:[%s1 + $0x37] sm:$0xff]
  %v2568 = vld [vmem:[%s1 + $0x3f] sm:$0x1f]
  %v2569 = vld [vmem:[%s1 + $0x4f] sm:$0xff]
  %v2570 = vld [vmem:[%s1 + $0x57] sm:$0x1f]
  %v2571 = vld [vmem:[%s1 + $0x67] sm:$0xff]
  %v2572 = vld [vmem:[%s1 + $0x6f] sm:$0x1f]
  %v2573 = vld [vmem:[%s1 + $0x7f] sm:$0xff]
  %v2574 = vld [vmem:[%s1 + $0x87] sm:$0x1f]
  %v2575 = vld [vmem:[%s1 + $0x97] sm:$0xff]
  %v2576 = vld [vmem:[%s1 + $0x9f] sm:$0x1f]
  %v2577 = vld [vmem:[%s1 + $0xaf] sm:$0xff]
  %v2578 = vld [vmem:[%s1 + $0xb7] sm:$0x1f]
  %v2579 = vadd.f32 %v2451, %v2467
  %v2580 = vadd.f32 %v2452, %v2468
  %v2581 = vadd.f32 %v2453, %v2469
  %v2582 = vadd.f32 %v2454, %v2470
  %v2583 = vadd.f32 %v2455, %v2471
  %v2584 = vadd.f32 %v2456, %v2472
  %v2585 = vadd.f32 %v2457, %v2473
  %v2586 = vadd.f32 %v2458, %v2474
  %v2587 = vadd.f32 %v2459, %v2475
  %v2588 = vadd.f32 %v2460, %v2476
  %v2589 = vadd.f32 %v2461, %v2477
  %v2590 = vadd.f32 %v2462, %v2478
  %v2591 = vadd.f32 %v2463, %v2479
  %v2592 = vadd.f32 %v2464, %v2480
  %v2593 = vadd.f32 %v2465, %v2481
  %v2594 = vadd.f32 %v2466, %v2482
  %v2595 = vadd.f32 %v2483, %v2499
  %v2596 = vadd.f32 %v2484, %v2500
  %v2597 = vadd.f32 %v2485, %v2501
  %v2598 = vadd.f32 %v2486, %v2502
  %v2599 = vadd.f32 %v2487, %v2503
  %v2600 = vadd.f32 %v2488, %v2504
  %v2601 = vadd.f32 %v2489, %v2505
  %v2602 = vadd.f32 %v2490, %v2506
  %v2603 = vadd.f32 %v2491, %v2507
  %v2604 = vadd.f32 %v2492, %v2508
  %v2605 = vadd.f32 %v2493, %v2509
  %v2606 = vadd.f32 %v2494, %v2510
  %v2607 = vadd.f32 %v2495, %v2511
  %v2608 = vadd.f32 %v2496, %v2512
  %v2609 = vadd.f32 %v2497, %v2513
  %v2610 = vadd.f32 %v2498, %v2514
  %v2611 = vadd.f32 %v2515, %v2531
  %v2612 = vadd.f32 %v2516, %v2532
  %v2613 = vadd.f32 %v2517, %v2533
  %v2614 = vadd.f32 %v2518, %v2534
  %v2615 = vadd.f32 %v2519, %v2535
  %v2616 = vadd.f32 %v2520, %v2536
  %v2617 = vadd.f32 %v2521, %v2537
  %v2618 = vadd.f32 %v2522, %v2538
  %v2619 = vadd.f32 %v2523, %v2539
  %v2620 = vadd.f32 %v2524, %v2540
  %v2621 = vadd.f32 %v2525, %v2541
  %v2622 = vadd.f32 %v2526, %v2542
  %v2623 = vadd.f32 %v2527, %v2543
  %v2624 = vadd.f32 %v2528, %v2544
  %v2625 = vadd.f32 %v2529, %v2545
  %v2626 = vadd.f32 %v2530, %v2546
  %v2627 = vadd.f32 %v2547, %v2563
  %v2628 = vadd.f32 %v2548, %v2564
  %v2629 = vadd.f32 %v2549, %v2565
  %v2630 = vadd.f32 %v2550, %v2566
  %v2631 = vadd.f32 %v2551, %v2567
  %v2632 = vadd.f32 %v2552, %v2568
  %v2633 = vadd.f32 %v2553, %v2569
  %v2634 = vadd.f32 %v2554, %v2570
  %v2635 = vadd.f32 %v2555, %v2571
  %v2636 = vadd.f32 %v2556, %v2572
  %v2637 = vadd.f32 %v2557, %v2573
  %v2638 = vadd.f32 %v2558, %v2574
  %v2639 = vadd.f32 %v2559, %v2575
  %v2640 = vadd.f32 %v2560, %v2576
  %v2641 = vadd.f32 %v2561, %v2577
  %v2642 = vadd.f32 %v2562, %v2578
  %v2643 = vadd.f32 %v2579, %v2595
  %v2644 = vadd.f32 %v2580, %v2596
  %v2645 = vadd.f32 %v2581, %v2597
  %v2646 = vadd.f32 %v2582, %v2598
  %v2647 = vadd.f32 %v2583, %v2599
  %v2648 = vadd.f32 %v2584, %v2600
  %v2649 = vadd.f32 %v2585, %v2601
  %v2650 = vadd.f32 %v2586, %v2602
  %v2651 = vadd.f32 %v2587, %v2603
  %v2652 = vadd.f32 %v2588, %v2604
  %v2653 = vadd.f32 %v2589, %v2605
  %v2654 = vadd.f32 %v2590, %v2606
  %v2655 = vadd.f32 %v2591, %v2607
  %v2656 = vadd.f32 %v2592, %v2608
  %v2657 = vadd.f32 %v2593, %v2609
  %v2658 = vadd.f32 %v2594, %v2610
  %v2659 = vadd.f32 %v2611, %v2627
  %v2660 = vadd.f32 %v2612, %v2628
  %v2661 = vadd.f32 %v2613, %v2629
  %v2662 = vadd.f32 %v2614, %v2630
  %v2663 = vadd.f32 %v2615, %v2631
  %v2664 = vadd.f32 %v2616, %v2632
  %v2665 = vadd.f32 %v2617, %v2633
  %v2666 = vadd.f32 %v2618, %v2634
  %v2667 = vadd.f32 %v2619, %v2635
  %v2668 = vadd.f32 %v2620, %v2636
  %v2669 = vadd.f32 %v2621, %v2637
  %v2670 = vadd.f32 %v2622, %v2638
  %v2671 = vadd.f32 %v2623, %v2639
  %v2672 = vadd.f32 %v2624, %v2640
  %v2673 = vadd.f32 %v2625, %v2641
  %v2674 = vadd.f32 %v2626, %v2642
  %v2675 = vadd.f32 %v2643, %v2659
  %v2676 = vadd.f32 %v2644, %v2660
  %v2677 = vadd.f32 %v2645, %v2661
  %v2678 = vadd.f32 %v2646, %v2662
  %v2679 = vadd.f32 %v2647, %v2663
  %v2680 = vadd.f32 %v2648, %v2664
  %v2681 = vadd.f32 %v2649, %v2665
  %v2682 = vadd.f32 %v2650, %v2666
  %v2683 = vadd.f32 %v2651, %v2667
  %v2684 = vadd.f32 %v2652, %v2668
  %v2685 = vadd.f32 %v2653, %v2669
  %v2686 = vadd.f32 %v2654, %v2670
  %v2687 = vadd.f32 %v2655, %v2671
  %v2688 = vadd.f32 %v2656, %v2672
  %v2689 = vadd.f32 %v2657, %v2673
  %v2690 = vadd.f32 %v2658, %v2674
  %2707 = vrot.lane.b32.xlu0 %v2675, 127
  %v2708 = vpop.permute.xlu0 %2707
  %2709 = vrot.lane.b32.xlu0 %v2676, 127
  %v2710 = vpop.permute.xlu0 %2709
  %2711 = vrot.lane.b32.xlu0 %v2677, 127
  %v2712 = vpop.permute.xlu0 %2711
  %2713 = vrot.lane.b32.xlu0 %v2678, 127
  %v2714 = vpop.permute.xlu0 %2713
  %2715 = vrot.lane.b32.xlu0 %v2679, 127
  %v2716 = vpop.permute.xlu0 %2715
  %2717 = vrot.lane.b32.xlu0 %v2680, 127
  %v2718 = vpop.permute.xlu0 %2717
  %2719 = vrot.lane.b32.xlu0 %v2681, 127
  %v2720 = vpop.permute.xlu0 %2719
  %2721 = vrot.lane.b32.xlu0 %v2682, 127
  %v2722 = vpop.permute.xlu0 %2721
  %2723 = vrot.lane.b32.xlu0 %v2683, 127
  %v2724 = vpop.permute.xlu0 %2723
  %2725 = vrot.lane.b32.xlu0 %v2684, 127
  %v2726 = vpop.permute.xlu0 %2725
  %2727 = vrot.lane.b32.xlu0 %v2685, 127
  %v2728 = vpop.permute.xlu0 %2727
  %2729 = vrot.lane.b32.xlu0 %v2686, 127
  %v2730 = vpop.permute.xlu0 %2729
  %2731 = vrot.lane.b32.xlu0 %v2687, 127
  %v2732 = vpop.permute.xlu0 %2731
  %2733 = vrot.lane.b32.xlu0 %v2688, 127
  %v2734 = vpop.permute.xlu0 %2733
  %2735 = vrot.lane.b32.xlu0 %v2689, 127
  %v2736 = vpop.permute.xlu0 %2735
  %2737 = vrot.lane.b32.xlu0 %v2690, 127
  %v2738 = vpop.permute.xlu0 %2737
  %v2755 = vadd.f32 %v2675, %v2708
  %v2756 = vadd.f32 %v2676, %v2710
  %v2757 = vadd.f32 %v2677, %v2712
  %v2758 = vadd.f32 %v2678, %v2714
  %v2759 = vadd.f32 %v2679, %v2716
  %v2760 = vadd.f32 %v2680, %v2718
  %v2761 = vadd.f32 %v2681, %v2720
  %v2762 = vadd.f32 %v2682, %v2722
  %v2763 = vadd.f32 %v2683, %v2724
  %v2764 = vadd.f32 %v2684, %v2726
  %v2765 = vadd.f32 %v2685, %v2728
  %v2766 = vadd.f32 %v2686, %v2730
  %v2767 = vadd.f32 %v2687, %v2732
  %v2768 = vadd.f32 %v2688, %v2734
  %v2769 = vadd.f32 %v2689, %v2736
  %v2770 = vadd.f32 %v2690, %v2738
  %2787 = vrot.lane.b32.xlu0 %v2755, 126
  %v2788 = vpop.permute.xlu0 %2787
  %2789 = vrot.lane.b32.xlu0 %v2756, 126
  %v2790 = vpop.permute.xlu0 %2789
  %2791 = vrot.lane.b32.xlu0 %v2757, 126
  %v2792 = vpop.permute.xlu0 %2791
  %2793 = vrot.lane.b32.xlu0 %v2758, 126
  %v2794 = vpop.permute.xlu0 %2793
  %2795 = vrot.lane.b32.xlu0 %v2759, 126
  %v2796 = vpop.permute.xlu0 %2795
  %2797 = vrot.lane.b32.xlu0 %v2760, 126
  %v2798 = vpop.permute.xlu0 %2797
  %2799 = vrot.lane.b32.xlu0 %v2761, 126
  %v2800 = vpop.permute.xlu0 %2799
  %2801 = vrot.lane.b32.xlu0 %v2762, 126
  %v2802 = vpop.permute.xlu0 %2801
  %2803 = vrot.lane.b32.xlu0 %v2763, 126
  %v2804 = vpop.permute.xlu0 %2803
  %2805 = vrot.lane.b32.xlu0 %v2764, 126
  %v2806 = vpop.permute.xlu0 %2805
  %2807 = vrot.lane.b32.xlu0 %v2765, 126
  %v2808 = vpop.permute.xlu0 %2807
  %2809 = vrot.lane.b32.xlu0 %v2766, 126
  %v2810 = vpop.permute.xlu0 %2809
  %2811 = vrot.lane.b32.xlu0 %v2767, 126
  %v2812 = vpop.permute.xlu0 %2811
  %2813 = vrot.lane.b32.xlu0 %v2768, 126
  %v2814 = vpop.permute.xlu0 %2813
  %2815 = vrot.lane.b32.xlu0 %v2769, 126
  %v2816 = vpop.permute.xlu0 %2815
  %2817 = vrot.lane.b32.xlu0 %v2770, 126
  %v2818 = vpop.permute.xlu0 %2817
  %v2835 = vadd.f32 %v2755, %v2788
  %v2836 = vadd.f32 %v2756, %v2790
  %v2837 = vadd.f32 %v2757, %v2792
  %v2838 = vadd.f32 %v2758, %v2794
  %v2839 = vadd.f32 %v2759, %v2796
  %v2840 = vadd.f32 %v2760, %v2798
  %v2841 = vadd.f32 %v2761, %v2800
  %v2842 = vadd.f32 %v2762, %v2802
  %v2843 = vadd.f32 %v2763, %v2804
  %v2844 = vadd.f32 %v2764, %v2806
  %v2845 = vadd.f32 %v2765, %v2808
  %v2846 = vadd.f32 %v2766, %v2810
  %v2847 = vadd.f32 %v2767, %v2812
  %v2848 = vadd.f32 %v2768, %v2814
  %v2849 = vadd.f32 %v2769, %v2816
  %v2850 = vadd.f32 %v2770, %v2818
  %v2851 = vmul.f32 %v2835, 0.03125
  %v2852 = vmul.f32 %v2836, 0.03125
  %v2853 = vmul.f32 %v2837, 0.03125
  %v2854 = vmul.f32 %v2838, 0.03125
  %v2855 = vmul.f32 %v2839, 0.03125
  %v2856 = vmul.f32 %v2840, 0.03125
  %v2857 = vmul.f32 %v2841, 0.03125
  %v2858 = vmul.f32 %v2842, 0.03125
  %v2859 = vmul.f32 %v2843, 0.03125
  %v2860 = vmul.f32 %v2844, 0.03125
  %v2861 = vmul.f32 %v2845, 0.03125
  %v2862 = vmul.f32 %v2846, 0.03125
  %v2863 = vmul.f32 %v2847, 0.03125
  %v2864 = vmul.f32 %v2848, 0.03125
  %v2865 = vmul.f32 %v2849, 0.03125
  %v2866 = vmul.f32 %v2850, 0.03125
  %2871 = vrot.lane.b32.xlu0 %v2851, 8
  %v2872 = vpop.permute.xlu0 %2871
  %2873 = vrot.lane.b32.xlu0 %v2852, 8
  %v2874 = vpop.permute.xlu0 %2873
  %2875 = vrot.lane.b32.xlu0 %v2859, 8
  %v2876 = vpop.permute.xlu0 %2875
  %2877 = vrot.lane.b32.xlu0 %v2860, 8
  %v2878 = vpop.permute.xlu0 %2877
  %2883 = vst.msk [vmem:[%s2] sm:$0xff] %vm1737, %v2872
  %2884 = vst.msk [vmem:[%s2 + $0x10] sm:$0x1f] %vm1739, %v2874
  %2885 = vst.msk [vmem:[%s2 + $0x20] sm:$0xff] %vm1737, %v2876
  %2886 = vst.msk [vmem:[%s2 + $0x30] sm:$0x1f] %vm1739, %v2878
  %2887 = vrot.lane.b32.xlu0 %v2851, 19
  %v2888 = vpop.permute.xlu0 %2887
  %2889 = vrot.lane.b32.xlu0 %v2852, 19
  %v2890 = vpop.permute.xlu0 %2889
  %2891 = vrot.lane.b32.xlu0 %v2859, 19
  %v2892 = vpop.permute.xlu0 %2891
  %2893 = vrot.lane.b32.xlu0 %v2860, 19
  %v2894 = vpop.permute.xlu0 %2893
  %2899 = vst.msk [vmem:[%s2] sm:$0xff] %vm1755, %v2888
  %2900 = vst.msk [vmem:[%s2 + $0x10] sm:$0x1f] %vm1757, %v2890
  %2901 = vst.msk [vmem:[%s2 + $0x20] sm:$0xff] %vm1755, %v2892
  %2902 = vst.msk [vmem:[%s2 + $0x30] sm:$0x1f] %vm1757, %v2894
  %2903 = vrot.lane.b32.xlu0 %v2851, 30
  %v2904 = vpop.permute.xlu0 %2903
  %2905 = vrot.lane.b32.xlu0 %v2852, 30
  %v2906 = vpop.permute.xlu0 %2905
  %2907 = vrot.lane.b32.xlu0 %v2859, 30
  %v2908 = vpop.permute.xlu0 %2907
  %2909 = vrot.lane.b32.xlu0 %v2860, 30
  %v2910 = vpop.permute.xlu0 %2909
  %vm2915 = vcmask 269568
  %2916 = vst.msk [vmem:[%s2] sm:$0xff] %vm2915, %v2904
  %vm2917 = vcmask 266496
  %2918 = vst.msk [vmem:[%s2 + $0x10] sm:$0x1f] %vm2917, %v2906
  %2919 = vst.msk [vmem:[%s2 + $0x20] sm:$0xff] %vm2915, %v2908
  %2920 = vst.msk [vmem:[%s2 + $0x30] sm:$0x1f] %vm2917, %v2910
  %2921 = vrot.lane.b32.xlu0 %v2851, 41
  %v2922 = vpop.permute.xlu0 %2921
  %2923 = vrot.lane.b32.xlu0 %v2852, 41
  %v2924 = vpop.permute.xlu0 %2923
  %2925 = vrot.lane.b32.xlu0 %v2859, 41
  %v2926 = vpop.permute.xlu0 %2925
  %2927 = vrot.lane.b32.xlu0 %v2860, 41
  %v2928 = vpop.permute.xlu0 %2927
  %vm2933 = vcmask 367968
  %2934 = vst.msk [vmem:[%s2] sm:$0xff] %vm2933, %v2922
  %vm2935 = vcmask 364896
  %2936 = vst.msk [vmem:[%s2 + $0x10] sm:$0x1f] %vm2935, %v2924
  %2937 = vst.msk [vmem:[%s2 + $0x20] sm:$0xff] %vm2933, %v2926
  %2938 = vst.msk [vmem:[%s2 + $0x30] sm:$0x1f] %vm2935, %v2928
  %2939 = vrot.lane.b32.xlu0 %v2851, 52
  %v2940 = vpop.permute.xlu0 %2939
  %2941 = vrot.lane.b32.xlu0 %v2852, 52
  %v2942 = vpop.permute.xlu0 %2941
  %2943 = vrot.lane.b32.xlu0 %v2859, 52
  %v2944 = vpop.permute.xlu0 %2943
  %2945 = vrot.lane.b32.xlu0 %v2860, 52
  %v2946 = vpop.permute.xlu0 %2945
  %vm2951 = vcmask 466368
  %2952 = vst.msk [vmem:[%s2] sm:$0xff] %vm2951, %v2940
  %vm2953 = vcmask 463296
  %2954 = vst.msk [vmem:[%s2 + $0x10] sm:$0x1f] %vm2953, %v2942
  %2955 = vst.msk [vmem:[%s2 + $0x20] sm:$0xff] %vm2951, %v2944
  %2956 = vst.msk [vmem:[%s2 + $0x30] sm:$0x1f] %vm2953, %v2946
  %2957 = vrot.lane.b32.xlu0 %v2851, 63
  %v2958 = vpop.permute.xlu0 %2957
  %2959 = vrot.lane.b32.xlu0 %v2852, 63
  %v2960 = vpop.permute.xlu0 %2959
  %2961 = vrot.lane.b32.xlu0 %v2859, 63
  %v2962 = vpop.permute.xlu0 %2961
  %2963 = vrot.lane.b32.xlu0 %v2860, 63
  %v2964 = vpop.permute.xlu0 %2963
  %vm2969 = vcmask 564768
  %2970 = vst.msk [vmem:[%s2] sm:$0xff] %vm2969, %v2958
  %vm2971 = vcmask 561696
  %2972 = vst.msk [vmem:[%s2 + $0x10] sm:$0x1f] %vm2971, %v2960
  %2973 = vst.msk [vmem:[%s2 + $0x20] sm:$0xff] %vm2969, %v2962
  %2974 = vst.msk [vmem:[%s2 + $0x30] sm:$0x1f] %vm2971, %v2964
  %2975 = vrot.lane.b32.xlu0 %v2851, 74
  %v2976 = vpop.permute.xlu0 %2975
  %2977 = vrot.lane.b32.xlu0 %v2852, 74
  %v2978 = vpop.permute.xlu0 %2977
  %2979 = vrot.lane.b32.xlu0 %v2859, 74
  %v2980 = vpop.permute.xlu0 %2979
  %2981 = vrot.lane.b32.xlu0 %v2860, 74
  %v2982 = vpop.permute.xlu0 %2981
  %vm2987 = vcmask 663168
  %2988 = vst.msk [vmem:[%s2] sm:$0xff] %vm2987, %v2976
  %vm2989 = vcmask 660096
  %2990 = vst.msk [vmem:[%s2 + $0x10] sm:$0x1f] %vm2989, %v2978
  %2991 = vst.msk [vmem:[%s2 + $0x20] sm:$0xff] %vm2987, %v2980
  %2992 = vst.msk [vmem:[%s2 + $0x30] sm:$0x1f] %vm2989, %v2982
  %2993 = vrot.lane.b32.xlu0 %v2851, 85
  %v2994 = vpop.permute.xlu0 %2993
  %2995 = vrot.lane.b32.xlu0 %v2852, 85
  %v2996 = vpop.permute.xlu0 %2995
  %2997 = vrot.lane.b32.xlu0 %v2859, 85
  %v2998 = vpop.permute.xlu0 %2997
  %2999 = vrot.lane.b32.xlu0 %v2860, 85
  %v3000 = vpop.permute.xlu0 %2999
  %vm3005 = vcmask 761568
  %3006 = vst.msk [vmem:[%s2] sm:$0xff] %vm3005, %v2994
  %vm3007 = vcmask 758496
  %3008 = vst.msk [vmem:[%s2 + $0x10] sm:$0x1f] %vm3007, %v2996
  %3009 = vst.msk [vmem:[%s2 + $0x20] sm:$0xff] %vm3005, %v2998
  %3010 = vst.msk [vmem:[%s2 + $0x30] sm:$0x1f] %vm3007, %v3000
  %3011 = vrot.lane.b32.xlu0 %v2851, 96
  %v3012 = vpop.permute.xlu0 %3011
  %3013 = vrot.lane.b32.xlu0 %v2852, 96
  %v3014 = vpop.permute.xlu0 %3013
  %3015 = vrot.lane.b32.xlu0 %v2859, 96
  %v3016 = vpop.permute.xlu0 %3015
  %3017 = vrot.lane.b32.xlu0 %v2860, 96
  %v3018 = vpop.permute.xlu0 %3017
  %vm3023 = vcmask 859968
  %3024 = vst.msk [vmem:[%s2] sm:$0xff] %vm3023, %v3012
  %vm3025 = vcmask 856896
  %3026 = vst.msk [vmem:[%s2 + $0x10] sm:$0x1f] %vm3025, %v3014
  %3027 = vst.msk [vmem:[%s2 + $0x20] sm:$0xff] %vm3023, %v3016
  %3028 = vst.msk [vmem:[%s2 + $0x30] sm:$0x1f] %vm3025, %v3018
  %3029 = vrot.lane.b32.xlu0 %v2851, 107
  %v3030 = vpop.permute.xlu0 %3029
  %3031 = vrot.lane.b32.xlu0 %v2852, 107
  %v3032 = vpop.permute.xlu0 %3031
  %3033 = vrot.lane.b32.xlu0 %v2859, 107
  %v3034 = vpop.permute.xlu0 %3033
  %3035 = vrot.lane.b32.xlu0 %v2860, 107
  %v3036 = vpop.permute.xlu0 %3035
  %vm3041 = vcmask 958368
  %3042 = vst.msk [vmem:[%s2] sm:$0xff] %vm3041, %v3030
  %vm3043 = vcmask 955296
  %3044 = vst.msk [vmem:[%s2 + $0x10] sm:$0x1f] %vm3043, %v3032
  %3045 = vst.msk [vmem:[%s2 + $0x20] sm:$0xff] %vm3041, %v3034
  %3046 = vst.msk [vmem:[%s2 + $0x30] sm:$0x1f] %vm3043, %v3036
  %3047 = vrot.lane.b32.xlu0 %v2851, 118
  %v3048 = vpop.permute.xlu0 %3047
  %3049 = vrot.lane.b32.xlu0 %v2852, 118
  %v3050 = vpop.permute.xlu0 %3049
  %3051 = vrot.lane.b32.xlu0 %v2859, 118
  %v3052 = vpop.permute.xlu0 %3051
  %3053 = vrot.lane.b32.xlu0 %v2860, 118
  %v3054 = vpop.permute.xlu0 %3053
  %3059 = vst.msk [vmem:[%s2 + $0x8] sm:$0xff] %vm587, %v3048
  %3060 = vst.msk [vmem:[%s2 + $0x18] sm:$0x1f] %vm589, %v3050
  %3061 = vst.msk [vmem:[%s2 + $0x28] sm:$0xff] %vm587, %v3052
  %3062 = vst.msk [vmem:[%s2 + $0x38] sm:$0x1f] %vm589, %v3054
  %3063 = vrot.lane.b32.xlu0 %v2851, 1
  %v3064 = vpop.permute.xlu0 %3063
  %3065 = vrot.lane.b32.xlu0 %v2852, 1
  %v3066 = vpop.permute.xlu0 %3065
  %3067 = vrot.lane.b32.xlu0 %v2859, 1
  %v3068 = vpop.permute.xlu0 %3067
  %3069 = vrot.lane.b32.xlu0 %v2860, 1
  %v3070 = vpop.permute.xlu0 %3069
  %3075 = vst.msk [vmem:[%s2 + $0x8] sm:$0xff] %vm609, %v3064
  %3076 = vst.msk [vmem:[%s2 + $0x18] sm:$0x1f] %vm611, %v3066
  %3077 = vst.msk [vmem:[%s2 + $0x28] sm:$0xff] %vm609, %v3068
  %3078 = vst.msk [vmem:[%s2 + $0x38] sm:$0x1f] %vm611, %v3070
  %3079 = vrot.lane.b32.xlu0 %v2851, 12
  %v3080 = vpop.permute.xlu0 %3079
  %3081 = vrot.lane.b32.xlu0 %v2852, 12
  %v3082 = vpop.permute.xlu0 %3081
  %3083 = vrot.lane.b32.xlu0 %v2859, 12
  %v3084 = vpop.permute.xlu0 %3083
  %3085 = vrot.lane.b32.xlu0 %v2860, 12
  %v3086 = vpop.permute.xlu0 %3085
  %3091 = vst.msk [vmem:[%s2 + $0x8] sm:$0xff] %vm627, %v3080
  %3092 = vst.msk [vmem:[%s2 + $0x18] sm:$0x1f] %vm629, %v3082
  %3093 = vst.msk [vmem:[%s2 + $0x28] sm:$0xff] %vm627, %v3084
  %3094 = vst.msk [vmem:[%s2 + $0x38] sm:$0x1f] %vm629, %v3086
  %3099 = vrot.lane.b32.xlu0 %v2853, 9
  %v3100 = vpop.permute.xlu0 %3099
  %3101 = vrot.lane.b32.xlu0 %v2854, 9
  %v3102 = vpop.permute.xlu0 %3101
  %3103 = vrot.lane.b32.xlu0 %v2861, 9
  %v3104 = vpop.permute.xlu0 %3103
  %3105 = vrot.lane.b32.xlu0 %v2862, 9
  %v3106 = vpop.permute.xlu0 %3105
  %3111 = vst.msk [vmem:[%s2] sm:$0xff] %vm1971, %v3100
  %3112 = vst.msk [vmem:[%s2 + $0x10] sm:$0x1f] %vm1973, %v3102
  %3113 = vst.msk [vmem:[%s2 + $0x20] sm:$0xff] %vm1971, %v3104
  %3114 = vst.msk [vmem:[%s2 + $0x30] sm:$0x1f] %vm1973, %v3106
  %3115 = vrot.lane.b32.xlu0 %v2853, 20
  %v3116 = vpop.permute.xlu0 %3115
  %3117 = vrot.lane.b32.xlu0 %v2854, 20
  %v3118 = vpop.permute.xlu0 %3117
  %3119 = vrot.lane.b32.xlu0 %v2861, 20
  %v3120 = vpop.permute.xlu0 %3119
  %3121 = vrot.lane.b32.xlu0 %v2862, 20
  %v3122 = vpop.permute.xlu0 %3121
  %3127 = vst.msk [vmem:[%s2] sm:$0xff] %vm1989, %v3116
  %3128 = vst.msk [vmem:[%s2 + $0x10] sm:$0x1f] %vm1991, %v3118
  %3129 = vst.msk [vmem:[%s2 + $0x20] sm:$0xff] %vm1989, %v3120
  %3130 = vst.msk [vmem:[%s2 + $0x30] sm:$0x1f] %vm1991, %v3122
  %3131 = vrot.lane.b32.xlu0 %v2853, 31
  %v3132 = vpop.permute.xlu0 %3131
  %3133 = vrot.lane.b32.xlu0 %v2854, 31
  %v3134 = vpop.permute.xlu0 %3133
  %3135 = vrot.lane.b32.xlu0 %v2861, 31
  %v3136 = vpop.permute.xlu0 %3135
  %3137 = vrot.lane.b32.xlu0 %v2862, 31
  %v3138 = vpop.permute.xlu0 %3137
  %vm3143 = vcmask 277768
  %3144 = vst.msk [vmem:[%s2] sm:$0xff] %vm3143, %v3132
  %vm3145 = vcmask 274696
  %3146 = vst.msk [vmem:[%s2 + $0x10] sm:$0x1f] %vm3145, %v3134
  %3147 = vst.msk [vmem:[%s2 + $0x20] sm:$0xff] %vm3143, %v3136
  %3148 = vst.msk [vmem:[%s2 + $0x30] sm:$0x1f] %vm3145, %v3138
  %3149 = vrot.lane.b32.xlu0 %v2853, 42
  %v3150 = vpop.permute.xlu0 %3149
  %3151 = vrot.lane.b32.xlu0 %v2854, 42
  %v3152 = vpop.permute.xlu0 %3151
  %3153 = vrot.lane.b32.xlu0 %v2861, 42
  %v3154 = vpop.permute.xlu0 %3153
  %3155 = vrot.lane.b32.xlu0 %v2862, 42
  %v3156 = vpop.permute.xlu0 %3155
  %vm3161 = vcmask 376168
  %3162 = vst.msk [vmem:[%s2] sm:$0xff] %vm3161, %v3150
  %vm3163 = vcmask 373096
  %3164 = vst.msk [vmem:[%s2 + $0x10] sm:$0x1f] %vm3163, %v3152
  %3165 = vst.msk [vmem:[%s2 + $0x20] sm:$0xff] %vm3161, %v3154
  %3166 = vst.msk [vmem:[%s2 + $0x30] sm:$0x1f] %vm3163, %v3156
  %3167 = vrot.lane.b32.xlu0 %v2853, 53
  %v3168 = vpop.permute.xlu0 %3167
  %3169 = vrot.lane.b32.xlu0 %v2854, 53
  %v3170 = vpop.permute.xlu0 %3169
  %3171 = vrot.lane.b32.xlu0 %v2861, 53
  %v3172 = vpop.permute.xlu0 %3171
  %3173 = vrot.lane.b32.xlu0 %v2862, 53
  %v3174 = vpop.permute.xlu0 %3173
  %vm3179 = vcmask 474568
  %3180 = vst.msk [vmem:[%s2] sm:$0xff] %vm3179, %v3168
  %vm3181 = vcmask 471496
  %3182 = vst.msk [vmem:[%s2 + $0x10] sm:$0x1f] %vm3181, %v3170
  %3183 = vst.msk [vmem:[%s2 + $0x20] sm:$0xff] %vm3179, %v3172
  %3184 = vst.msk [vmem:[%s2 + $0x30] sm:$0x1f] %vm3181, %v3174
  %3185 = vrot.lane.b32.xlu0 %v2853, 64
  %v3186 = vpop.permute.xlu0 %3185
  %3187 = vrot.lane.b32.xlu0 %v2854, 64
  %v3188 = vpop.permute.xlu0 %3187
  %3189 = vrot.lane.b32.xlu0 %v2861, 64
  %v3190 = vpop.permute.xlu0 %3189
  %3191 = vrot.lane.b32.xlu0 %v2862, 64
  %v3192 = vpop.permute.xlu0 %3191
  %vm3197 = vcmask 572968
  %3198 = vst.msk [vmem:[%s2] sm:$0xff] %vm3197, %v3186
  %vm3199 = vcmask 569896
  %3200 = vst.msk [vmem:[%s2 + $0x10] sm:$0x1f] %vm3199, %v3188
  %3201 = vst.msk [vmem:[%s2 + $0x20] sm:$0xff] %vm3197, %v3190
  %3202 = vst.msk [vmem:[%s2 + $0x30] sm:$0x1f] %vm3199, %v3192
  %3203 = vrot.lane.b32.xlu0 %v2853, 75
  %v3204 = vpop.permute.xlu0 %3203
  %3205 = vrot.lane.b32.xlu0 %v2854, 75
  %v3206 = vpop.permute.xlu0 %3205
  %3207 = vrot.lane.b32.xlu0 %v2861, 75
  %v3208 = vpop.permute.xlu0 %3207
  %3209 = vrot.lane.b32.xlu0 %v2862, 75
  %v3210 = vpop.permute.xlu0 %3209
  %vm3215 = vcmask 671368
  %3216 = vst.msk [vmem:[%s2] sm:$0xff] %vm3215, %v3204
  %vm3217 = vcmask 668296
  %3218 = vst.msk [vmem:[%s2 + $0x10] sm:$0x1f] %vm3217, %v3206
  %3219 = vst.msk [vmem:[%s2 + $0x20] sm:$0xff] %vm3215, %v3208
  %3220 = vst.msk [vmem:[%s2 + $0x30] sm:$0x1f] %vm3217, %v3210
  %3221 = vrot.lane.b32.xlu0 %v2853, 86
  %v3222 = vpop.permute.xlu0 %3221
  %3223 = vrot.lane.b32.xlu0 %v2854, 86
  %v3224 = vpop.permute.xlu0 %3223
  %3225 = vrot.lane.b32.xlu0 %v2861, 86
  %v3226 = vpop.permute.xlu0 %3225
  %3227 = vrot.lane.b32.xlu0 %v2862, 86
  %v3228 = vpop.permute.xlu0 %3227
  %vm3233 = vcmask 769768
  %3234 = vst.msk [vmem:[%s2] sm:$0xff] %vm3233, %v3222
  %vm3235 = vcmask 766696
  %3236 = vst.msk [vmem:[%s2 + $0x10] sm:$0x1f] %vm3235, %v3224
  %3237 = vst.msk [vmem:[%s2 + $0x20] sm:$0xff] %vm3233, %v3226
  %3238 = vst.msk [vmem:[%s2 + $0x30] sm:$0x1f] %vm3235, %v3228
  %3239 = vrot.lane.b32.xlu0 %v2853, 97
  %v3240 = vpop.permute.xlu0 %3239
  %3241 = vrot.lane.b32.xlu0 %v2854, 97
  %v3242 = vpop.permute.xlu0 %3241
  %3243 = vrot.lane.b32.xlu0 %v2861, 97
  %v3244 = vpop.permute.xlu0 %3243
  %3245 = vrot.lane.b32.xlu0 %v2862, 97
  %v3246 = vpop.permute.xlu0 %3245
  %vm3251 = vcmask 868168
  %3252 = vst.msk [vmem:[%s2] sm:$0xff] %vm3251, %v3240
  %vm3253 = vcmask 865096
  %3254 = vst.msk [vmem:[%s2 + $0x10] sm:$0x1f] %vm3253, %v3242
  %3255 = vst.msk [vmem:[%s2 + $0x20] sm:$0xff] %vm3251, %v3244
  %3256 = vst.msk [vmem:[%s2 + $0x30] sm:$0x1f] %vm3253, %v3246
  %3257 = vrot.lane.b32.xlu0 %v2853, 108
  %v3258 = vpop.permute.xlu0 %3257
  %3259 = vrot.lane.b32.xlu0 %v2854, 108
  %v3260 = vpop.permute.xlu0 %3259
  %3261 = vrot.lane.b32.xlu0 %v2861, 108
  %v3262 = vpop.permute.xlu0 %3261
  %3263 = vrot.lane.b32.xlu0 %v2862, 108
  %v3264 = vpop.permute.xlu0 %3263
  %vm3269 = vcmask 966568
  %3270 = vst.msk [vmem:[%s2] sm:$0xff] %vm3269, %v3258
  %vm3271 = vcmask 963496
  %3272 = vst.msk [vmem:[%s2 + $0x10] sm:$0x1f] %vm3271, %v3260
  %3273 = vst.msk [vmem:[%s2 + $0x20] sm:$0xff] %vm3269, %v3262
  %3274 = vst.msk [vmem:[%s2 + $0x30] sm:$0x1f] %vm3271, %v3264
  %3275 = vrot.lane.b32.xlu0 %v2853, 119
  %v3276 = vpop.permute.xlu0 %3275
  %3277 = vrot.lane.b32.xlu0 %v2854, 119
  %v3278 = vpop.permute.xlu0 %3277
  %3279 = vrot.lane.b32.xlu0 %v2861, 119
  %v3280 = vpop.permute.xlu0 %3279
  %3281 = vrot.lane.b32.xlu0 %v2862, 119
  %v3282 = vpop.permute.xlu0 %3281
  %3287 = vst.msk [vmem:[%s2 + $0x8] sm:$0xff] %vm829, %v3276
  %3288 = vst.msk [vmem:[%s2 + $0x18] sm:$0x1f] %vm831, %v3278
  %3289 = vst.msk [vmem:[%s2 + $0x28] sm:$0xff] %vm829, %v3280
  %3290 = vst.msk [vmem:[%s2 + $0x38] sm:$0x1f] %vm831, %v3282
  %3291 = vrot.lane.b32.xlu0 %v2853, 2
  %v3292 = vpop.permute.xlu0 %3291
  %3293 = vrot.lane.b32.xlu0 %v2854, 2
  %v3294 = vpop.permute.xlu0 %3293
  %3295 = vrot.lane.b32.xlu0 %v2861, 2
  %v3296 = vpop.permute.xlu0 %3295
  %3297 = vrot.lane.b32.xlu0 %v2862, 2
  %v3298 = vpop.permute.xlu0 %3297
  %3303 = vst.msk [vmem:[%s2 + $0x8] sm:$0xff] %vm847, %v3292
  %3304 = vst.msk [vmem:[%s2 + $0x18] sm:$0x1f] %vm849, %v3294
  %3305 = vst.msk [vmem:[%s2 + $0x28] sm:$0xff] %vm847, %v3296
  %3306 = vst.msk [vmem:[%s2 + $0x38] sm:$0x1f] %vm849, %v3298
  %3307 = vrot.lane.b32.xlu0 %v2853, 13
  %v3308 = vpop.permute.xlu0 %3307
  %3309 = vrot.lane.b32.xlu0 %v2854, 13
  %v3310 = vpop.permute.xlu0 %3309
  %3311 = vrot.lane.b32.xlu0 %v2861, 13
  %v3312 = vpop.permute.xlu0 %3311
  %3313 = vrot.lane.b32.xlu0 %v2862, 13
  %v3314 = vpop.permute.xlu0 %3313
  %3319 = vst.msk [vmem:[%s2 + $0x8] sm:$0xff] %vm865, %v3308
  %3320 = vst.msk [vmem:[%s2 + $0x18] sm:$0x1f] %vm867, %v3310
  %3321 = vst.msk [vmem:[%s2 + $0x28] sm:$0xff] %vm865, %v3312
  %3322 = vst.msk [vmem:[%s2 + $0x38] sm:$0x1f] %vm867, %v3314
  %3327 = vrot.lane.b32.xlu0 %v2855, 10
  %v3328 = vpop.permute.xlu0 %3327
  %3329 = vrot.lane.b32.xlu0 %v2856, 10
  %v3330 = vpop.permute.xlu0 %3329
  %3331 = vrot.lane.b32.xlu0 %v2863, 10
  %v3332 = vpop.permute.xlu0 %3331
  %3333 = vrot.lane.b32.xlu0 %v2864, 10
  %v3334 = vpop.permute.xlu0 %3333
  %3339 = vst.msk [vmem:[%s2] sm:$0xff] %vm2205, %v3328
  %3340 = vst.msk [vmem:[%s2 + $0x10] sm:$0x1f] %vm2207, %v3330
  %3341 = vst.msk [vmem:[%s2 + $0x20] sm:$0xff] %vm2205, %v3332
  %3342 = vst.msk [vmem:[%s2 + $0x30] sm:$0x1f] %vm2207, %v3334
  %3343 = vrot.lane.b32.xlu0 %v2855, 21
  %v3344 = vpop.permute.xlu0 %3343
  %3345 = vrot.lane.b32.xlu0 %v2856, 21
  %v3346 = vpop.permute.xlu0 %3345
  %3347 = vrot.lane.b32.xlu0 %v2863, 21
  %v3348 = vpop.permute.xlu0 %3347
  %3349 = vrot.lane.b32.xlu0 %v2864, 21
  %v3350 = vpop.permute.xlu0 %3349
  %3355 = vst.msk [vmem:[%s2] sm:$0xff] %vm2223, %v3344
  %3356 = vst.msk [vmem:[%s2 + $0x10] sm:$0x1f] %vm2225, %v3346
  %3357 = vst.msk [vmem:[%s2 + $0x20] sm:$0xff] %vm2223, %v3348
  %3358 = vst.msk [vmem:[%s2 + $0x30] sm:$0x1f] %vm2225, %v3350
  %3359 = vrot.lane.b32.xlu0 %v2855, 32
  %v3360 = vpop.permute.xlu0 %3359
  %3361 = vrot.lane.b32.xlu0 %v2856, 32
  %v3362 = vpop.permute.xlu0 %3361
  %3363 = vrot.lane.b32.xlu0 %v2863, 32
  %v3364 = vpop.permute.xlu0 %3363
  %3365 = vrot.lane.b32.xlu0 %v2864, 32
  %v3366 = vpop.permute.xlu0 %3365
  %vm3371 = vcmask 285968
  %3372 = vst.msk [vmem:[%s2] sm:$0xff] %vm3371, %v3360
  %vm3373 = vcmask 282896
  %3374 = vst.msk [vmem:[%s2 + $0x10] sm:$0x1f] %vm3373, %v3362
  %3375 = vst.msk [vmem:[%s2 + $0x20] sm:$0xff] %vm3371, %v3364
  %3376 = vst.msk [vmem:[%s2 + $0x30] sm:$0x1f] %vm3373, %v3366
  %3377 = vrot.lane.b32.xlu0 %v2855, 43
  %v3378 = vpop.permute.xlu0 %3377
  %3379 = vrot.lane.b32.xlu0 %v2856, 43
  %v3380 = vpop.permute.xlu0 %3379
  %3381 = vrot.lane.b32.xlu0 %v2863, 43
  %v3382 = vpop.permute.xlu0 %3381
  %3383 = vrot.lane.b32.xlu0 %v2864, 43
  %v3384 = vpop.permute.xlu0 %3383
  %vm3389 = vcmask 384368
  %3390 = vst.msk [vmem:[%s2] sm:$0xff] %vm3389, %v3378
  %vm3391 = vcmask 381296
  %3392 = vst.msk [vmem:[%s2 + $0x10] sm:$0x1f] %vm3391, %v3380
  %3393 = vst.msk [vmem:[%s2 + $0x20] sm:$0xff] %vm3389, %v3382
  %3394 = vst.msk [vmem:[%s2 + $0x30] sm:$0x1f] %vm3391, %v3384
  %3395 = vrot.lane.b32.xlu0 %v2855, 54
  %v3396 = vpop.permute.xlu0 %3395
  %3397 = vrot.lane.b32.xlu0 %v2856, 54
  %v3398 = vpop.permute.xlu0 %3397
  %3399 = vrot.lane.b32.xlu0 %v2863, 54
  %v3400 = vpop.permute.xlu0 %3399
  %3401 = vrot.lane.b32.xlu0 %v2864, 54
  %v3402 = vpop.permute.xlu0 %3401
  %vm3407 = vcmask 482768
  %3408 = vst.msk [vmem:[%s2] sm:$0xff] %vm3407, %v3396
  %vm3409 = vcmask 479696
  %3410 = vst.msk [vmem:[%s2 + $0x10] sm:$0x1f] %vm3409, %v3398
  %3411 = vst.msk [vmem:[%s2 + $0x20] sm:$0xff] %vm3407, %v3400
  %3412 = vst.msk [vmem:[%s2 + $0x30] sm:$0x1f] %vm3409, %v3402
  %3413 = vrot.lane.b32.xlu0 %v2855, 65
  %v3414 = vpop.permute.xlu0 %3413
  %3415 = vrot.lane.b32.xlu0 %v2856, 65
  %v3416 = vpop.permute.xlu0 %3415
  %3417 = vrot.lane.b32.xlu0 %v2863, 65
  %v3418 = vpop.permute.xlu0 %3417
  %3419 = vrot.lane.b32.xlu0 %v2864, 65
  %v3420 = vpop.permute.xlu0 %3419
  %vm3425 = vcmask 581168
  %3426 = vst.msk [vmem:[%s2] sm:$0xff] %vm3425, %v3414
  %vm3427 = vcmask 578096
  %3428 = vst.msk [vmem:[%s2 + $0x10] sm:$0x1f] %vm3427, %v3416
  %3429 = vst.msk [vmem:[%s2 + $0x20] sm:$0xff] %vm3425, %v3418
  %3430 = vst.msk [vmem:[%s2 + $0x30] sm:$0x1f] %vm3427, %v3420
  %3431 = vrot.lane.b32.xlu0 %v2855, 76
  %v3432 = vpop.permute.xlu0 %3431
  %3433 = vrot.lane.b32.xlu0 %v2856, 76
  %v3434 = vpop.permute.xlu0 %3433
  %3435 = vrot.lane.b32.xlu0 %v2863, 76
  %v3436 = vpop.permute.xlu0 %3435
  %3437 = vrot.lane.b32.xlu0 %v2864, 76
  %v3438 = vpop.permute.xlu0 %3437
  %vm3443 = vcmask 679568
  %3444 = vst.msk [vmem:[%s2] sm:$0xff] %vm3443, %v3432
  %vm3445 = vcmask 676496
  %3446 = vst.msk [vmem:[%s2 + $0x10] sm:$0x1f] %vm3445, %v3434
  %3447 = vst.msk [vmem:[%s2 + $0x20] sm:$0xff] %vm3443, %v3436
  %3448 = vst.msk [vmem:[%s2 + $0x30] sm:$0x1f] %vm3445, %v3438
  %3449 = vrot.lane.b32.xlu0 %v2855, 87
  %v3450 = vpop.permute.xlu0 %3449
  %3451 = vrot.lane.b32.xlu0 %v2856, 87
  %v3452 = vpop.permute.xlu0 %3451
  %3453 = vrot.lane.b32.xlu0 %v2863, 87
  %v3454 = vpop.permute.xlu0 %3453
  %3455 = vrot.lane.b32.xlu0 %v2864, 87
  %v3456 = vpop.permute.xlu0 %3455
  %vm3461 = vcmask 777968
  %3462 = vst.msk [vmem:[%s2] sm:$0xff] %vm3461, %v3450
  %vm3463 = vcmask 774896
  %3464 = vst.msk [vmem:[%s2 + $0x10] sm:$0x1f] %vm3463, %v3452
  %3465 = vst.msk [vmem:[%s2 + $0x20] sm:$0xff] %vm3461, %v3454
  %3466 = vst.msk [vmem:[%s2 + $0x30] sm:$0x1f] %vm3463, %v3456
  %3467 = vrot.lane.b32.xlu0 %v2855, 98
  %v3468 = vpop.permute.xlu0 %3467
  %3469 = vrot.lane.b32.xlu0 %v2856, 98
  %v3470 = vpop.permute.xlu0 %3469
  %3471 = vrot.lane.b32.xlu0 %v2863, 98
  %v3472 = vpop.permute.xlu0 %3471
  %3473 = vrot.lane.b32.xlu0 %v2864, 98
  %v3474 = vpop.permute.xlu0 %3473
  %vm3479 = vcmask 876368
  %3480 = vst.msk [vmem:[%s2] sm:$0xff] %vm3479, %v3468
  %vm3481 = vcmask 873296
  %3482 = vst.msk [vmem:[%s2 + $0x10] sm:$0x1f] %vm3481, %v3470
  %3483 = vst.msk [vmem:[%s2 + $0x20] sm:$0xff] %vm3479, %v3472
  %3484 = vst.msk [vmem:[%s2 + $0x30] sm:$0x1f] %vm3481, %v3474
  %3485 = vrot.lane.b32.xlu0 %v2855, 109
  %v3486 = vpop.permute.xlu0 %3485
  %3487 = vrot.lane.b32.xlu0 %v2856, 109
  %v3488 = vpop.permute.xlu0 %3487
  %3489 = vrot.lane.b32.xlu0 %v2863, 109
  %v3490 = vpop.permute.xlu0 %3489
  %3491 = vrot.lane.b32.xlu0 %v2864, 109
  %v3492 = vpop.permute.xlu0 %3491
  %vm3497 = vcmask 974768
  %3498 = vst.msk [vmem:[%s2] sm:$0xff] %vm3497, %v3486
  %vm3499 = vcmask 971696
  %3500 = vst.msk [vmem:[%s2 + $0x10] sm:$0x1f] %vm3499, %v3488
  %3501 = vst.msk [vmem:[%s2 + $0x20] sm:$0xff] %vm3497, %v3490
  %3502 = vst.msk [vmem:[%s2 + $0x30] sm:$0x1f] %vm3499, %v3492
  %3503 = vrot.lane.b32.xlu0 %v2855, 120
  %v3504 = vpop.permute.xlu0 %3503
  %3505 = vrot.lane.b32.xlu0 %v2856, 120
  %v3506 = vpop.permute.xlu0 %3505
  %3507 = vrot.lane.b32.xlu0 %v2863, 120
  %v3508 = vpop.permute.xlu0 %3507
  %3509 = vrot.lane.b32.xlu0 %v2864, 120
  %v3510 = vpop.permute.xlu0 %3509
  %3515 = vst.msk [vmem:[%s2 + $0x8] sm:$0xff] %vm1067, %v3504
  %3516 = vst.msk [vmem:[%s2 + $0x18] sm:$0x1f] %vm1069, %v3506
  %3517 = vst.msk [vmem:[%s2 + $0x28] sm:$0xff] %vm1067, %v3508
  %3518 = vst.msk [vmem:[%s2 + $0x38] sm:$0x1f] %vm1069, %v3510
  %3519 = vrot.lane.b32.xlu0 %v2855, 3
  %v3520 = vpop.permute.xlu0 %3519
  %3521 = vrot.lane.b32.xlu0 %v2856, 3
  %v3522 = vpop.permute.xlu0 %3521
  %3523 = vrot.lane.b32.xlu0 %v2863, 3
  %v3524 = vpop.permute.xlu0 %3523
  %3525 = vrot.lane.b32.xlu0 %v2864, 3
  %v3526 = vpop.permute.xlu0 %3525
  %3531 = vst.msk [vmem:[%s2 + $0x8] sm:$0xff] %vm1085, %v3520
  %3532 = vst.msk [vmem:[%s2 + $0x18] sm:$0x1f] %vm1087, %v3522
  %3533 = vst.msk [vmem:[%s2 + $0x28] sm:$0xff] %vm1085, %v3524
  %3534 = vst.msk [vmem:[%s2 + $0x38] sm:$0x1f] %vm1087, %v3526
  %3535 = vrot.lane.b32.xlu0 %v2855, 14
  %v3536 = vpop.permute.xlu0 %3535
  %3537 = vrot.lane.b32.xlu0 %v2856, 14
  %v3538 = vpop.permute.xlu0 %3537
  %3539 = vrot.lane.b32.xlu0 %v2863, 14
  %v3540 = vpop.permute.xlu0 %3539
  %3541 = vrot.lane.b32.xlu0 %v2864, 14
  %v3542 = vpop.permute.xlu0 %3541
  %3547 = vst.msk [vmem:[%s2 + $0x8] sm:$0xff] %vm1103, %v3536
  %3548 = vst.msk [vmem:[%s2 + $0x18] sm:$0x1f] %vm1105, %v3538
  %3549 = vst.msk [vmem:[%s2 + $0x28] sm:$0xff] %vm1103, %v3540
  %3550 = vst.msk [vmem:[%s2 + $0x38] sm:$0x1f] %vm1105, %v3542
  %3555 = vrot.lane.b32.xlu0 %v2857, 11
  %v3556 = vpop.permute.xlu0 %3555
  %3557 = vrot.lane.b32.xlu0 %v2858, 11
  %v3558 = vpop.permute.xlu0 %3557
  %3559 = vrot.lane.b32.xlu0 %v2865, 11
  %v3560 = vpop.permute.xlu0 %3559
  %3561 = vrot.lane.b32.xlu0 %v2866, 11
  %v3562 = vpop.permute.xlu0 %3561
  %3567 = vst.msk [vmem:[%s2] sm:$0xff] %vm2427, %v3556
  %3568 = vst.msk [vmem:[%s2 + $0x10] sm:$0x1f] %vm2429, %v3558
  %3569 = vst.msk [vmem:[%s2 + $0x20] sm:$0xff] %vm2427, %v3560
  %3570 = vst.msk [vmem:[%s2 + $0x30] sm:$0x1f] %vm2429, %v3562
  %3571 = vrot.lane.b32.xlu0 %v2857, 22
  %v3572 = vpop.permute.xlu0 %3571
  %3573 = vrot.lane.b32.xlu0 %v2858, 22
  %v3574 = vpop.permute.xlu0 %3573
  %3575 = vrot.lane.b32.xlu0 %v2865, 22
  %v3576 = vpop.permute.xlu0 %3575
  %3577 = vrot.lane.b32.xlu0 %v2866, 22
  %v3578 = vpop.permute.xlu0 %3577
  %3583 = vst.msk [vmem:[%s2] sm:$0xff] %vm2445, %v3572
  %3584 = vst.msk [vmem:[%s2 + $0x10] sm:$0x1f] %vm2447, %v3574
  %3585 = vst.msk [vmem:[%s2 + $0x20] sm:$0xff] %vm2445, %v3576
  %3586 = vst.msk [vmem:[%s2 + $0x30] sm:$0x1f] %vm2447, %v3578
  %3587 = vrot.lane.b32.xlu0 %v2857, 33
  %v3588 = vpop.permute.xlu0 %3587
  %3589 = vrot.lane.b32.xlu0 %v2858, 33
  %v3590 = vpop.permute.xlu0 %3589
  %3591 = vrot.lane.b32.xlu0 %v2865, 33
  %v3592 = vpop.permute.xlu0 %3591
  %3593 = vrot.lane.b32.xlu0 %v2866, 33
  %v3594 = vpop.permute.xlu0 %3593
  %vm3599 = vcmask 294168
  %3600 = vst.msk [vmem:[%s2] sm:$0xff] %vm3599, %v3588
  %vm3601 = vcmask 291096
  %3602 = vst.msk [vmem:[%s2 + $0x10] sm:$0x1f] %vm3601, %v3590
  %3603 = vst.msk [vmem:[%s2 + $0x20] sm:$0xff] %vm3599, %v3592
  %3604 = vst.msk [vmem:[%s2 + $0x30] sm:$0x1f] %vm3601, %v3594
  %3605 = vrot.lane.b32.xlu0 %v2857, 44
  %v3606 = vpop.permute.xlu0 %3605
  %3607 = vrot.lane.b32.xlu0 %v2858, 44
  %v3608 = vpop.permute.xlu0 %3607
  %3609 = vrot.lane.b32.xlu0 %v2865, 44
  %v3610 = vpop.permute.xlu0 %3609
  %3611 = vrot.lane.b32.xlu0 %v2866, 44
  %v3612 = vpop.permute.xlu0 %3611
  %vm3617 = vcmask 392568
  %3618 = vst.msk [vmem:[%s2] sm:$0xff] %vm3617, %v3606
  %vm3619 = vcmask 389496
  %3620 = vst.msk [vmem:[%s2 + $0x10] sm:$0x1f] %vm3619, %v3608
  %3621 = vst.msk [vmem:[%s2 + $0x20] sm:$0xff] %vm3617, %v3610
  %3622 = vst.msk [vmem:[%s2 + $0x30] sm:$0x1f] %vm3619, %v3612
  %3623 = vrot.lane.b32.xlu0 %v2857, 55
  %v3624 = vpop.permute.xlu0 %3623
  %3625 = vrot.lane.b32.xlu0 %v2858, 55
  %v3626 = vpop.permute.xlu0 %3625
  %3627 = vrot.lane.b32.xlu0 %v2865, 55
  %v3628 = vpop.permute.xlu0 %3627
  %3629 = vrot.lane.b32.xlu0 %v2866, 55
  %v3630 = vpop.permute.xlu0 %3629
  %vm3635 = vcmask 490968
  %3636 = vst.msk [vmem:[%s2] sm:$0xff] %vm3635, %v3624
  %vm3637 = vcmask 487896
  %3638 = vst.msk [vmem:[%s2 + $0x10] sm:$0x1f] %vm3637, %v3626
  %3639 = vst.msk [vmem:[%s2 + $0x20] sm:$0xff] %vm3635, %v3628
  %3640 = vst.msk [vmem:[%s2 + $0x30] sm:$0x1f] %vm3637, %v3630
  %3641 = vrot.lane.b32.xlu0 %v2857, 66
  %v3642 = vpop.permute.xlu0 %3641
  %3643 = vrot.lane.b32.xlu0 %v2858, 66
  %v3644 = vpop.permute.xlu0 %3643
  %3645 = vrot.lane.b32.xlu0 %v2865, 66
  %v3646 = vpop.permute.xlu0 %3645
  %3647 = vrot.lane.b32.xlu0 %v2866, 66
  %v3648 = vpop.permute.xlu0 %3647
  %vm3653 = vcmask 589368
  %3654 = vst.msk [vmem:[%s2] sm:$0xff] %vm3653, %v3642
  %vm3655 = vcmask 586296
  %3656 = vst.msk [vmem:[%s2 + $0x10] sm:$0x1f] %vm3655, %v3644
  %3657 = vst.msk [vmem:[%s2 + $0x20] sm:$0xff] %vm3653, %v3646
  %3658 = vst.msk [vmem:[%s2 + $0x30] sm:$0x1f] %vm3655, %v3648
  %3659 = vrot.lane.b32.xlu0 %v2857, 77
  %v3660 = vpop.permute.xlu0 %3659
  %3661 = vrot.lane.b32.xlu0 %v2858, 77
  %v3662 = vpop.permute.xlu0 %3661
  %3663 = vrot.lane.b32.xlu0 %v2865, 77
  %v3664 = vpop.permute.xlu0 %3663
  %3665 = vrot.lane.b32.xlu0 %v2866, 77
  %v3666 = vpop.permute.xlu0 %3665
  %vm3671 = vcmask 687768
  %3672 = vst.msk [vmem:[%s2] sm:$0xff] %vm3671, %v3660
  %vm3673 = vcmask 684696
  %3674 = vst.msk [vmem:[%s2 + $0x10] sm:$0x1f] %vm3673, %v3662
  %3675 = vst.msk [vmem:[%s2 + $0x20] sm:$0xff] %vm3671, %v3664
  %3676 = vst.msk [vmem:[%s2 + $0x30] sm:$0x1f] %vm3673, %v3666
  %3677 = vrot.lane.b32.xlu0 %v2857, 88
  %v3678 = vpop.permute.xlu0 %3677
  %3679 = vrot.lane.b32.xlu0 %v2858, 88
  %v3680 = vpop.permute.xlu0 %3679
  %3681 = vrot.lane.b32.xlu0 %v2865, 88
  %v3682 = vpop.permute.xlu0 %3681
  %3683 = vrot.lane.b32.xlu0 %v2866, 88
  %v3684 = vpop.permute.xlu0 %3683
  %vm3689 = vcmask 786168
  %3690 = vst.msk [vmem:[%s2] sm:$0xff] %vm3689, %v3678
  %vm3691 = vcmask 783096
  %3692 = vst.msk [vmem:[%s2 + $0x10] sm:$0x1f] %vm3691, %v3680
  %3693 = vst.msk [vmem:[%s2 + $0x20] sm:$0xff] %vm3689, %v3682
  %3694 = vst.msk [vmem:[%s2 + $0x30] sm:$0x1f] %vm3691, %v3684
  %3695 = vrot.lane.b32.xlu0 %v2857, 99
  %v3696 = vpop.permute.xlu0 %3695
  %3697 = vrot.lane.b32.xlu0 %v2858, 99
  %v3698 = vpop.permute.xlu0 %3697
  %3699 = vrot.lane.b32.xlu0 %v2865, 99
  %v3700 = vpop.permute.xlu0 %3699
  %3701 = vrot.lane.b32.xlu0 %v2866, 99
  %v3702 = vpop.permute.xlu0 %3701
  %vm3707 = vcmask 884568
  %3708 = vst.msk [vmem:[%s2] sm:$0xff] %vm3707, %v3696
  %vm3709 = vcmask 881496
  %3710 = vst.msk [vmem:[%s2 + $0x10] sm:$0x1f] %vm3709, %v3698
  %3711 = vst.msk [vmem:[%s2 + $0x20] sm:$0xff] %vm3707, %v3700
  %3712 = vst.msk [vmem:[%s2 + $0x30] sm:$0x1f] %vm3709, %v3702
  %3713 = vrot.lane.b32.xlu0 %v2857, 110
  %v3714 = vpop.permute.xlu0 %3713
  %3715 = vrot.lane.b32.xlu0 %v2858, 110
  %v3716 = vpop.permute.xlu0 %3715
  %3717 = vrot.lane.b32.xlu0 %v2865, 110
  %v3718 = vpop.permute.xlu0 %3717
  %3719 = vrot.lane.b32.xlu0 %v2866, 110
  %v3720 = vpop.permute.xlu0 %3719
  %vm3725 = vcmask 982968
  %3726 = vst.msk [vmem:[%s2] sm:$0xff] %vm3725, %v3714
  %vm3727 = vcmask 979896
  %3728 = vst.msk [vmem:[%s2 + $0x10] sm:$0x1f] %vm3727, %v3716
  %3729 = vst.msk [vmem:[%s2 + $0x20] sm:$0xff] %vm3725, %v3718
  %3730 = vst.msk [vmem:[%s2 + $0x30] sm:$0x1f] %vm3727, %v3720
  %3731 = vrot.lane.b32.xlu0 %v2857, 121
  %v3732 = vpop.permute.xlu0 %3731
  %3733 = vrot.lane.b32.xlu0 %v2858, 121
  %v3734 = vpop.permute.xlu0 %3733
  %3735 = vrot.lane.b32.xlu0 %v2865, 121
  %v3736 = vpop.permute.xlu0 %3735
  %3737 = vrot.lane.b32.xlu0 %v2866, 121
  %v3738 = vpop.permute.xlu0 %3737
  %3743 = vst.msk [vmem:[%s2 + $0x8] sm:$0xff] %vm1305, %v3732
  %3744 = vst.msk [vmem:[%s2 + $0x18] sm:$0x1f] %vm1307, %v3734
  %3745 = vst.msk [vmem:[%s2 + $0x28] sm:$0xff] %vm1305, %v3736
  %3746 = vst.msk [vmem:[%s2 + $0x38] sm:$0x1f] %vm1307, %v3738
  %3747 = vrot.lane.b32.xlu0 %v2857, 4
  %v3748 = vpop.permute.xlu0 %3747
  %3749 = vrot.lane.b32.xlu0 %v2858, 4
  %v3750 = vpop.permute.xlu0 %3749
  %3751 = vrot.lane.b32.xlu0 %v2865, 4
  %v3752 = vpop.permute.xlu0 %3751
  %3753 = vrot.lane.b32.xlu0 %v2866, 4
  %v3754 = vpop.permute.xlu0 %3753
  %3759 = vst.msk [vmem:[%s2 + $0x8] sm:$0xff] %vm1323, %v3748
  %3760 = vst.msk [vmem:[%s2 + $0x18] sm:$0x1f] %vm1325, %v3750
  %3761 = vst.msk [vmem:[%s2 + $0x28] sm:$0xff] %vm1323, %v3752
  %3762 = vst.msk [vmem:[%s2 + $0x38] sm:$0x1f] %vm1325, %v3754
  %3763 = vrot.lane.b32.xlu0 %v2857, 15
  %v3764 = vpop.permute.xlu0 %3763
  %3765 = vrot.lane.b32.xlu0 %v2858, 15
  %v3766 = vpop.permute.xlu0 %3765
  %3767 = vrot.lane.b32.xlu0 %v2865, 15
  %v3768 = vpop.permute.xlu0 %3767
  %3769 = vrot.lane.b32.xlu0 %v2866, 15
  %v3770 = vpop.permute.xlu0 %3769
  %3775 = vst.msk [vmem:[%s2 + $0x8] sm:$0xff] %vm1341, %v3764
  %3776 = vst.msk [vmem:[%s2 + $0x18] sm:$0x1f] %vm1343, %v3766
  %3777 = vst.msk [vmem:[%s2 + $0x28] sm:$0xff] %vm1341, %v3768
  %3778 = vst.msk [vmem:[%s2 + $0x38] sm:$0x1f] %vm1343, %v3770
  // Predicated region
  $region10: #{tpu_custom_call.1} parent=0 // pred_check
    _
  $region11: #{tpu_custom_call.1} parent=0 // pred_check_branch
    %3780 = sbr.rel (0) target = $region13
  $region12: #{tpu_custom_call.1} parent=0 // pred_region
    _
  $region13: #{tpu_custom_call.1} parent=0 // pred_fallthru
    _
  // Predicated region
  $region14: #{tpu_custom_call.1} parent=0 // pred_check
    _
  $region15: #{tpu_custom_call.1} parent=0 // pred_check_branch
    %3782 = sbr.rel (0) target = $region17
  $region16: #{tpu_custom_call.1} parent=0 // pred_region
    _
  $region17: #{tpu_custom_call.1} parent=0 // pred_fallthru
    _

</llo_original>
